<compile_context>
chip_gen: v6e
topology: v6e:2x2x1
jax: 0.10.0
libtpu: 0.0.40
codegen_flags: <defaults>
</compile_context>

<pallas_src>
import functools

import jax
import jax.numpy as jnp
import numpy as np
from jax.experimental import pallas as pl
from jax.experimental.pallas import tpu as pltpu


def residual_block_kernel(xpad_ref, w_ref, sc_ref, out_ref, ypad_ref,
                          *, NB, H, W, C):
    """One batch block (NB images) per grid step.

    xpad_ref : (NB, H+2, W+2, C) f32   zero-padded NHWC input block
    w_ref    : (9, C, C)         bf16  conv_1 weights, tap-major (ky*3+kx, Cin, Cout)
    sc_ref   : (4, C)            f32   rows: bn1 scale, bn1 shift(+bias),
                                             bn2 scale, bn2 shift(+bias)
    out_ref  : (NB, H, W, C)     f32
    ypad_ref : (NB, H+2, W+2, C) f32   scratch for the re-padded intermediate
    """
    M = NB * H * W

    def conv3x3(src):
        # src: (NB, H+2, W+2, C) f32 -> (M, C) f32 cross-correlation.
        # Per-tap (M, C) x (C, C) bf16 MXU dots, accumulated in f32.
        acc = jnp.zeros((M, C), jnp.float32)
        for k in range(9):
            dy, dx = divmod(k, 3)
            patch = src[:, dy:dy + H, dx:dx + W, :].reshape(M, C)
            acc = acc + jnp.dot(patch.astype(jnp.bfloat16), w_ref[k],
                                preferred_element_type=jnp.float32)
        return acc

    s1 = sc_ref[0:1, :]
    t1 = sc_ref[1:2, :]
    s2 = sc_ref[2:3, :]
    t2 = sc_ref[3:4, :]

    x = xpad_ref[...]                                        # (NB,H+2,W+2,C) f32
    residual = x[:, 1:1 + H, 1:1 + W, :].reshape(M, C)       # original x (exact f32)

    # y1 = relu(bn_1(conv_1(x)))        (conv bias already folded into t1)
    y1 = jnp.maximum(conv3x3(x) * s1 + t1, 0.0)              # (M, C) f32

    # Re-pad y1 for the second application of conv_1.  Only the 1-pixel border
    # needs zeroing; the interior is fully overwritten every step.
    zr = jnp.zeros((NB, 1, W + 2, C), jnp.float32)
    zc = jnp.zeros((NB, H + 2, 1, C), jnp.float32)
    ypad_ref[:, 0:1, :, :] = zr
    ypad_ref[:, H + 1:H + 2, :, :] = zr
    ypad_ref[:, :, 0:1, :] = zc
    ypad_ref[:, :, W + 1:W + 2, :] = zc
    ypad_ref[:, 1:1 + H, 1:1 + W, :] = y1.reshape(NB, H, W, C)

    # out = relu(bn_2(conv_1(y1)) + residual)
    z = conv3x3(ypad_ref[...]) * s2 + t2 + residual
    out_ref[...] = jnp.maximum(z, 0.0).reshape(NB, H, W, C)


def residual_block(x_nchw, w_oihw, bias,
                   g1, b1, m1, v1, g2, b2, m2, v2,
                   eps=1e-5, batch_block=4):
    N, C, H, W = x_nchw.shape

    # Batch block: largest divisor of N that is <= batch_block.  VMEM is a
    # non-issue at these sizes (even on v5e's 16 MiB default scoped limit), so
    # pick NB for MXU fill / core balance, not memory.
    nb = min(batch_block, N)
    while N % nb:
        nb -= 1

    x = jnp.transpose(x_nchw, (0, 2, 3, 1)).astype(jnp.float32)      # NHWC
    xpad = jnp.pad(x, ((0, 0), (1, 1), (1, 1), (0, 0)))

    # (Cout, Cin, kh, kw) -> (kh, kw, Cin, Cout) -> (9, Cin, Cout), bf16 for MXU.
    w9 = jnp.transpose(w_oihw, (2, 3, 1, 0)).reshape(9, C, C).astype(jnp.bfloat16)

    # Fold eval-mode batch-norm AND the conv bias into per-channel scale+shift:
    #   bn(conv_raw + bias) = conv_raw*s + ((bias - mean)*s + beta)
    s1 = g1 / jnp.sqrt(v1 + eps)
    s2 = g2 / jnp.sqrt(v2 + eps)
    t1 = (bias - m1) * s1 + b1
    t2 = (bias - m2) * s2 + b2
    sc = jnp.stack([s1, t1, s2, t2], axis=0).astype(jnp.float32)      # (4, C)

    kernel = functools.partial(residual_block_kernel, NB=nb, H=H, W=W, C=C)

    out_nhwc = pl.pallas_call(
        kernel,
        out_shape=jax.ShapeDtypeStruct((N, H, W, C), jnp.float32),
        grid_spec=pltpu.PrefetchScalarGridSpec(
            num_scalar_prefetch=0,
            grid=(N // nb,),
            in_specs=[
                pl.BlockSpec((nb, H + 2, W + 2, C), lambda n: (n, 0, 0, 0)),
                pl.BlockSpec((9, C, C), lambda n: (0, 0, 0)),
                pl.BlockSpec((4, C), lambda n: (0, 0)),
            ],
            out_specs=pl.BlockSpec((nb, H, W, C), lambda n: (n, 0, 0, 0)),
            scratch_shapes=[pltpu.VMEM((nb, H + 2, W + 2, C), jnp.float32)],
        ),
        compiler_params=pltpu.CompilerParams(
            dimension_semantics=("parallel",)),
    )(xpad, w9, sc)

    return jnp.transpose(out_nhwc, (0, 3, 1, 2))  # back to NCHW


def reference_forward(x_nchw, w_oihw, bias,
                      g1, b1, m1, v1, g2, b2, m2, v2, eps=1e-5):
    """Pure-JAX f32 reference mirroring the (buggy) PyTorch forward, eval-mode BN."""
    x = jnp.transpose(x_nchw, (0, 2, 3, 1))
    w = jnp.transpose(w_oihw, (2, 3, 1, 0))

    def conv(a):
        return jax.lax.conv_general_dilated(
            a, w, (1, 1), "SAME",
            dimension_numbers=("NHWC", "HWIO", "NHWC")) + bias

    def bn(a, g, b, m, v):
        return (a - m) / jnp.sqrt(v + eps) * g + b

    y1 = jax.nn.relu(bn(conv(x), g1, b1, m1, v1))
    y2 = jax.nn.relu(bn(conv(y1), g2, b2, m2, v2) + x)
    return jnp.transpose(y2, (0, 3, 1, 2))


if __name__ == "__main__":
    # num_features=32, batch=8 -> 2 parallel grid steps of NB=4 images each.
    N, C, H, W = 8, 32, 8, 8
    key = jax.random.PRNGKey(0)
    keys = jax.random.split(key, 12)

    x = jax.random.normal(keys[0], (N, C, H, W), jnp.float32)
    w_conv1 = jax.random.normal(keys[1], (C, C, 3, 3), jnp.float32) * 0.05
    b_conv1 = jax.random.normal(keys[2], (C,), jnp.float32) * 0.05
    gamma1 = 1.0 + 0.1 * jax.random.normal(keys[3], (C,), jnp.float32)
    beta1 = 0.1 * jax.random.normal(keys[4], (C,), jnp.float32)
    mean1 = 0.1 * jax.random.normal(keys[5], (C,), jnp.float32)
    var1 = 0.5 + jnp.abs(jax.random.normal(keys[6], (C,), jnp.float32)) * 0.1
    gamma2 = 1.0 + 0.1 * jax.random.normal(keys[7], (C,), jnp.float32)
    beta2 = 0.1 * jax.random.normal(keys[8], (C,), jnp.float32)
    mean2 = 0.1 * jax.random.normal(keys[9], (C,), jnp.float32)
    var2 = 0.5 + jnp.abs(jax.random.normal(keys[10], (C,), jnp.float32)) * 0.2
    # (conv_2 / batch_norm_2's conv weights are unused in the module's forward.)

    out = residual_block(x, w_conv1, b_conv1,
                         gamma1, beta1, mean1, var1,
                         gamma2, beta2, mean2, var2,
                         batch_block=4)
    out = jax.block_until_ready(out)

    ref = reference_forward(x, w_conv1, b_conv1,
                            gamma1, beta1, mean1, var1,
                            gamma2, beta2, mean2, var2)
    ref = jax.block_until_ready(ref)

    # Tolerance relaxed for the bf16-operand MXU path (f32 accumulation).
    np.testing.assert_allclose(np.asarray(out), np.asarray(ref),
                               rtol=3e-2, atol=3e-2)
    print("KERNEL_OK")
</pallas_src>

<mosaic_0001>
module attributes {stable_mosaic.version = 11 : i64} {
  func.func @residual_block_kernel(%arg0: i32, %arg1: memref<4x10x10x32xf32, #tpu.memory_space<vmem>>, %arg2: memref<9x32x32xbf16, #tpu.memory_space<vmem>>, %arg3: memref<4x32xf32, #tpu.memory_space<vmem>>, %arg4: memref<4x8x8x32xf32, #tpu.memory_space<vmem>>, %arg5: memref<4x10x10x32xf32, #tpu.memory_space<vmem>>) attributes {dimension_semantics = [#tpu.dimension_semantics<parallel>], iteration_bounds = array<i64: 2>, scalar_prefetch = 0 : i64, scratch_operands = 1 : i64, tpu.core_type = #tpu.core_type<tc>, window_params = [{transform_indices = @transform_0, window_bounds = array<i64: 4, 10, 10, 32>}, {pipeline_mode = #tpu.pipeline_mode<synchronous>, transform_indices = @transform_1, window_bounds = array<i64: 9, 32, 32>}, {pipeline_mode = #tpu.pipeline_mode<synchronous>, transform_indices = @transform_2, window_bounds = array<i64: 4, 32>}, {transform_indices = @transform_3, window_bounds = array<i64: 4, 8, 8, 32>}]} {
    %c0 = arith.constant 0 : index
    %c0_0 = arith.constant 0 : index
    %0 = vector.load %arg3[%c0, %c0_0] : memref<4x32xf32, #tpu.memory_space<vmem>>, vector<1x32xf32>
    %c1 = arith.constant 1 : index
    %c0_1 = arith.constant 0 : index
    %1 = vector.load %arg3[%c1, %c0_1] : memref<4x32xf32, #tpu.memory_space<vmem>>, vector<1x32xf32>
    %c2 = arith.constant 2 : index
    %c0_2 = arith.constant 0 : index
    %2 = vector.load %arg3[%c2, %c0_2] : memref<4x32xf32, #tpu.memory_space<vmem>>, vector<1x32xf32>
    %c3 = arith.constant 3 : index
    %c0_3 = arith.constant 0 : index
    %3 = vector.load %arg3[%c3, %c0_3] : memref<4x32xf32, #tpu.memory_space<vmem>>, vector<1x32xf32>
    %c0_4 = arith.constant 0 : index
    %c0_5 = arith.constant 0 : index
    %c0_6 = arith.constant 0 : index
    %c0_7 = arith.constant 0 : index
    %4 = vector.load %arg1[%c0_4, %c0_5, %c0_6, %c0_7] : memref<4x10x10x32xf32, #tpu.memory_space<vmem>>, vector<4x10x10x32xf32>
    %5 = vector.extract_strided_slice %4 {offsets = [0, 1, 1, 0], sizes = [4, 8, 8, 32], strides = [1, 1, 1, 1]} : vector<4x10x10x32xf32> to vector<4x8x8x32xf32>
    %6 = vector.shape_cast %5 : vector<4x8x8x32xf32> to vector<256x32xf32>
    %cst = arith.constant 0.000000e+00 : f32
    %7 = vector.broadcast %cst : f32 to vector<256x32xf32>
    %8 = vector.extract_strided_slice %4 {offsets = [0, 0, 0, 0], sizes = [4, 8, 8, 32], strides = [1, 1, 1, 1]} : vector<4x10x10x32xf32> to vector<4x8x8x32xf32>
    %9 = vector.shape_cast %8 : vector<4x8x8x32xf32> to vector<256x32xf32>
    %10 = arith.truncf %9 : vector<256x32xf32> to vector<256x32xbf16>
    %c0_8 = arith.constant 0 : index
    %c0_9 = arith.constant 0 : index
    %c0_10 = arith.constant 0 : index
    %11 = vector.load %arg2[%c0_8, %c0_9, %c0_10] : memref<9x32x32xbf16, #tpu.memory_space<vmem>>, vector<1x32x32xbf16>
    %12 = vector.shape_cast %11 : vector<1x32x32xbf16> to vector<32x32xbf16>
    %cst_11 = arith.constant dense<0.000000e+00> : vector<256x32xf32>
    %13 = tpu.matmul %10, %12, %cst_11 {dimension_numbers = #tpu.dot_dimension_numbers<[1], [0], [0], [1], [0, 0, 1, 1], [], []>} : vector<256x32xbf16>, vector<32x32xbf16>, vector<256x32xf32> -> vector<256x32xf32>
    %14 = arith.addf %7, %13 : vector<256x32xf32>
    %15 = vector.extract_strided_slice %4 {offsets = [0, 0, 1, 0], sizes = [4, 8, 8, 32], strides = [1, 1, 1, 1]} : vector<4x10x10x32xf32> to vector<4x8x8x32xf32>
    %16 = vector.shape_cast %15 : vector<4x8x8x32xf32> to vector<256x32xf32>
    %17 = arith.truncf %16 : vector<256x32xf32> to vector<256x32xbf16>
    %c1_12 = arith.constant 1 : index
    %c0_13 = arith.constant 0 : index
    %c0_14 = arith.constant 0 : index
    %18 = vector.load %arg2[%c1_12, %c0_13, %c0_14] : memref<9x32x32xbf16, #tpu.memory_space<vmem>>, vector<1x32x32xbf16>
    %19 = vector.shape_cast %18 : vector<1x32x32xbf16> to vector<32x32xbf16>
    %cst_15 = arith.constant dense<0.000000e+00> : vector<256x32xf32>
    %20 = tpu.matmul %17, %19, %cst_15 {dimension_numbers = #tpu.dot_dimension_numbers<[1], [0], [0], [1], [0, 0, 1, 1], [], []>} : vector<256x32xbf16>, vector<32x32xbf16>, vector<256x32xf32> -> vector<256x32xf32>
    %21 = arith.addf %14, %20 : vector<256x32xf32>
    %22 = vector.extract_strided_slice %4 {offsets = [0, 0, 2, 0], sizes = [4, 8, 8, 32], strides = [1, 1, 1, 1]} : vector<4x10x10x32xf32> to vector<4x8x8x32xf32>
    %23 = vector.shape_cast %22 : vector<4x8x8x32xf32> to vector<256x32xf32>
    %24 = arith.truncf %23 : vector<256x32xf32> to vector<256x32xbf16>
    %c2_16 = arith.constant 2 : index
    %c0_17 = arith.constant 0 : index
    %c0_18 = arith.constant 0 : index
    %25 = vector.load %arg2[%c2_16, %c0_17, %c0_18] : memref<9x32x32xbf16, #tpu.memory_space<vmem>>, vector<1x32x32xbf16>
    %26 = vector.shape_cast %25 : vector<1x32x32xbf16> to vector<32x32xbf16>
    %cst_19 = arith.constant dense<0.000000e+00> : vector<256x32xf32>
    %27 = tpu.matmul %24, %26, %cst_19 {dimension_numbers = #tpu.dot_dimension_numbers<[1], [0], [0], [1], [0, 0, 1, 1], [], []>} : vector<256x32xbf16>, vector<32x32xbf16>, vector<256x32xf32> -> vector<256x32xf32>
    %28 = arith.addf %21, %27 : vector<256x32xf32>
    %29 = vector.extract_strided_slice %4 {offsets = [0, 1, 0, 0], sizes = [4, 8, 8, 32], strides = [1, 1, 1, 1]} : vector<4x10x10x32xf32> to vector<4x8x8x32xf32>
    %30 = vector.shape_cast %29 : vector<4x8x8x32xf32> to vector<256x32xf32>
    %31 = arith.truncf %30 : vector<256x32xf32> to vector<256x32xbf16>
    %c3_20 = arith.constant 3 : index
    %c0_21 = arith.constant 0 : index
    %c0_22 = arith.constant 0 : index
    %32 = vector.load %arg2[%c3_20, %c0_21, %c0_22] : memref<9x32x32xbf16, #tpu.memory_space<vmem>>, vector<1x32x32xbf16>
    %33 = vector.shape_cast %32 : vector<1x32x32xbf16> to vector<32x32xbf16>
    %cst_23 = arith.constant dense<0.000000e+00> : vector<256x32xf32>
    %34 = tpu.matmul %31, %33, %cst_23 {dimension_numbers = #tpu.dot_dimension_numbers<[1], [0], [0], [1], [0, 0, 1, 1], [], []>} : vector<256x32xbf16>, vector<32x32xbf16>, vector<256x32xf32> -> vector<256x32xf32>
    %35 = arith.addf %28, %34 : vector<256x32xf32>
    %36 = vector.extract_strided_slice %4 {offsets = [0, 1, 1, 0], sizes = [4, 8, 8, 32], strides = [1, 1, 1, 1]} : vector<4x10x10x32xf32> to vector<4x8x8x32xf32>
    %37 = vector.shape_cast %36 : vector<4x8x8x32xf32> to vector<256x32xf32>
    %38 = arith.truncf %37 : vector<256x32xf32> to vector<256x32xbf16>
    %c4 = arith.constant 4 : index
    %c0_24 = arith.constant 0 : index
    %c0_25 = arith.constant 0 : index
    %39 = vector.load %arg2[%c4, %c0_24, %c0_25] : memref<9x32x32xbf16, #tpu.memory_space<vmem>>, vector<1x32x32xbf16>
    %40 = vector.shape_cast %39 : vector<1x32x32xbf16> to vector<32x32xbf16>
    %cst_26 = arith.constant dense<0.000000e+00> : vector<256x32xf32>
    %41 = tpu.matmul %38, %40, %cst_26 {dimension_numbers = #tpu.dot_dimension_numbers<[1], [0], [0], [1], [0, 0, 1, 1], [], []>} : vector<256x32xbf16>, vector<32x32xbf16>, vector<256x32xf32> -> vector<256x32xf32>
    %42 = arith.addf %35, %41 : vector<256x32xf32>
    %43 = vector.extract_strided_slice %4 {offsets = [0, 1, 2, 0], sizes = [4, 8, 8, 32], strides = [1, 1, 1, 1]} : vector<4x10x10x32xf32> to vector<4x8x8x32xf32>
    %44 = vector.shape_cast %43 : vector<4x8x8x32xf32> to vector<256x32xf32>
    %45 = arith.truncf %44 : vector<256x32xf32> to vector<256x32xbf16>
    %c5 = arith.constant 5 : index
    %c0_27 = arith.constant 0 : index
    %c0_28 = arith.constant 0 : index
    %46 = vector.load %arg2[%c5, %c0_27, %c0_28] : memref<9x32x32xbf16, #tpu.memory_space<vmem>>, vector<1x32x32xbf16>
    %47 = vector.shape_cast %46 : vector<1x32x32xbf16> to vector<32x32xbf16>
    %cst_29 = arith.constant dense<0.000000e+00> : vector<256x32xf32>
    %48 = tpu.matmul %45, %47, %cst_29 {dimension_numbers = #tpu.dot_dimension_numbers<[1], [0], [0], [1], [0, 0, 1, 1], [], []>} : vector<256x32xbf16>, vector<32x32xbf16>, vector<256x32xf32> -> vector<256x32xf32>
    %49 = arith.addf %42, %48 : vector<256x32xf32>
    %50 = vector.extract_strided_slice %4 {offsets = [0, 2, 0, 0], sizes = [4, 8, 8, 32], strides = [1, 1, 1, 1]} : vector<4x10x10x32xf32> to vector<4x8x8x32xf32>
    %51 = vector.shape_cast %50 : vector<4x8x8x32xf32> to vector<256x32xf32>
    %52 = arith.truncf %51 : vector<256x32xf32> to vector<256x32xbf16>
    %c6 = arith.constant 6 : index
    %c0_30 = arith.constant 0 : index
    %c0_31 = arith.constant 0 : index
    %53 = vector.load %arg2[%c6, %c0_30, %c0_31] : memref<9x32x32xbf16, #tpu.memory_space<vmem>>, vector<1x32x32xbf16>
    %54 = vector.shape_cast %53 : vector<1x32x32xbf16> to vector<32x32xbf16>
    %cst_32 = arith.constant dense<0.000000e+00> : vector<256x32xf32>
    %55 = tpu.matmul %52, %54, %cst_32 {dimension_numbers = #tpu.dot_dimension_numbers<[1], [0], [0], [1], [0, 0, 1, 1], [], []>} : vector<256x32xbf16>, vector<32x32xbf16>, vector<256x32xf32> -> vector<256x32xf32>
    %56 = arith.addf %49, %55 : vector<256x32xf32>
    %57 = vector.extract_strided_slice %4 {offsets = [0, 2, 1, 0], sizes = [4, 8, 8, 32], strides = [1, 1, 1, 1]} : vector<4x10x10x32xf32> to vector<4x8x8x32xf32>
    %58 = vector.shape_cast %57 : vector<4x8x8x32xf32> to vector<256x32xf32>
    %59 = arith.truncf %58 : vector<256x32xf32> to vector<256x32xbf16>
    %c7 = arith.constant 7 : index
    %c0_33 = arith.constant 0 : index
    %c0_34 = arith.constant 0 : index
    %60 = vector.load %arg2[%c7, %c0_33, %c0_34] : memref<9x32x32xbf16, #tpu.memory_space<vmem>>, vector<1x32x32xbf16>
    %61 = vector.shape_cast %60 : vector<1x32x32xbf16> to vector<32x32xbf16>
    %cst_35 = arith.constant dense<0.000000e+00> : vector<256x32xf32>
    %62 = tpu.matmul %59, %61, %cst_35 {dimension_numbers = #tpu.dot_dimension_numbers<[1], [0], [0], [1], [0, 0, 1, 1], [], []>} : vector<256x32xbf16>, vector<32x32xbf16>, vector<256x32xf32> -> vector<256x32xf32>
    %63 = arith.addf %56, %62 : vector<256x32xf32>
    %64 = vector.extract_strided_slice %4 {offsets = [0, 2, 2, 0], sizes = [4, 8, 8, 32], strides = [1, 1, 1, 1]} : vector<4x10x10x32xf32> to vector<4x8x8x32xf32>
    %65 = vector.shape_cast %64 : vector<4x8x8x32xf32> to vector<256x32xf32>
    %66 = arith.truncf %65 : vector<256x32xf32> to vector<256x32xbf16>
    %c8 = arith.constant 8 : index
    %c0_36 = arith.constant 0 : index
    %c0_37 = arith.constant 0 : index
    %67 = vector.load %arg2[%c8, %c0_36, %c0_37] : memref<9x32x32xbf16, #tpu.memory_space<vmem>>, vector<1x32x32xbf16>
    %68 = vector.shape_cast %67 : vector<1x32x32xbf16> to vector<32x32xbf16>
    %cst_38 = arith.constant dense<0.000000e+00> : vector<256x32xf32>
    %69 = tpu.matmul %66, %68, %cst_38 {dimension_numbers = #tpu.dot_dimension_numbers<[1], [0], [0], [1], [0, 0, 1, 1], [], []>} : vector<256x32xbf16>, vector<32x32xbf16>, vector<256x32xf32> -> vector<256x32xf32>
    %70 = arith.addf %63, %69 : vector<256x32xf32>
    %71 = vector.broadcast %0 : vector<1x32xf32> to vector<256x32xf32>
    %72 = arith.mulf %70, %71 : vector<256x32xf32>
    %73 = vector.broadcast %1 : vector<1x32xf32> to vector<256x32xf32>
    %74 = arith.addf %72, %73 : vector<256x32xf32>
    %cst_39 = arith.constant 0.000000e+00 : f32
    %75 = vector.broadcast %cst_39 : f32 to vector<256x32xf32>
    %76 = arith.maximumf %74, %75 : vector<256x32xf32>
    %cst_40 = arith.constant 0.000000e+00 : f32
    %77 = vector.broadcast %cst_40 : f32 to vector<4x1x10x32xf32>
    %cst_41 = arith.constant 0.000000e+00 : f32
    %78 = vector.broadcast %cst_41 : f32 to vector<4x10x1x32xf32>
    %c0_42 = arith.constant 0 : index
    %c0_43 = arith.constant 0 : index
    %c0_44 = arith.constant 0 : index
    %c0_45 = arith.constant 0 : index
    %79 = vector.load %arg5[%c0_42, %c0_43, %c0_44, %c0_45] : memref<4x10x10x32xf32, #tpu.memory_space<vmem>>, vector<4x1x10x32xf32>
    tpu.vector_store %arg5[%c0_42, %c0_43, %c0_44, %c0_45], %77 {strides = array<i32>} : memref<4x10x10x32xf32, #tpu.memory_space<vmem>>, vector<4x1x10x32xf32>,
    %c0_46 = arith.constant 0 : index
    %c9 = arith.constant 9 : index
    %c0_47 = arith.constant 0 : index
    %c0_48 = arith.constant 0 : index
    %80 = vector.load %arg5[%c0_46, %c9, %c0_47, %c0_48] : memref<4x10x10x32xf32, #tpu.memory_space<vmem>>, vector<4x1x10x32xf32>
    tpu.vector_store %arg5[%c0_46, %c9, %c0_47, %c0_48], %77 {strides = array<i32>} : memref<4x10x10x32xf32, #tpu.memory_space<vmem>>, vector<4x1x10x32xf32>,
    %c0_49 = arith.constant 0 : index
    %c0_50 = arith.constant 0 : index
    %c0_51 = arith.constant 0 : index
    %c0_52 = arith.constant 0 : index
    %81 = vector.load %arg5[%c0_49, %c0_50, %c0_51, %c0_52] : memref<4x10x10x32xf32, #tpu.memory_space<vmem>>, vector<4x10x1x32xf32>
    tpu.vector_store %arg5[%c0_49, %c0_50, %c0_51, %c0_52], %78 {strides = array<i32>} : memref<4x10x10x32xf32, #tpu.memory_space<vmem>>, vector<4x10x1x32xf32>,
    %c0_53 = arith.constant 0 : index
    %c0_54 = arith.constant 0 : index
    %c9_55 = arith.constant 9 : index
    %c0_56 = arith.constant 0 : index
    %82 = vector.load %arg5[%c0_53, %c0_54, %c9_55, %c0_56] : memref<4x10x10x32xf32, #tpu.memory_space<vmem>>, vector<4x10x1x32xf32>
    tpu.vector_store %arg5[%c0_53, %c0_54, %c9_55, %c0_56], %78 {strides = array<i32>} : memref<4x10x10x32xf32, #tpu.memory_space<vmem>>, vector<4x10x1x32xf32>,
    %83 = vector.shape_cast %76 : vector<256x32xf32> to vector<4x8x8x32xf32>
    %c0_57 = arith.constant 0 : index
    %c1_58 = arith.constant 1 : index
    %c1_59 = arith.constant 1 : index
    %c0_60 = arith.constant 0 : index
    %84 = vector.load %arg5[%c0_57, %c1_58, %c1_59, %c0_60] : memref<4x10x10x32xf32, #tpu.memory_space<vmem>>, vector<4x8x8x32xf32>
    tpu.vector_store %arg5[%c0_57, %c1_58, %c1_59, %c0_60], %83 {strides = array<i32>} : memref<4x10x10x32xf32, #tpu.memory_space<vmem>>, vector<4x8x8x32xf32>,
    %c0_61 = arith.constant 0 : index
    %c0_62 = arith.constant 0 : index
    %c0_63 = arith.constant 0 : index
    %c0_64 = arith.constant 0 : index
    %85 = vector.load %arg5[%c0_61, %c0_62, %c0_63, %c0_64] : memref<4x10x10x32xf32, #tpu.memory_space<vmem>>, vector<4x10x10x32xf32>
    %cst_65 = arith.constant 0.000000e+00 : f32
    %86 = vector.broadcast %cst_65 : f32 to vector<256x32xf32>
    %87 = vector.extract_strided_slice %85 {offsets = [0, 0, 0, 0], sizes = [4, 8, 8, 32], strides = [1, 1, 1, 1]} : vector<4x10x10x32xf32> to vector<4x8x8x32xf32>
    %88 = vector.shape_cast %87 : vector<4x8x8x32xf32> to vector<256x32xf32>
    %89 = arith.truncf %88 : vector<256x32xf32> to vector<256x32xbf16>
    %c0_66 = arith.constant 0 : index
    %c0_67 = arith.constant 0 : index
    %c0_68 = arith.constant 0 : index
    %90 = vector.load %arg2[%c0_66, %c0_67, %c0_68] : memref<9x32x32xbf16, #tpu.memory_space<vmem>>, vector<1x32x32xbf16>
    %91 = vector.shape_cast %90 : vector<1x32x32xbf16> to vector<32x32xbf16>
    %cst_69 = arith.constant dense<0.000000e+00> : vector<256x32xf32>
    %92 = tpu.matmul %89, %91, %cst_69 {dimension_numbers = #tpu.dot_dimension_numbers<[1], [0], [0], [1], [0, 0, 1, 1], [], []>} : vector<256x32xbf16>, vector<32x32xbf16>, vector<256x32xf32> -> vector<256x32xf32>
    %93 = arith.addf %86, %92 : vector<256x32xf32>
    %94 = vector.extract_strided_slice %85 {offsets = [0, 0, 1, 0], sizes = [4, 8, 8, 32], strides = [1, 1, 1, 1]} : vector<4x10x10x32xf32> to vector<4x8x8x32xf32>
    %95 = vector.shape_cast %94 : vector<4x8x8x32xf32> to vector<256x32xf32>
    %96 = arith.truncf %95 : vector<256x32xf32> to vector<256x32xbf16>
    %c1_70 = arith.constant 1 : index
    %c0_71 = arith.constant 0 : index
    %c0_72 = arith.constant 0 : index
    %97 = vector.load %arg2[%c1_70, %c0_71, %c0_72] : memref<9x32x32xbf16, #tpu.memory_space<vmem>>, vector<1x32x32xbf16>
    %98 = vector.shape_cast %97 : vector<1x32x32xbf16> to vector<32x32xbf16>
    %cst_73 = arith.constant dense<0.000000e+00> : vector<256x32xf32>
    %99 = tpu.matmul %96, %98, %cst_73 {dimension_numbers = #tpu.dot_dimension_numbers<[1], [0], [0], [1], [0, 0, 1, 1], [], []>} : vector<256x32xbf16>, vector<32x32xbf16>, vector<256x32xf32> -> vector<256x32xf32>
    %100 = arith.addf %93, %99 : vector<256x32xf32>
    %101 = vector.extract_strided_slice %85 {offsets = [0, 0, 2, 0], sizes = [4, 8, 8, 32], strides = [1, 1, 1, 1]} : vector<4x10x10x32xf32> to vector<4x8x8x32xf32>
    %102 = vector.shape_cast %101 : vector<4x8x8x32xf32> to vector<256x32xf32>
    %103 = arith.truncf %102 : vector<256x32xf32> to vector<256x32xbf16>
    %c2_74 = arith.constant 2 : index
    %c0_75 = arith.constant 0 : index
    %c0_76 = arith.constant 0 : index
    %104 = vector.load %arg2[%c2_74, %c0_75, %c0_76] : memref<9x32x32xbf16, #tpu.memory_space<vmem>>, vector<1x32x32xbf16>
    %105 = vector.shape_cast %104 : vector<1x32x32xbf16> to vector<32x32xbf16>
    %cst_77 = arith.constant dense<0.000000e+00> : vector<256x32xf32>
    %106 = tpu.matmul %103, %105, %cst_77 {dimension_numbers = #tpu.dot_dimension_numbers<[1], [0], [0], [1], [0, 0, 1, 1], [], []>} : vector<256x32xbf16>, vector<32x32xbf16>, vector<256x32xf32> -> vector<256x32xf32>
    %107 = arith.addf %100, %106 : vector<256x32xf32>
    %108 = vector.extract_strided_slice %85 {offsets = [0, 1, 0, 0], sizes = [4, 8, 8, 32], strides = [1, 1, 1, 1]} : vector<4x10x10x32xf32> to vector<4x8x8x32xf32>
    %109 = vector.shape_cast %108 : vector<4x8x8x32xf32> to vector<256x32xf32>
    %110 = arith.truncf %109 : vector<256x32xf32> to vector<256x32xbf16>
    %c3_78 = arith.constant 3 : index
    %c0_79 = arith.constant 0 : index
    %c0_80 = arith.constant 0 : index
    %111 = vector.load %arg2[%c3_78, %c0_79, %c0_80] : memref<9x32x32xbf16, #tpu.memory_space<vmem>>, vector<1x32x32xbf16>
    %112 = vector.shape_cast %111 : vector<1x32x32xbf16> to vector<32x32xbf16>
    %cst_81 = arith.constant dense<0.000000e+00> : vector<256x32xf32>
    %113 = tpu.matmul %110, %112, %cst_81 {dimension_numbers = #tpu.dot_dimension_numbers<[1], [0], [0], [1], [0, 0, 1, 1], [], []>} : vector<256x32xbf16>, vector<32x32xbf16>, vector<256x32xf32> -> vector<256x32xf32>
    %114 = arith.addf %107, %113 : vector<256x32xf32>
    %115 = vector.extract_strided_slice %85 {offsets = [0, 1, 1, 0], sizes = [4, 8, 8, 32], strides = [1, 1, 1, 1]} : vector<4x10x10x32xf32> to vector<4x8x8x32xf32>
    %116 = vector.shape_cast %115 : vector<4x8x8x32xf32> to vector<256x32xf32>
    %117 = arith.truncf %116 : vector<256x32xf32> to vector<256x32xbf16>
    %c4_82 = arith.constant 4 : index
    %c0_83 = arith.constant 0 : index
    %c0_84 = arith.constant 0 : index
    %118 = vector.load %arg2[%c4_82, %c0_83, %c0_84] : memref<9x32x32xbf16, #tpu.memory_space<vmem>>, vector<1x32x32xbf16>
    %119 = vector.shape_cast %118 : vector<1x32x32xbf16> to vector<32x32xbf16>
    %cst_85 = arith.constant dense<0.000000e+00> : vector<256x32xf32>
    %120 = tpu.matmul %117, %119, %cst_85 {dimension_numbers = #tpu.dot_dimension_numbers<[1], [0], [0], [1], [0, 0, 1, 1], [], []>} : vector<256x32xbf16>, vector<32x32xbf16>, vector<256x32xf32> -> vector<256x32xf32>
    %121 = arith.addf %114, %120 : vector<256x32xf32>
    %122 = vector.extract_strided_slice %85 {offsets = [0, 1, 2, 0], sizes = [4, 8, 8, 32], strides = [1, 1, 1, 1]} : vector<4x10x10x32xf32> to vector<4x8x8x32xf32>
    %123 = vector.shape_cast %122 : vector<4x8x8x32xf32> to vector<256x32xf32>
    %124 = arith.truncf %123 : vector<256x32xf32> to vector<256x32xbf16>
    %c5_86 = arith.constant 5 : index
    %c0_87 = arith.constant 0 : index
    %c0_88 = arith.constant 0 : index
    %125 = vector.load %arg2[%c5_86, %c0_87, %c0_88] : memref<9x32x32xbf16, #tpu.memory_space<vmem>>, vector<1x32x32xbf16>
    %126 = vector.shape_cast %125 : vector<1x32x32xbf16> to vector<32x32xbf16>
    %cst_89 = arith.constant dense<0.000000e+00> : vector<256x32xf32>
    %127 = tpu.matmul %124, %126, %cst_89 {dimension_numbers = #tpu.dot_dimension_numbers<[1], [0], [0], [1], [0, 0, 1, 1], [], []>} : vector<256x32xbf16>, vector<32x32xbf16>, vector<256x32xf32> -> vector<256x32xf32>
    %128 = arith.addf %121, %127 : vector<256x32xf32>
    %129 = vector.extract_strided_slice %85 {offsets = [0, 2, 0, 0], sizes = [4, 8, 8, 32], strides = [1, 1, 1, 1]} : vector<4x10x10x32xf32> to vector<4x8x8x32xf32>
    %130 = vector.shape_cast %129 : vector<4x8x8x32xf32> to vector<256x32xf32>
    %131 = arith.truncf %130 : vector<256x32xf32> to vector<256x32xbf16>
    %c6_90 = arith.constant 6 : index
    %c0_91 = arith.constant 0 : index
    %c0_92 = arith.constant 0 : index
    %132 = vector.load %arg2[%c6_90, %c0_91, %c0_92] : memref<9x32x32xbf16, #tpu.memory_space<vmem>>, vector<1x32x32xbf16>
    %133 = vector.shape_cast %132 : vector<1x32x32xbf16> to vector<32x32xbf16>
    %cst_93 = arith.constant dense<0.000000e+00> : vector<256x32xf32>
    %134 = tpu.matmul %131, %133, %cst_93 {dimension_numbers = #tpu.dot_dimension_numbers<[1], [0], [0], [1], [0, 0, 1, 1], [], []>} : vector<256x32xbf16>, vector<32x32xbf16>, vector<256x32xf32> -> vector<256x32xf32>
    %135 = arith.addf %128, %134 : vector<256x32xf32>
    %136 = vector.extract_strided_slice %85 {offsets = [0, 2, 1, 0], sizes = [4, 8, 8, 32], strides = [1, 1, 1, 1]} : vector<4x10x10x32xf32> to vector<4x8x8x32xf32>
    %137 = vector.shape_cast %136 : vector<4x8x8x32xf32> to vector<256x32xf32>
    %138 = arith.truncf %137 : vector<256x32xf32> to vector<256x32xbf16>
    %c7_94 = arith.constant 7 : index
    %c0_95 = arith.constant 0 : index
    %c0_96 = arith.constant 0 : index
    %139 = vector.load %arg2[%c7_94, %c0_95, %c0_96] : memref<9x32x32xbf16, #tpu.memory_space<vmem>>, vector<1x32x32xbf16>
    %140 = vector.shape_cast %139 : vector<1x32x32xbf16> to vector<32x32xbf16>
    %cst_97 = arith.constant dense<0.000000e+00> : vector<256x32xf32>
    %141 = tpu.matmul %138, %140, %cst_97 {dimension_numbers = #tpu.dot_dimension_numbers<[1], [0], [0], [1], [0, 0, 1, 1], [], []>} : vector<256x32xbf16>, vector<32x32xbf16>, vector<256x32xf32> -> vector<256x32xf32>
    %142 = arith.addf %135, %141 : vector<256x32xf32>
    %143 = vector.extract_strided_slice %85 {offsets = [0, 2, 2, 0], sizes = [4, 8, 8, 32], strides = [1, 1, 1, 1]} : vector<4x10x10x32xf32> to vector<4x8x8x32xf32>
    %144 = vector.shape_cast %143 : vector<4x8x8x32xf32> to vector<256x32xf32>
    %145 = arith.truncf %144 : vector<256x32xf32> to vector<256x32xbf16>
    %c8_98 = arith.constant 8 : index
    %c0_99 = arith.constant 0 : index
    %c0_100 = arith.constant 0 : index
    %146 = vector.load %arg2[%c8_98, %c0_99, %c0_100] : memref<9x32x32xbf16, #tpu.memory_space<vmem>>, vector<1x32x32xbf16>
    %147 = vector.shape_cast %146 : vector<1x32x32xbf16> to vector<32x32xbf16>
    %cst_101 = arith.constant dense<0.000000e+00> : vector<256x32xf32>
    %148 = tpu.matmul %145, %147, %cst_101 {dimension_numbers = #tpu.dot_dimension_numbers<[1], [0], [0], [1], [0, 0, 1, 1], [], []>} : vector<256x32xbf16>, vector<32x32xbf16>, vector<256x32xf32> -> vector<256x32xf32>
    %149 = arith.addf %142, %148 : vector<256x32xf32>
    %150 = vector.broadcast %2 : vector<1x32xf32> to vector<256x32xf32>
    %151 = arith.mulf %149, %150 : vector<256x32xf32>
    %152 = vector.broadcast %3 : vector<1x32xf32> to vector<256x32xf32>
    %153 = arith.addf %151, %152 : vector<256x32xf32>
    %154 = arith.addf %153, %6 : vector<256x32xf32>
    %cst_102 = arith.constant 0.000000e+00 : f32
    %155 = vector.broadcast %cst_102 : f32 to vector<256x32xf32>
    %156 = arith.maximumf %154, %155 : vector<256x32xf32>
    %157 = vector.shape_cast %156 : vector<256x32xf32> to vector<4x8x8x32xf32>
    %c0_103 = arith.constant 0 : index
    %c0_104 = arith.constant 0 : index
    %c0_105 = arith.constant 0 : index
    %c0_106 = arith.constant 0 : index
    %158 = vector.load %arg4[%c0_103, %c0_104, %c0_105, %c0_106] : memref<4x8x8x32xf32, #tpu.memory_space<vmem>>, vector<4x8x8x32xf32>
    tpu.vector_store %arg4[%c0_103, %c0_104, %c0_105, %c0_106], %157 {strides = array<i32>} : memref<4x8x8x32xf32, #tpu.memory_space<vmem>>, vector<4x8x8x32xf32>,
    return
  }
  func.func @transform_0(%arg0: i32) -> (i32, i32, i32, i32) {
    %c0_i32 = arith.constant 0 : i32
    %c0_i32_0 = arith.constant 0 : i32
    %c0_i32_1 = arith.constant 0 : i32
    %c0_i32_2 = arith.constant 0 : i32
    return %arg0, %c0_i32, %c0_i32_0, %c0_i32_1 : i32, i32, i32, i32
  }
  func.func @transform_1(%arg0: i32) -> (i32, i32, i32) {
    %c0_i32 = arith.constant 0 : i32
    %c0_i32_0 = arith.constant 0 : i32
    %c0_i32_1 = arith.constant 0 : i32
    %c0_i32_2 = arith.constant 0 : i32
    return %c0_i32, %c0_i32_0, %c0_i32_1 : i32, i32, i32
  }
  func.func @transform_2(%arg0: i32) -> (i32, i32) {
    %c0_i32 = arith.constant 0 : i32
    %c0_i32_0 = arith.constant 0 : i32
    %c0_i32_1 = arith.constant 0 : i32
    return %c0_i32, %c0_i32_0 : i32, i32
  }
  func.func @transform_3(%arg0: i32) -> (i32, i32, i32, i32) {
    %c0_i32 = arith.constant 0 : i32
    %c0_i32_0 = arith.constant 0 : i32
    %c0_i32_1 = arith.constant 0 : i32
    %c0_i32_2 = arith.constant 0 : i32
    return %arg0, %c0_i32, %c0_i32_0, %c0_i32_1 : i32, i32, i32, i32
  }
}

</mosaic_0001>

<llo_original>
// kernel: tpu_custom_call.1
$region0: #{tpu_custom_call.1}
  #allocation0 [shape = 'u32[]', space=smem, size = 0x4, offset = 0x4, fixed_abs, tag = 'smem constant byte address 0x4 - core index']
  #allocation1 [shape = 'u32[144,128]{1,0:T(1,128)}', space=vmem, size = 0x12000, scoped, tag = 'internal scratch']
  #allocation2 [shape = 'f32[4,10,10,32]{3,2,1,0:T(8,128)}', space=vmem, size = 0x50000, scoped, tag = 'scratch operand']
  %s0 = inlined_call_operand.vmem [shape: f32[8,10,10,32], index: 0, kind: input, shape index: {}]
  %s1 = inlined_call_operand.vmem [shape: bf16[9,32,32], index: 1, kind: input, shape index: {}]
  %s2 = inlined_call_operand.vmem [shape: f32[4,32], index: 2, kind: input, shape index: {}]
  %s3 = inlined_call_operand.hbm [shape: f32[8,8,8,32], index: 3, kind: output, shape index: {}]
  %s4 = sld [smem:[#allocation0]]
  $region45: #{tpu_custom_call.1} parent=0
    _
  %s6 = ssub.s32 1, %s4
  %s7 = scalar_select 0, %s6, %s4
  $region1: #{tpu_custom_call.1} parent=0
    #allocation3 [shape = 'u8[262144]{0}', space=vmem, size = 0x40000, scoped, tag = 'output window, operand 0']
    #allocation4 [shape = 's32[2]{0}', space=sflag, size = 0x8, scoped, tag = 'scoped memory for tpu_custom_call.1']
    %8 = vsyncpa [#allocation4], 0
    %s9 = scalar_lea.sflag [#allocation4], 1
    %10 = vsyncpa %s9, 0
    loop: start=0, step=1, limit=4
    $region2: #{tpu_custom_call.1} parent=1 // loop_pre_header
      _
    $region3: #{tpu_custom_call.1} parent=1 // loop_header
      %s12 = sphi 0, %s16
      %p13 = scmp.ge.s32.totalorder %s12, 4
      %s22 = sphi 0, %s24
      %s25 = sphi 0, %s22
      %s26 = sphi 0, %s25
      %s42 = sphi 0, %s26
      %s46 = sphi 0, %s46
      %s48 = sphi 0, %s46
      %s49 = sphi 0, %s48
      %s63 = sphi 0, %s49
      %s67 = sphi 0, %s67
      %s69 = sphi 0, %s67
      %s70 = sphi 0, %s69
      %s84 = sphi 0, %s70
      %s90 = sphi 0, %s92
      %s93 = sphi 0, %s90
      %s94 = sphi 0, %s93
      %s110 = sphi 0, %s94
    $region4: #{tpu_custom_call.1} parent=1 // loop_header_branch
      %15 = sbr.rel (%p13) target = $region8
    $region5: #{tpu_custom_call.1} parent=1 // loop_body
      %s17 = ssub.s32 %s12, 1
      %s18 = ssub.s32 %s12, 2
      %s19 = sadd.s32 %s12, 1
      %s20 = ssub.s32 %s12, %s19
      %p21 = scmp.eq.s32.totalorder %s20, 0
      %s23 = sadd.s32 %s22, 1
      %s24 = scalar_select %p21, %s22, %s23
      %p27 = pneg %p21
      %p28 = scmp.eq.s32.totalorder %s12, 1
      %p29 = por %p27, %p28
      %p30 = scmp.ne.s32.totalorder %s22, %s25
      %p31 = scmp.eq.s32.totalorder %s12, 0
      %p32 = por %p30, %p31
      %p33 = scmp.ne.s32.totalorder %s22, %s25
      %p34 = scmp.eq.s32.totalorder %s17, 1
      %p35 = por %p33, %p34
      %p36 = scmp.ne.s32.totalorder %s25, %s26
      %p37 = scmp.eq.s32.totalorder %s17, 0
      %p38 = por %p36, %p37
      %p39 = scmp.ne.s32.totalorder %s25, %s26
      %p40 = scmp.eq.s32.totalorder %s18, 1
      %p41 = por %p39, %p40
      %p43 = scmp.ne.s32.totalorder %s26, %s42
      %p44 = scmp.eq.s32.totalorder %s18, 0
      %p45 = por %p43, %p44
      %s47 = sadd.s32 %s46, 1
      %p50 = scmp.eq.s32.totalorder %s12, 1
      %p51 = scmp.ne.s32.totalorder %s46, %s48
      %p52 = scmp.eq.s32.totalorder %s12, 0
      %p53 = por %p51, %p52
      %p54 = scmp.ne.s32.totalorder %s46, %s48
      %p55 = scmp.eq.s32.totalorder %s17, 1
      %p56 = por %p54, %p55
      %p57 = scmp.ne.s32.totalorder %s48, %s49
      %p58 = scmp.eq.s32.totalorder %s17, 0
      %p59 = por %p57, %p58
      %p60 = scmp.ne.s32.totalorder %s48, %s49
      %p61 = scmp.eq.s32.totalorder %s18, 1
      %p62 = por %p60, %p61
      %p64 = scmp.ne.s32.totalorder %s49, %s63
      %p65 = scmp.eq.s32.totalorder %s18, 0
      %p66 = por %p64, %p65
      %s68 = sadd.s32 %s67, 1
      %p71 = scmp.eq.s32.totalorder %s12, 1
      %p72 = scmp.ne.s32.totalorder %s67, %s69
      %p73 = scmp.eq.s32.totalorder %s12, 0
      %p74 = por %p72, %p73
      %p75 = scmp.ne.s32.totalorder %s67, %s69
      %p76 = scmp.eq.s32.totalorder %s17, 1
      %p77 = por %p75, %p76
      %p78 = scmp.ne.s32.totalorder %s69, %s70
      %p79 = scmp.eq.s32.totalorder %s17, 0
      %p80 = por %p78, %p79
      %p81 = scmp.ne.s32.totalorder %s69, %s70
      %p82 = scmp.eq.s32.totalorder %s18, 1
      %p83 = por %p81, %p82
      %p85 = scmp.ne.s32.totalorder %s70, %s84
      %p86 = scmp.eq.s32.totalorder %s18, 0
      %p87 = por %p85, %p86
      %s88 = ssub.s32 %s12, %s19
      %p89 = scmp.eq.s32.totalorder %s88, 0
      %s91 = sadd.s32 %s90, 1
      %s92 = scalar_select %p89, %s90, %s91
      %p95 = pneg %p89
      %p96 = scmp.eq.s32.totalorder %s12, 1
      %p97 = por %p95, %p96
      %p98 = scmp.ne.s32.totalorder %s90, %s93
      %p99 = scmp.eq.s32.totalorder %s12, 0
      %p100 = por %p98, %p99
      %p101 = scmp.ne.s32.totalorder %s90, %s93
      %p102 = scmp.eq.s32.totalorder %s17, 1
      %p103 = por %p101, %p102
      %p104 = scmp.ne.s32.totalorder %s93, %s94
      %p105 = scmp.eq.s32.totalorder %s17, 0
      %p106 = por %p104, %p105
      %p107 = scmp.ne.s32.totalorder %s93, %s94
      %p108 = scmp.eq.s32.totalorder %s18, 1
      %p109 = por %p107, %p108
      %p111 = scmp.ne.s32.totalorder %s94, %s110
      %p112 = scmp.eq.s32.totalorder %s18, 0
      %p113 = por %p111, %p112
      %p114 = scmp.le.s32.totalorder 1, %s12
      %p115 = scmp.lt.s32.totalorder %s12, 3
      %p116 = pnand %p114, %p115
      %p117 = pneg %p116
      // Predicated region
      $region9: #{tpu_custom_call.1} parent=5 // pred_check
        _
      $region10: #{tpu_custom_call.1} parent=5 // pred_check_branch
        %119 = sbr.rel (%p116) target = $region12
      $region11: #{tpu_custom_call.1} parent=5 // pred_region
        %s120 = ssub.s32 %s12, 1
        // Predicated region
        $region13: #{tpu_custom_call.1} parent=11 // pred_check
          %p121 = pneg %p59
        $region14: #{tpu_custom_call.1} parent=11 // pred_check_branch
          %123 = sbr.rel (%p121) target = $region16
        $region15: #{tpu_custom_call.1} parent=11 // pred_region
          _
        $region16: #{tpu_custom_call.1} parent=11 // pred_fallthru
          _
        // Predicated region
        $region17: #{tpu_custom_call.1} parent=11 // pred_check
          %p124 = pneg %p80
        $region18: #{tpu_custom_call.1} parent=11 // pred_check_branch
          %126 = sbr.rel (%p124) target = $region20
        $region19: #{tpu_custom_call.1} parent=11 // pred_region
          _
        $region20: #{tpu_custom_call.1} parent=11 // pred_fallthru
          _
      $region12: #{tpu_custom_call.1} parent=5 // pred_fallthru
        _
      %p127 = scmp.lt.s32.totalorder %s12, 2
      // Predicated region
      $region21: #{tpu_custom_call.1} parent=5 // pred_check
        %p128 = pneg %p127
      $region22: #{tpu_custom_call.1} parent=5 // pred_check_branch
        %130 = sbr.rel (%p128) target = $region24
      $region23: #{tpu_custom_call.1} parent=5 // pred_region
        // Predicated region
        $region25: #{tpu_custom_call.1} parent=23 // pred_check
          %p131 = pneg %p32
        $region26: #{tpu_custom_call.1} parent=23 // pred_check_branch
          %133 = sbr.rel (%p131) target = $region28
        $region27: #{tpu_custom_call.1} parent=23 // pred_region
          %s134 = smul.u32 4, %s12
          %p135 = scmp.lt.s32.totalorder %s134, 7
          %s136 = scalar_select %p135, %s134, 7
          %s137 = smul.addr %s136, 20
          %s138 = smul.addr %s137, 8
          %s139 = scalar_lea.vmem %s0, %s138
          %s140 = smul.u32 4, %s12
        $region28: #{tpu_custom_call.1} parent=23 // pred_fallthru
          _
      $region24: #{tpu_custom_call.1} parent=5 // pred_fallthru
        _
      %p141 = scmp.le.s32.totalorder 1, %s12
      %p142 = scmp.lt.s32.totalorder %s12, 3
      %p143 = pnand %p141, %p142
      %p144 = pneg %p143
      // Predicated region
      $region29: #{tpu_custom_call.1} parent=5 // pred_check
        _
      $region30: #{tpu_custom_call.1} parent=5 // pred_check_branch
        %146 = sbr.rel (%p143) target = $region32
      $region31: #{tpu_custom_call.1} parent=5 // pred_region
        %s147 = ssub.s32 %s12, 1
        %s148 = smul.u32 4, %s17
        %p149 = scmp.lt.s32.totalorder %s148, 7
        %s150 = scalar_select %p149, %s148, 7
        %s151 = smul.addr %s150, 20
        %s152 = smul.addr %s151, 8
        %s153 = scalar_lea.vmem %s0, %s152
        %p154 = pneg %p38
        %p155 = pneg %p35
        %p156 = pneg %p59
        %p157 = pneg %p56
        %p158 = pneg %p80
        %p159 = pneg %p77
        %p160 = pneg %p106
        %p161 = pneg %p103
        %s162 = sand.u32 %s93, 1
        %s163 = scalar_lea.sflag [#allocation4], %s162
        %s164 = sand.u32 %s93, 1
        %s165 = smul.addr %s164, 256
        %s166 = scalar_lea.vmem [#allocation3], %s165
        %s167 = smul.u32 4, %s17
        %p168 = scmp.lt.s32.totalorder %s167, 7
        %s169 = scalar_select %p168, %s167, 7
        %s170 = smul.addr %s169, 20
        %s171 = smul.addr %s170, 8
        %s172 = scalar_lea.vmem %s0, %s171
        %s173 = smul.u32 4, %s17
        %s174 = smul.u32 4, %s17
        %v176 = vld [vmem:[%s2] sm:$0x1]
        %v177 = vld [vmem:[%s2 + $0x1] sm:$0x1]
        %v178 = vld [vmem:[%s2 + $0x2] sm:$0x1]
        %v179 = vld [vmem:[%s2 + $0x3] sm:$0x1]
        %v180 = vld [vmem:[%s172] sm:$0xff]
        %v181 = vld [vmem:[%s172 + $0x8] sm:$0x3]
        %v182 = vld [vmem:[%s172 + $0x10] sm:$0xff]
        %v183 = vld [vmem:[%s172 + $0x18] sm:$0x3]
        %v184 = vld [vmem:[%s172 + $0x20] sm:$0xff]
        %v185 = vld [vmem:[%s172 + $0x28] sm:$0x3]
        %v186 = vld [vmem:[%s172 + $0x30] sm:$0xff]
        %v187 = vld [vmem:[%s172 + $0x38] sm:$0x3]
        %v188 = vld [vmem:[%s172 + $0x40] sm:$0xff]
        %v189 = vld [vmem:[%s172 + $0x48] sm:$0x3]
        %v190 = vld [vmem:[%s172 + $0x50] sm:$0xff]
        %v191 = vld [vmem:[%s172 + $0x58] sm:$0x3]
        %v192 = vld [vmem:[%s172 + $0x60] sm:$0xff]
        %v193 = vld [vmem:[%s172 + $0x68] sm:$0x3]
        %v194 = vld [vmem:[%s172 + $0x70] sm:$0xff]
        %v195 = vld [vmem:[%s172 + $0x78] sm:$0x3]
        %v196 = vld [vmem:[%s172 + $0x80] sm:$0xff]
        %v197 = vld [vmem:[%s172 + $0x88] sm:$0x3]
        %v198 = vld [vmem:[%s172 + $0x90] sm:$0xff]
        %v199 = vld [vmem:[%s172 + $0x98] sm:$0x3]
        %v200 = vld [vmem:[%s172 + $0xa0] sm:$0xff]
        %v201 = vld [vmem:[%s172 + $0xa8] sm:$0x3]
        %v202 = vld [vmem:[%s172 + $0xb0] sm:$0xff]
        %v203 = vld [vmem:[%s172 + $0xb8] sm:$0x3]
        %v204 = vld [vmem:[%s172 + $0xc0] sm:$0xff]
        %v205 = vld [vmem:[%s172 + $0xc8] sm:$0x3]
        %v206 = vld [vmem:[%s172 + $0xd0] sm:$0xff]
        %v207 = vld [vmem:[%s172 + $0xd8] sm:$0x3]
        %v208 = vld [vmem:[%s172 + $0xe0] sm:$0xff]
        %v209 = vld [vmem:[%s172 + $0xe8] sm:$0x3]
        %v210 = vld [vmem:[%s172 + $0xf0] sm:$0xff]
        %v211 = vld [vmem:[%s172 + $0xf8] sm:$0x3]
        %v212 = vld [vmem:[%s172 + $0x100] sm:$0xff]
        %v213 = vld [vmem:[%s172 + $0x108] sm:$0x3]
        %v214 = vld [vmem:[%s172 + $0x110] sm:$0xff]
        %v215 = vld [vmem:[%s172 + $0x118] sm:$0x3]
        %v216 = vld [vmem:[%s172 + $0x120] sm:$0xff]
        %v217 = vld [vmem:[%s172 + $0x128] sm:$0x3]
        %v218 = vld [vmem:[%s172 + $0x130] sm:$0xff]
        %v219 = vld [vmem:[%s172 + $0x138] sm:$0x3]
        %v220 = vld [vmem:[%s172 + $0x140] sm:$0xff]
        %v221 = vld [vmem:[%s172 + $0x148] sm:$0x3]
        %v222 = vld [vmem:[%s172 + $0x150] sm:$0xff]
        %v223 = vld [vmem:[%s172 + $0x158] sm:$0x3]
        %v224 = vld [vmem:[%s172 + $0x160] sm:$0xff]
        %v225 = vld [vmem:[%s172 + $0x168] sm:$0x3]
        %v226 = vld [vmem:[%s172 + $0x170] sm:$0xff]
        %v227 = vld [vmem:[%s172 + $0x178] sm:$0x3]
        %v228 = vld [vmem:[%s172 + $0x180] sm:$0xff]
        %v229 = vld [vmem:[%s172 + $0x188] sm:$0x3]
        %v230 = vld [vmem:[%s172 + $0x190] sm:$0xff]
        %v231 = vld [vmem:[%s172 + $0x198] sm:$0x3]
        %v232 = vld [vmem:[%s172 + $0x1a0] sm:$0xff]
        %v233 = vld [vmem:[%s172 + $0x1a8] sm:$0x3]
        %v234 = vld [vmem:[%s172 + $0x1b0] sm:$0xff]
        %v235 = vld [vmem:[%s172 + $0x1b8] sm:$0x3]
        %v236 = vld [vmem:[%s172 + $0x1c0] sm:$0xff]
        %v237 = vld [vmem:[%s172 + $0x1c8] sm:$0x3]
        %v238 = vld [vmem:[%s172 + $0x1d0] sm:$0xff]
        %v239 = vld [vmem:[%s172 + $0x1d8] sm:$0x3]
        %v240 = vld [vmem:[%s172 + $0x1e0] sm:$0xff]
        %v241 = vld [vmem:[%s172 + $0x1e8] sm:$0x3]
        %v242 = vld [vmem:[%s172 + $0x1f0] sm:$0xff]
        %v243 = vld [vmem:[%s172 + $0x1f8] sm:$0x3]
        %v244 = vld [vmem:[%s172 + $0x200] sm:$0xff]
        %v245 = vld [vmem:[%s172 + $0x208] sm:$0x3]
        %v246 = vld [vmem:[%s172 + $0x210] sm:$0xff]
        %v247 = vld [vmem:[%s172 + $0x218] sm:$0x3]
        %v248 = vld [vmem:[%s172 + $0x220] sm:$0xff]
        %v249 = vld [vmem:[%s172 + $0x228] sm:$0x3]
        %v250 = vld [vmem:[%s172 + $0x230] sm:$0xff]
        %v251 = vld [vmem:[%s172 + $0x238] sm:$0x3]
        %v252 = vld [vmem:[%s172 + $0x240] sm:$0xff]
        %v253 = vld [vmem:[%s172 + $0x248] sm:$0x3]
        %v254 = vld [vmem:[%s172 + $0x250] sm:$0xff]
        %v255 = vld [vmem:[%s172 + $0x258] sm:$0x3]
        %v256 = vld [vmem:[%s172 + $0x260] sm:$0xff]
        %v257 = vld [vmem:[%s172 + $0x268] sm:$0x3]
        %v258 = vld [vmem:[%s172 + $0x270] sm:$0xff]
        %v259 = vld [vmem:[%s172 + $0x278] sm:$0x3]
        %vm324 = vcmask 1046528
        %v325 = vrot.slane %v182, 1
        %v326 = vrot.slane %v183, 1
        %v327 = vsel %vm324, %v325, %v326
        %v328 = vrot.slane %v184, 1
        %v329 = vrot.slane %v185, 1
        %v330 = vsel %vm324, %v328, %v329
        %v331 = vrot.slane %v186, 1
        %v332 = vrot.slane %v187, 1
        %v333 = vsel %vm324, %v331, %v332
        %v334 = vrot.slane %v188, 1
        %v335 = vrot.slane %v189, 1
        %v336 = vsel %vm324, %v334, %v335
        %v337 = vrot.slane %v190, 1
        %v338 = vrot.slane %v191, 1
        %v339 = vsel %vm324, %v337, %v338
        %v340 = vrot.slane %v192, 1
        %v341 = vrot.slane %v193, 1
        %v342 = vsel %vm324, %v340, %v341
        %v343 = vrot.slane %v194, 1
        %v344 = vrot.slane %v195, 1
        %v345 = vsel %vm324, %v343, %v344
        %v346 = vrot.slane %v196, 1
        %v347 = vrot.slane %v197, 1
        %v348 = vsel %vm324, %v346, %v347
        %v349 = vrot.slane %v202, 1
        %v350 = vrot.slane %v203, 1
        %v351 = vsel %vm324, %v349, %v350
        %v352 = vrot.slane %v204, 1
        %v353 = vrot.slane %v205, 1
        %v354 = vsel %vm324, %v352, %v353
        %v355 = vrot.slane %v206, 1
        %v356 = vrot.slane %v207, 1
        %v357 = vsel %vm324, %v355, %v356
        %v358 = vrot.slane %v208, 1
        %v359 = vrot.slane %v209, 1
        %v360 = vsel %vm324, %v358, %v359
        %v361 = vrot.slane %v210, 1
        %v362 = vrot.slane %v211, 1
        %v363 = vsel %vm324, %v361, %v362
        %v364 = vrot.slane %v212, 1
        %v365 = vrot.slane %v213, 1
        %v366 = vsel %vm324, %v364, %v365
        %v367 = vrot.slane %v214, 1
        %v368 = vrot.slane %v215, 1
        %v369 = vsel %vm324, %v367, %v368
        %v370 = vrot.slane %v216, 1
        %v371 = vrot.slane %v217, 1
        %v372 = vsel %vm324, %v370, %v371
        %v373 = vrot.slane %v222, 1
        %v374 = vrot.slane %v223, 1
        %v375 = vsel %vm324, %v373, %v374
        %v376 = vrot.slane %v224, 1
        %v377 = vrot.slane %v225, 1
        %v378 = vsel %vm324, %v376, %v377
        %v379 = vrot.slane %v226, 1
        %v380 = vrot.slane %v227, 1
        %v381 = vsel %vm324, %v379, %v380
        %v382 = vrot.slane %v228, 1
        %v383 = vrot.slane %v229, 1
        %v384 = vsel %vm324, %v382, %v383
        %v385 = vrot.slane %v230, 1
        %v386 = vrot.slane %v231, 1
        %v387 = vsel %vm324, %v385, %v386
        %v388 = vrot.slane %v232, 1
        %v389 = vrot.slane %v233, 1
        %v390 = vsel %vm324, %v388, %v389
        %v391 = vrot.slane %v234, 1
        %v392 = vrot.slane %v235, 1
        %v393 = vsel %vm324, %v391, %v392
        %v394 = vrot.slane %v236, 1
        %v395 = vrot.slane %v237, 1
        %v396 = vsel %vm324, %v394, %v395
        %v397 = vrot.slane %v242, 1
        %v398 = vrot.slane %v243, 1
        %v399 = vsel %vm324, %v397, %v398
        %v400 = vrot.slane %v244, 1
        %v401 = vrot.slane %v245, 1
        %v402 = vsel %vm324, %v400, %v401
        %v403 = vrot.slane %v246, 1
        %v404 = vrot.slane %v247, 1
        %v405 = vsel %vm324, %v403, %v404
        %v406 = vrot.slane %v248, 1
        %v407 = vrot.slane %v249, 1
        %v408 = vsel %vm324, %v406, %v407
        %v409 = vrot.slane %v250, 1
        %v410 = vrot.slane %v251, 1
        %v411 = vsel %vm324, %v409, %v410
        %v412 = vrot.slane %v252, 1
        %v413 = vrot.slane %v253, 1
        %v414 = vsel %vm324, %v412, %v413
        %v415 = vrot.slane %v254, 1
        %v416 = vrot.slane %v255, 1
        %v417 = vsel %vm324, %v415, %v416
        %v418 = vrot.slane %v256, 1
        %v419 = vrot.slane %v257, 1
        %v420 = vsel %vm324, %v418, %v419
        %v453 = vpack.c.bf16 %v182, %v180
        %v454 = vpack.c.bf16 %v186, %v184
        %v455 = vpack.c.bf16 %v190, %v188
        %v456 = vpack.c.bf16 %v194, %v192
        %v457 = vpack.c.bf16 %v202, %v200
        %v458 = vpack.c.bf16 %v206, %v204
        %v459 = vpack.c.bf16 %v210, %v208
        %v460 = vpack.c.bf16 %v214, %v212
        %v461 = vpack.c.bf16 %v222, %v220
        %v462 = vpack.c.bf16 %v226, %v224
        %v463 = vpack.c.bf16 %v230, %v228
        %v464 = vpack.c.bf16 %v234, %v232
        %v465 = vpack.c.bf16 %v242, %v240
        %v466 = vpack.c.bf16 %v246, %v244
        %v467 = vpack.c.bf16 %v250, %v248
        %v468 = vpack.c.bf16 %v254, %v252
        %v469 = vld [vmem:[%s1] sm:$0xf]
        %v470 = vld [vmem:[%s1 + $0x4] sm:$0xf]
        %v471 = vld [vmem:[%s1 + $0x8] sm:$0xf]
        %v472 = vld [vmem:[%s1 + $0xc] sm:$0xf]
        %v481 = vrot.slane %v180, 1
        %v482 = vrot.slane %v181, 1
        %v483 = vsel %vm324, %v481, %v482
        %v484 = vrot.slane %v200, 1
        %v485 = vrot.slane %v201, 1
        %v486 = vsel %vm324, %v484, %v485
        %v487 = vrot.slane %v220, 1
        %v488 = vrot.slane %v221, 1
        %v489 = vsel %vm324, %v487, %v488
        %v490 = vrot.slane %v240, 1
        %v491 = vrot.slane %v241, 1
        %v492 = vsel %vm324, %v490, %v491
        %v497 = vpack.c.bf16 %v327, %v483
        %v498 = vpack.c.bf16 %v333, %v330
        %v499 = vpack.c.bf16 %v339, %v336
        %v500 = vpack.c.bf16 %v345, %v342
        %v501 = vpack.c.bf16 %v351, %v486
        %v502 = vpack.c.bf16 %v357, %v354
        %v503 = vpack.c.bf16 %v363, %v360
        %v504 = vpack.c.bf16 %v369, %v366
        %v505 = vpack.c.bf16 %v375, %v489
        %v506 = vpack.c.bf16 %v381, %v378
        %v507 = vpack.c.bf16 %v387, %v384
        %v508 = vpack.c.bf16 %v393, %v390
        %v509 = vpack.c.bf16 %v399, %v492
        %v510 = vpack.c.bf16 %v405, %v402
        %v511 = vpack.c.bf16 %v411, %v408
        %v512 = vpack.c.bf16 %v417, %v414
        %s513 = scalar_lea.vmem %s1, 16
        %v514 = vld [vmem:[%s513] sm:$0xf]
        %v515 = vld [vmem:[%s513 + $0x4] sm:$0xf]
        %v516 = vld [vmem:[%s513 + $0x8] sm:$0xf]
        %v517 = vld [vmem:[%s513 + $0xc] sm:$0xf]
        %v522 = vunpack.c.l.b16 %v514
        %v523 = vunpack.c.l.b16 %v515
        %v524 = vunpack.c.l.b16 %v516
        %v525 = vunpack.c.l.b16 %v517
        %v526 = vpack.c.b16 %v523, %v522
        %v527 = vpack.c.b16 %v525, %v524
        %vm530 = vcmask 261120
        %v532 = vsel %vm530, %v497, 0
        %v535 = vsel %vm530, %v498, 0
        %v538 = vsel %vm530, %v499, 0
        %v541 = vsel %vm530, %v500, 0
        %v544 = vsel %vm530, %v501, 0
        %v547 = vsel %vm530, %v502, 0
        %v550 = vsel %vm530, %v503, 0
        %v553 = vsel %vm530, %v504, 0
        %v556 = vsel %vm530, %v505, 0
        %v559 = vsel %vm530, %v506, 0
        %v562 = vsel %vm530, %v507, 0
        %v565 = vsel %vm530, %v508, 0
        %v568 = vsel %vm530, %v509, 0
        %v571 = vsel %vm530, %v510, 0
        %v574 = vsel %vm530, %v511, 0
        %v577 = vsel %vm530, %v512, 0
        %579 = vmatprep.subr.bf16.mxu0 0
        %580 = vmatpush1.bf16.msra.mxu0 0
        %581 = vmatprep.subr.bf16.mxu0 0
        %582 = vmatpush1.bf16.msra.mxu0 0
        %583 = vmatprep.subr.bf16.mxu0 0
        %584 = vmatpush1.bf16.msra.mxu0 0
        %585 = vmatprep.subr.bf16.mxu0 0
        %586 = vmatpush1.bf16.msra.mxu0 0
        %587 = vmatprep.subr.bf16.mxu0 0
        %588 = vmatpush1.bf16.msra.mxu0 0
        %589 = vmatprep.subr.bf16.mxu0 0
        %590 = vmatpush1.bf16.msra.mxu0 0
        %591 = vmatprep.subr.bf16.mxu0 0
        %592 = vmatpush1.bf16.msra.mxu0 %v527
        %593 = vmatprep.subr.bf16.mxu0 0
        %594 = vmatpush1.bf16.msra.mxu0 %v526
        %595 = vmatprep.subr.bf16.mxu0 0
        %596 = vmatpush2.bf16.msra.mxu0 0
        %597 = vmatprep.subr.bf16.mxu0 0
        %598 = vmatpush2.bf16.msra.mxu0 0
        %599 = vmatprep.subr.bf16.mxu0 0
        %600 = vmatpush2.bf16.msra.mxu0 0
        %601 = vmatprep.subr.bf16.mxu0 0
        %602 = vmatpush2.bf16.msra.mxu0 0
        %603 = vmatprep.subr.bf16.mxu0 0
        %604 = vmatpush2.bf16.msra.mxu0 0
        %605 = vmatprep.subr.bf16.mxu0 0
        %606 = vmatpush2.bf16.msra.mxu0 0
        %607 = vmatprep.subr.bf16.mxu0 0
        %608 = vmatpush2.bf16.msra.mxu0 0
        %609 = vmatprep.subr.bf16.mxu0 0
        %610 = vmatpush2.bf16.msra.mxu0 0
        %611 = vmatprep.mubr.bf16.mxu0 0
        %612 = vmatmul.mubr.bf16.gmra.mxu0 %v532
        %v613 = vpop.f32.mrf.mxu0
        %v614 = vadd.f32 0.0, %v613
        %v615 = vpop.f32.mrf.mxu0
        %v616 = vpop.f32.mrf.mxu0
        %v617 = vadd.f32 0.0, %v616
        %v618 = vpop.f32.mrf.mxu0
        %619 = vmatprep.mubr.bf16.mxu0 0
        %620 = vmatmul.mubr.bf16.gmra.mxu0 %v535
        %v621 = vpop.f32.mrf.mxu0
        %v622 = vadd.f32 0.0, %v621
        %v623 = vpop.f32.mrf.mxu0
        %v624 = vpop.f32.mrf.mxu0
        %v625 = vadd.f32 0.0, %v624
        %v626 = vpop.f32.mrf.mxu0
        %627 = vmatprep.mubr.bf16.mxu0 0
        %628 = vmatmul.mubr.bf16.gmra.mxu0 %v538
        %v629 = vpop.f32.mrf.mxu0
        %v630 = vadd.f32 0.0, %v629
        %v631 = vpop.f32.mrf.mxu0
        %v632 = vpop.f32.mrf.mxu0
        %v633 = vadd.f32 0.0, %v632
        %v634 = vpop.f32.mrf.mxu0
        %635 = vmatprep.mubr.bf16.mxu0 0
        %636 = vmatmul.mubr.bf16.gmra.mxu0 %v541
        %v637 = vpop.f32.mrf.mxu0
        %v638 = vadd.f32 0.0, %v637
        %v639 = vpop.f32.mrf.mxu0
        %v640 = vpop.f32.mrf.mxu0
        %v641 = vadd.f32 0.0, %v640
        %v642 = vpop.f32.mrf.mxu0
        %643 = vmatprep.mubr.bf16.mxu0 0
        %644 = vmatmul.mubr.bf16.gmra.mxu0 %v544
        %v645 = vpop.f32.mrf.mxu0
        %v646 = vadd.f32 0.0, %v645
        %v647 = vpop.f32.mrf.mxu0
        %v648 = vpop.f32.mrf.mxu0
        %v649 = vadd.f32 0.0, %v648
        %v650 = vpop.f32.mrf.mxu0
        %651 = vmatprep.mubr.bf16.mxu0 0
        %652 = vmatmul.mubr.bf16.gmra.mxu0 %v547
        %v653 = vpop.f32.mrf.mxu0
        %v654 = vadd.f32 0.0, %v653
        %v655 = vpop.f32.mrf.mxu0
        %v656 = vpop.f32.mrf.mxu0
        %v657 = vadd.f32 0.0, %v656
        %v658 = vpop.f32.mrf.mxu0
        %659 = vmatprep.mubr.bf16.mxu0 0
        %660 = vmatmul.mubr.bf16.gmra.mxu0 %v550
        %v661 = vpop.f32.mrf.mxu0
        %v662 = vadd.f32 0.0, %v661
        %v663 = vpop.f32.mrf.mxu0
        %v664 = vpop.f32.mrf.mxu0
        %v665 = vadd.f32 0.0, %v664
        %v666 = vpop.f32.mrf.mxu0
        %667 = vmatprep.mubr.bf16.mxu0 0
        %668 = vmatmul.mubr.bf16.gmra.mxu0 %v553
        %v669 = vpop.f32.mrf.mxu0
        %v670 = vadd.f32 0.0, %v669
        %v671 = vpop.f32.mrf.mxu0
        %v672 = vpop.f32.mrf.mxu0
        %v673 = vadd.f32 0.0, %v672
        %v674 = vpop.f32.mrf.mxu0
        %675 = vmatprep.mubr.bf16.mxu0 0
        %676 = vmatmul.mubr.bf16.gmra.mxu0 %v556
        %v677 = vpop.f32.mrf.mxu0
        %v678 = vadd.f32 0.0, %v677
        %v679 = vpop.f32.mrf.mxu0
        %v680 = vpop.f32.mrf.mxu0
        %v681 = vadd.f32 0.0, %v680
        %v682 = vpop.f32.mrf.mxu0
        %683 = vmatprep.mubr.bf16.mxu0 0
        %684 = vmatmul.mubr.bf16.gmra.mxu0 %v559
        %v685 = vpop.f32.mrf.mxu0
        %v686 = vadd.f32 0.0, %v685
        %v687 = vpop.f32.mrf.mxu0
        %v688 = vpop.f32.mrf.mxu0
        %v689 = vadd.f32 0.0, %v688
        %v690 = vpop.f32.mrf.mxu0
        %691 = vmatprep.mubr.bf16.mxu0 0
        %692 = vmatmul.mubr.bf16.gmra.mxu0 %v562
        %v693 = vpop.f32.mrf.mxu0
        %v694 = vadd.f32 0.0, %v693
        %v695 = vpop.f32.mrf.mxu0
        %v696 = vpop.f32.mrf.mxu0
        %v697 = vadd.f32 0.0, %v696
        %v698 = vpop.f32.mrf.mxu0
        %699 = vmatprep.mubr.bf16.mxu0 0
        %700 = vmatmul.mubr.bf16.gmra.mxu0 %v565
        %v701 = vpop.f32.mrf.mxu0
        %v702 = vadd.f32 0.0, %v701
        %v703 = vpop.f32.mrf.mxu0
        %v704 = vpop.f32.mrf.mxu0
        %v705 = vadd.f32 0.0, %v704
        %v706 = vpop.f32.mrf.mxu0
        %707 = vmatprep.mubr.bf16.mxu0 0
        %708 = vmatmul.mubr.bf16.gmra.mxu0 %v568
        %v709 = vpop.f32.mrf.mxu0
        %v710 = vadd.f32 0.0, %v709
        %v711 = vpop.f32.mrf.mxu0
        %v712 = vpop.f32.mrf.mxu0
        %v713 = vadd.f32 0.0, %v712
        %v714 = vpop.f32.mrf.mxu0
        %715 = vmatprep.mubr.bf16.mxu0 0
        %716 = vmatmul.mubr.bf16.gmra.mxu0 %v571
        %v717 = vpop.f32.mrf.mxu0
        %v718 = vadd.f32 0.0, %v717
        %v719 = vpop.f32.mrf.mxu0
        %v720 = vpop.f32.mrf.mxu0
        %v721 = vadd.f32 0.0, %v720
        %v722 = vpop.f32.mrf.mxu0
        %723 = vmatprep.mubr.bf16.mxu0 0
        %724 = vmatmul.mubr.bf16.gmra.mxu0 %v574
        %v725 = vpop.f32.mrf.mxu0
        %v726 = vadd.f32 0.0, %v725
        %v727 = vpop.f32.mrf.mxu0
        %v728 = vpop.f32.mrf.mxu0
        %v729 = vadd.f32 0.0, %v728
        %v730 = vpop.f32.mrf.mxu0
        %731 = vmatprep.mubr.bf16.mxu0 0
        %732 = vmatmul.mubr.bf16.gmra.mxu0 %v577
        %v733 = vpop.f32.mrf.mxu0
        %v734 = vadd.f32 0.0, %v733
        %v735 = vpop.f32.mrf.mxu0
        %v736 = vpop.f32.mrf.mxu0
        %v737 = vadd.f32 0.0, %v736
        %v738 = vpop.f32.mrf.mxu0
        %739 = vdwg.mxu0
        %v744 = vunpack.c.l.b16 %v469
        %v745 = vunpack.c.l.b16 %v470
        %v746 = vunpack.c.l.b16 %v471
        %v747 = vunpack.c.l.b16 %v472
        %v748 = vpack.c.b16 %v745, %v744
        %v749 = vpack.c.b16 %v747, %v746
        %v753 = vsel %vm530, %v453, 0
        %v756 = vsel %vm530, %v454, 0
        %v759 = vsel %vm530, %v455, 0
        %v762 = vsel %vm530, %v456, 0
        %v765 = vsel %vm530, %v457, 0
        %v768 = vsel %vm530, %v458, 0
        %v771 = vsel %vm530, %v459, 0
        %v774 = vsel %vm530, %v460, 0
        %v777 = vsel %vm530, %v461, 0
        %v780 = vsel %vm530, %v462, 0
        %v783 = vsel %vm530, %v463, 0
        %v786 = vsel %vm530, %v464, 0
        %v789 = vsel %vm530, %v465, 0
        %v792 = vsel %vm530, %v466, 0
        %v795 = vsel %vm530, %v467, 0
        %v798 = vsel %vm530, %v468, 0
        %800 = vmatprep.subr.bf16.mxu0 0
        %801 = vmatpush1.bf16.msra.mxu0 0
        %802 = vmatprep.subr.bf16.mxu0 0
        %803 = vmatpush1.bf16.msra.mxu0 0
        %804 = vmatprep.subr.bf16.mxu0 0
        %805 = vmatpush1.bf16.msra.mxu0 0
        %806 = vmatprep.subr.bf16.mxu0 0
        %807 = vmatpush1.bf16.msra.mxu0 0
        %808 = vmatprep.subr.bf16.mxu0 0
        %809 = vmatpush1.bf16.msra.mxu0 0
        %810 = vmatprep.subr.bf16.mxu0 0
        %811 = vmatpush1.bf16.msra.mxu0 0
        %812 = vmatprep.subr.bf16.mxu0 0
        %813 = vmatpush1.bf16.msra.mxu0 %v749
        %814 = vmatprep.subr.bf16.mxu0 0
        %815 = vmatpush1.bf16.msra.mxu0 %v748
        %816 = vmatprep.subr.bf16.mxu0 0
        %817 = vmatpush2.bf16.msra.mxu0 0
        %818 = vmatprep.subr.bf16.mxu0 0
        %819 = vmatpush2.bf16.msra.mxu0 0
        %820 = vmatprep.subr.bf16.mxu0 0
        %821 = vmatpush2.bf16.msra.mxu0 0
        %822 = vmatprep.subr.bf16.mxu0 0
        %823 = vmatpush2.bf16.msra.mxu0 0
        %824 = vmatprep.subr.bf16.mxu0 0
        %825 = vmatpush2.bf16.msra.mxu0 0
        %826 = vmatprep.subr.bf16.mxu0 0
        %827 = vmatpush2.bf16.msra.mxu0 0
        %828 = vmatprep.subr.bf16.mxu0 0
        %829 = vmatpush2.bf16.msra.mxu0 0
        %830 = vmatprep.subr.bf16.mxu0 0
        %831 = vmatpush2.bf16.msra.mxu0 0
        %832 = vmatprep.mubr.bf16.mxu0 0
        %833 = vmatmul.mubr.bf16.gmra.mxu0 %v753
        %v834 = vpop.f32.mrf.mxu0
        %v835 = vadd.f32 %v614, %v834
        %v836 = vpop.f32.mrf.mxu0
        %v837 = vpop.f32.mrf.mxu0
        %v838 = vadd.f32 %v617, %v837
        %v839 = vpop.f32.mrf.mxu0
        %840 = vmatprep.mubr.bf16.mxu0 0
        %841 = vmatmul.mubr.bf16.gmra.mxu0 %v756
        %v842 = vpop.f32.mrf.mxu0
        %v843 = vadd.f32 %v622, %v842
        %v844 = vpop.f32.mrf.mxu0
        %v845 = vpop.f32.mrf.mxu0
        %v846 = vadd.f32 %v625, %v845
        %v847 = vpop.f32.mrf.mxu0
        %848 = vmatprep.mubr.bf16.mxu0 0
        %849 = vmatmul.mubr.bf16.gmra.mxu0 %v759
        %v850 = vpop.f32.mrf.mxu0
        %v851 = vadd.f32 %v630, %v850
        %v852 = vpop.f32.mrf.mxu0
        %v853 = vpop.f32.mrf.mxu0
        %v854 = vadd.f32 %v633, %v853
        %v855 = vpop.f32.mrf.mxu0
        %856 = vmatprep.mubr.bf16.mxu0 0
        %857 = vmatmul.mubr.bf16.gmra.mxu0 %v762
        %v858 = vpop.f32.mrf.mxu0
        %v859 = vadd.f32 %v638, %v858
        %v860 = vpop.f32.mrf.mxu0
        %v861 = vpop.f32.mrf.mxu0
        %v862 = vadd.f32 %v641, %v861
        %v863 = vpop.f32.mrf.mxu0
        %864 = vmatprep.mubr.bf16.mxu0 0
        %865 = vmatmul.mubr.bf16.gmra.mxu0 %v765
        %v866 = vpop.f32.mrf.mxu0
        %v867 = vadd.f32 %v646, %v866
        %v868 = vpop.f32.mrf.mxu0
        %v869 = vpop.f32.mrf.mxu0
        %v870 = vadd.f32 %v649, %v869
        %v871 = vpop.f32.mrf.mxu0
        %872 = vmatprep.mubr.bf16.mxu0 0
        %873 = vmatmul.mubr.bf16.gmra.mxu0 %v768
        %v874 = vpop.f32.mrf.mxu0
        %v875 = vadd.f32 %v654, %v874
        %v876 = vpop.f32.mrf.mxu0
        %v877 = vpop.f32.mrf.mxu0
        %v878 = vadd.f32 %v657, %v877
        %v879 = vpop.f32.mrf.mxu0
        %880 = vmatprep.mubr.bf16.mxu0 0
        %881 = vmatmul.mubr.bf16.gmra.mxu0 %v771
        %v882 = vpop.f32.mrf.mxu0
        %v883 = vadd.f32 %v662, %v882
        %v884 = vpop.f32.mrf.mxu0
        %v885 = vpop.f32.mrf.mxu0
        %v886 = vadd.f32 %v665, %v885
        %v887 = vpop.f32.mrf.mxu0
        %888 = vmatprep.mubr.bf16.mxu0 0
        %889 = vmatmul.mubr.bf16.gmra.mxu0 %v774
        %v890 = vpop.f32.mrf.mxu0
        %v891 = vadd.f32 %v670, %v890
        %v892 = vpop.f32.mrf.mxu0
        %v893 = vpop.f32.mrf.mxu0
        %v894 = vadd.f32 %v673, %v893
        %v895 = vpop.f32.mrf.mxu0
        %896 = vmatprep.mubr.bf16.mxu0 0
        %897 = vmatmul.mubr.bf16.gmra.mxu0 %v777
        %v898 = vpop.f32.mrf.mxu0
        %v899 = vadd.f32 %v678, %v898
        %v900 = vpop.f32.mrf.mxu0
        %v901 = vpop.f32.mrf.mxu0
        %v902 = vadd.f32 %v681, %v901
        %v903 = vpop.f32.mrf.mxu0
        %904 = vmatprep.mubr.bf16.mxu0 0
        %905 = vmatmul.mubr.bf16.gmra.mxu0 %v780
        %v906 = vpop.f32.mrf.mxu0
        %v907 = vadd.f32 %v686, %v906
        %v908 = vpop.f32.mrf.mxu0
        %v909 = vpop.f32.mrf.mxu0
        %v910 = vadd.f32 %v689, %v909
        %v911 = vpop.f32.mrf.mxu0
        %912 = vmatprep.mubr.bf16.mxu0 0
        %913 = vmatmul.mubr.bf16.gmra.mxu0 %v783
        %v914 = vpop.f32.mrf.mxu0
        %v915 = vadd.f32 %v694, %v914
        %v916 = vpop.f32.mrf.mxu0
        %v917 = vpop.f32.mrf.mxu0
        %v918 = vadd.f32 %v697, %v917
        %v919 = vpop.f32.mrf.mxu0
        %920 = vmatprep.mubr.bf16.mxu0 0
        %921 = vmatmul.mubr.bf16.gmra.mxu0 %v786
        %v922 = vpop.f32.mrf.mxu0
        %v923 = vadd.f32 %v702, %v922
        %v924 = vpop.f32.mrf.mxu0
        %v925 = vpop.f32.mrf.mxu0
        %v926 = vadd.f32 %v705, %v925
        %v927 = vpop.f32.mrf.mxu0
        %928 = vmatprep.mubr.bf16.mxu0 0
        %929 = vmatmul.mubr.bf16.gmra.mxu0 %v789
        %v930 = vpop.f32.mrf.mxu0
        %v931 = vadd.f32 %v710, %v930
        %v932 = vpop.f32.mrf.mxu0
        %v933 = vpop.f32.mrf.mxu0
        %v934 = vadd.f32 %v713, %v933
        %v935 = vpop.f32.mrf.mxu0
        %936 = vmatprep.mubr.bf16.mxu0 0
        %937 = vmatmul.mubr.bf16.gmra.mxu0 %v792
        %v938 = vpop.f32.mrf.mxu0
        %v939 = vadd.f32 %v718, %v938
        %v940 = vpop.f32.mrf.mxu0
        %v941 = vpop.f32.mrf.mxu0
        %v942 = vadd.f32 %v721, %v941
        %v943 = vpop.f32.mrf.mxu0
        %944 = vmatprep.mubr.bf16.mxu0 0
        %945 = vmatmul.mubr.bf16.gmra.mxu0 %v795
        %v946 = vpop.f32.mrf.mxu0
        %v947 = vadd.f32 %v726, %v946
        %v948 = vpop.f32.mrf.mxu0
        %v949 = vpop.f32.mrf.mxu0
        %v950 = vadd.f32 %v729, %v949
        %v951 = vpop.f32.mrf.mxu0
        %952 = vmatprep.mubr.bf16.mxu0 0
        %953 = vmatmul.mubr.bf16.gmra.mxu0 %v798
        %v954 = vpop.f32.mrf.mxu0
        %v955 = vadd.f32 %v734, %v954
        %v956 = vpop.f32.mrf.mxu0
        %v957 = vpop.f32.mrf.mxu0
        %v958 = vadd.f32 %v737, %v957
        %v959 = vpop.f32.mrf.mxu0
        %960 = vdwg.mxu0
        %vm961 = vcmask 1045504
        %v962 = vrot.slane %v180, 2
        %v963 = vrot.slane %v181, 2
        %v964 = vsel %vm961, %v962, %v963
        %v965 = vrot.slane %v182, 2
        %v966 = vrot.slane %v183, 2
        %v967 = vsel %vm961, %v965, %v966
        %v968 = vrot.slane %v184, 2
        %v969 = vrot.slane %v185, 2
        %v970 = vsel %vm961, %v968, %v969
        %v971 = vrot.slane %v186, 2
        %v972 = vrot.slane %v187, 2
        %v973 = vsel %vm961, %v971, %v972
        %v974 = vrot.slane %v188, 2
        %v975 = vrot.slane %v189, 2
        %v976 = vsel %vm961, %v974, %v975
        %v977 = vrot.slane %v190, 2
        %v978 = vrot.slane %v191, 2
        %v979 = vsel %vm961, %v977, %v978
        %v980 = vrot.slane %v192, 2
        %v981 = vrot.slane %v193, 2
        %v982 = vsel %vm961, %v980, %v981
        %v983 = vrot.slane %v194, 2
        %v984 = vrot.slane %v195, 2
        %v985 = vsel %vm961, %v983, %v984
        %v986 = vrot.slane %v200, 2
        %v987 = vrot.slane %v201, 2
        %v988 = vsel %vm961, %v986, %v987
        %v989 = vrot.slane %v202, 2
        %v990 = vrot.slane %v203, 2
        %v991 = vsel %vm961, %v989, %v990
        %v992 = vrot.slane %v204, 2
        %v993 = vrot.slane %v205, 2
        %v994 = vsel %vm961, %v992, %v993
        %v995 = vrot.slane %v206, 2
        %v996 = vrot.slane %v207, 2
        %v997 = vsel %vm961, %v995, %v996
        %v998 = vrot.slane %v208, 2
        %v999 = vrot.slane %v209, 2
        %v1000 = vsel %vm961, %v998, %v999
        %v1001 = vrot.slane %v210, 2
        %v1002 = vrot.slane %v211, 2
        %v1003 = vsel %vm961, %v1001, %v1002
        %v1004 = vrot.slane %v212, 2
        %v1005 = vrot.slane %v213, 2
        %v1006 = vsel %vm961, %v1004, %v1005
        %v1007 = vrot.slane %v214, 2
        %v1008 = vrot.slane %v215, 2
        %v1009 = vsel %vm961, %v1007, %v1008
        %v1010 = vrot.slane %v220, 2
        %v1011 = vrot.slane %v221, 2
        %v1012 = vsel %vm961, %v1010, %v1011
        %v1013 = vrot.slane %v222, 2
        %v1014 = vrot.slane %v223, 2
        %v1015 = vsel %vm961, %v1013, %v1014
        %v1016 = vrot.slane %v224, 2
        %v1017 = vrot.slane %v225, 2
        %v1018 = vsel %vm961, %v1016, %v1017
        %v1019 = vrot.slane %v226, 2
        %v1020 = vrot.slane %v227, 2
        %v1021 = vsel %vm961, %v1019, %v1020
        %v1022 = vrot.slane %v228, 2
        %v1023 = vrot.slane %v229, 2
        %v1024 = vsel %vm961, %v1022, %v1023
        %v1025 = vrot.slane %v230, 2
        %v1026 = vrot.slane %v231, 2
        %v1027 = vsel %vm961, %v1025, %v1026
        %v1028 = vrot.slane %v232, 2
        %v1029 = vrot.slane %v233, 2
        %v1030 = vsel %vm961, %v1028, %v1029
        %v1031 = vrot.slane %v234, 2
        %v1032 = vrot.slane %v235, 2
        %v1033 = vsel %vm961, %v1031, %v1032
        %v1034 = vrot.slane %v240, 2
        %v1035 = vrot.slane %v241, 2
        %v1036 = vsel %vm961, %v1034, %v1035
        %v1037 = vrot.slane %v242, 2
        %v1038 = vrot.slane %v243, 2
        %v1039 = vsel %vm961, %v1037, %v1038
        %v1040 = vrot.slane %v244, 2
        %v1041 = vrot.slane %v245, 2
        %v1042 = vsel %vm961, %v1040, %v1041
        %v1043 = vrot.slane %v246, 2
        %v1044 = vrot.slane %v247, 2
        %v1045 = vsel %vm961, %v1043, %v1044
        %v1046 = vrot.slane %v248, 2
        %v1047 = vrot.slane %v249, 2
        %v1048 = vsel %vm961, %v1046, %v1047
        %v1049 = vrot.slane %v250, 2
        %v1050 = vrot.slane %v251, 2
        %v1051 = vsel %vm961, %v1049, %v1050
        %v1052 = vrot.slane %v252, 2
        %v1053 = vrot.slane %v253, 2
        %v1054 = vsel %vm961, %v1052, %v1053
        %v1055 = vrot.slane %v254, 2
        %v1056 = vrot.slane %v255, 2
        %v1057 = vsel %vm961, %v1055, %v1056
        %v1090 = vpack.c.bf16 %v967, %v964
        %v1091 = vpack.c.bf16 %v973, %v970
        %v1092 = vpack.c.bf16 %v979, %v976
        %v1093 = vpack.c.bf16 %v985, %v982
        %v1094 = vpack.c.bf16 %v991, %v988
        %v1095 = vpack.c.bf16 %v997, %v994
        %v1096 = vpack.c.bf16 %v1003, %v1000
        %v1097 = vpack.c.bf16 %v1009, %v1006
        %v1098 = vpack.c.bf16 %v1015, %v1012
        %v1099 = vpack.c.bf16 %v1021, %v1018
        %v1100 = vpack.c.bf16 %v1027, %v1024
        %v1101 = vpack.c.bf16 %v1033, %v1030
        %v1102 = vpack.c.bf16 %v1039, %v1036
        %v1103 = vpack.c.bf16 %v1045, %v1042
        %v1104 = vpack.c.bf16 %v1051, %v1048
        %v1105 = vpack.c.bf16 %v1057, %v1054
        %s1106 = scalar_lea.vmem %s1, 32
        %v1107 = vld [vmem:[%s1106] sm:$0xf]
        %v1108 = vld [vmem:[%s1106 + $0x4] sm:$0xf]
        %v1109 = vld [vmem:[%s1106 + $0x8] sm:$0xf]
        %v1110 = vld [vmem:[%s1106 + $0xc] sm:$0xf]
        %v1115 = vunpack.c.l.b16 %v1107
        %v1116 = vunpack.c.l.b16 %v1108
        %v1117 = vunpack.c.l.b16 %v1109
        %v1118 = vunpack.c.l.b16 %v1110
        %v1119 = vpack.c.b16 %v1116, %v1115
        %v1120 = vpack.c.b16 %v1118, %v1117
        %v1124 = vsel %vm530, %v1090, 0
        %v1127 = vsel %vm530, %v1091, 0
        %v1130 = vsel %vm530, %v1092, 0
        %v1133 = vsel %vm530, %v1093, 0
        %v1136 = vsel %vm530, %v1094, 0
        %v1139 = vsel %vm530, %v1095, 0
        %v1142 = vsel %vm530, %v1096, 0
        %v1145 = vsel %vm530, %v1097, 0
        %v1148 = vsel %vm530, %v1098, 0
        %v1151 = vsel %vm530, %v1099, 0
        %v1154 = vsel %vm530, %v1100, 0
        %v1157 = vsel %vm530, %v1101, 0
        %v1160 = vsel %vm530, %v1102, 0
        %v1163 = vsel %vm530, %v1103, 0
        %v1166 = vsel %vm530, %v1104, 0
        %v1169 = vsel %vm530, %v1105, 0
        %1171 = vmatprep.subr.bf16.mxu0 0
        %1172 = vmatpush1.bf16.msra.mxu0 0
        %1173 = vmatprep.subr.bf16.mxu0 0
        %1174 = vmatpush1.bf16.msra.mxu0 0
        %1175 = vmatprep.subr.bf16.mxu0 0
        %1176 = vmatpush1.bf16.msra.mxu0 0
        %1177 = vmatprep.subr.bf16.mxu0 0
        %1178 = vmatpush1.bf16.msra.mxu0 0
        %1179 = vmatprep.subr.bf16.mxu0 0
        %1180 = vmatpush1.bf16.msra.mxu0 0
        %1181 = vmatprep.subr.bf16.mxu0 0
        %1182 = vmatpush1.bf16.msra.mxu0 0
        %1183 = vmatprep.subr.bf16.mxu0 0
        %1184 = vmatpush1.bf16.msra.mxu0 %v1120
        %1185 = vmatprep.subr.bf16.mxu0 0
        %1186 = vmatpush1.bf16.msra.mxu0 %v1119
        %1187 = vmatprep.subr.bf16.mxu0 0
        %1188 = vmatpush2.bf16.msra.mxu0 0
        %1189 = vmatprep.subr.bf16.mxu0 0
        %1190 = vmatpush2.bf16.msra.mxu0 0
        %1191 = vmatprep.subr.bf16.mxu0 0
        %1192 = vmatpush2.bf16.msra.mxu0 0
        %1193 = vmatprep.subr.bf16.mxu0 0
        %1194 = vmatpush2.bf16.msra.mxu0 0
        %1195 = vmatprep.subr.bf16.mxu0 0
        %1196 = vmatpush2.bf16.msra.mxu0 0
        %1197 = vmatprep.subr.bf16.mxu0 0
        %1198 = vmatpush2.bf16.msra.mxu0 0
        %1199 = vmatprep.subr.bf16.mxu0 0
        %1200 = vmatpush2.bf16.msra.mxu0 0
        %1201 = vmatprep.subr.bf16.mxu0 0
        %1202 = vmatpush2.bf16.msra.mxu0 0
        %1203 = vmatprep.mubr.bf16.mxu0 0
        %1204 = vmatmul.mubr.bf16.gmra.mxu0 %v1124
        %v1205 = vpop.f32.mrf.mxu0
        %v1206 = vadd.f32 0.0, %v1205
        %v1207 = vpop.f32.mrf.mxu0
        %v1208 = vpop.f32.mrf.mxu0
        %v1209 = vadd.f32 0.0, %v1208
        %v1210 = vpop.f32.mrf.mxu0
        %1211 = vmatprep.mubr.bf16.mxu0 0
        %1212 = vmatmul.mubr.bf16.gmra.mxu0 %v1127
        %v1213 = vpop.f32.mrf.mxu0
        %v1214 = vadd.f32 0.0, %v1213
        %v1215 = vpop.f32.mrf.mxu0
        %v1216 = vpop.f32.mrf.mxu0
        %v1217 = vadd.f32 0.0, %v1216
        %v1218 = vpop.f32.mrf.mxu0
        %1219 = vmatprep.mubr.bf16.mxu0 0
        %1220 = vmatmul.mubr.bf16.gmra.mxu0 %v1130
        %v1221 = vpop.f32.mrf.mxu0
        %v1222 = vadd.f32 0.0, %v1221
        %v1223 = vpop.f32.mrf.mxu0
        %v1224 = vpop.f32.mrf.mxu0
        %v1225 = vadd.f32 0.0, %v1224
        %v1226 = vpop.f32.mrf.mxu0
        %1227 = vmatprep.mubr.bf16.mxu0 0
        %1228 = vmatmul.mubr.bf16.gmra.mxu0 %v1133
        %v1229 = vpop.f32.mrf.mxu0
        %v1230 = vadd.f32 0.0, %v1229
        %v1231 = vpop.f32.mrf.mxu0
        %v1232 = vpop.f32.mrf.mxu0
        %v1233 = vadd.f32 0.0, %v1232
        %v1234 = vpop.f32.mrf.mxu0
        %1235 = vmatprep.mubr.bf16.mxu0 0
        %1236 = vmatmul.mubr.bf16.gmra.mxu0 %v1136
        %v1237 = vpop.f32.mrf.mxu0
        %v1238 = vadd.f32 0.0, %v1237
        %v1239 = vpop.f32.mrf.mxu0
        %v1240 = vpop.f32.mrf.mxu0
        %v1241 = vadd.f32 0.0, %v1240
        %v1242 = vpop.f32.mrf.mxu0
        %1243 = vmatprep.mubr.bf16.mxu0 0
        %1244 = vmatmul.mubr.bf16.gmra.mxu0 %v1139
        %v1245 = vpop.f32.mrf.mxu0
        %v1246 = vadd.f32 0.0, %v1245
        %v1247 = vpop.f32.mrf.mxu0
        %v1248 = vpop.f32.mrf.mxu0
        %v1249 = vadd.f32 0.0, %v1248
        %v1250 = vpop.f32.mrf.mxu0
        %1251 = vmatprep.mubr.bf16.mxu0 0
        %1252 = vmatmul.mubr.bf16.gmra.mxu0 %v1142
        %v1253 = vpop.f32.mrf.mxu0
        %v1254 = vadd.f32 0.0, %v1253
        %v1255 = vpop.f32.mrf.mxu0
        %v1256 = vpop.f32.mrf.mxu0
        %v1257 = vadd.f32 0.0, %v1256
        %v1258 = vpop.f32.mrf.mxu0
        %1259 = vmatprep.mubr.bf16.mxu0 0
        %1260 = vmatmul.mubr.bf16.gmra.mxu0 %v1145
        %v1261 = vpop.f32.mrf.mxu0
        %v1262 = vadd.f32 0.0, %v1261
        %v1263 = vpop.f32.mrf.mxu0
        %v1264 = vpop.f32.mrf.mxu0
        %v1265 = vadd.f32 0.0, %v1264
        %v1266 = vpop.f32.mrf.mxu0
        %1267 = vmatprep.mubr.bf16.mxu0 0
        %1268 = vmatmul.mubr.bf16.gmra.mxu0 %v1148
        %v1269 = vpop.f32.mrf.mxu0
        %v1270 = vadd.f32 0.0, %v1269
        %v1271 = vpop.f32.mrf.mxu0
        %v1272 = vpop.f32.mrf.mxu0
        %v1273 = vadd.f32 0.0, %v1272
        %v1274 = vpop.f32.mrf.mxu0
        %1275 = vmatprep.mubr.bf16.mxu0 0
        %1276 = vmatmul.mubr.bf16.gmra.mxu0 %v1151
        %v1277 = vpop.f32.mrf.mxu0
        %v1278 = vadd.f32 0.0, %v1277
        %v1279 = vpop.f32.mrf.mxu0
        %v1280 = vpop.f32.mrf.mxu0
        %v1281 = vadd.f32 0.0, %v1280
        %v1282 = vpop.f32.mrf.mxu0
        %1283 = vmatprep.mubr.bf16.mxu0 0
        %1284 = vmatmul.mubr.bf16.gmra.mxu0 %v1154
        %v1285 = vpop.f32.mrf.mxu0
        %v1286 = vadd.f32 0.0, %v1285
        %v1287 = vpop.f32.mrf.mxu0
        %v1288 = vpop.f32.mrf.mxu0
        %v1289 = vadd.f32 0.0, %v1288
        %v1290 = vpop.f32.mrf.mxu0
        %1291 = vmatprep.mubr.bf16.mxu0 0
        %1292 = vmatmul.mubr.bf16.gmra.mxu0 %v1157
        %v1293 = vpop.f32.mrf.mxu0
        %v1294 = vadd.f32 0.0, %v1293
        %v1295 = vpop.f32.mrf.mxu0
        %v1296 = vpop.f32.mrf.mxu0
        %v1297 = vadd.f32 0.0, %v1296
        %v1298 = vpop.f32.mrf.mxu0
        %1299 = vmatprep.mubr.bf16.mxu0 0
        %1300 = vmatmul.mubr.bf16.gmra.mxu0 %v1160
        %v1301 = vpop.f32.mrf.mxu0
        %v1302 = vadd.f32 0.0, %v1301
        %v1303 = vpop.f32.mrf.mxu0
        %v1304 = vpop.f32.mrf.mxu0
        %v1305 = vadd.f32 0.0, %v1304
        %v1306 = vpop.f32.mrf.mxu0
        %1307 = vmatprep.mubr.bf16.mxu0 0
        %1308 = vmatmul.mubr.bf16.gmra.mxu0 %v1163
        %v1309 = vpop.f32.mrf.mxu0
        %v1310 = vadd.f32 0.0, %v1309
        %v1311 = vpop.f32.mrf.mxu0
        %v1312 = vpop.f32.mrf.mxu0
        %v1313 = vadd.f32 0.0, %v1312
        %v1314 = vpop.f32.mrf.mxu0
        %1315 = vmatprep.mubr.bf16.mxu0 0
        %1316 = vmatmul.mubr.bf16.gmra.mxu0 %v1166
        %v1317 = vpop.f32.mrf.mxu0
        %v1318 = vadd.f32 0.0, %v1317
        %v1319 = vpop.f32.mrf.mxu0
        %v1320 = vpop.f32.mrf.mxu0
        %v1321 = vadd.f32 0.0, %v1320
        %v1322 = vpop.f32.mrf.mxu0
        %1323 = vmatprep.mubr.bf16.mxu0 0
        %1324 = vmatmul.mubr.bf16.gmra.mxu0 %v1169
        %v1325 = vpop.f32.mrf.mxu0
        %v1326 = vadd.f32 0.0, %v1325
        %v1327 = vpop.f32.mrf.mxu0
        %v1328 = vpop.f32.mrf.mxu0
        %v1329 = vadd.f32 0.0, %v1328
        %v1330 = vpop.f32.mrf.mxu0
        %1331 = vdwg.mxu0
        %v1332 = vadd.f32 %v835, %v1206
        %v1333 = vadd.f32 %v838, %v1209
        %v1334 = vadd.f32 %v843, %v1214
        %v1335 = vadd.f32 %v846, %v1217
        %v1336 = vadd.f32 %v851, %v1222
        %v1337 = vadd.f32 %v854, %v1225
        %v1338 = vadd.f32 %v859, %v1230
        %v1339 = vadd.f32 %v862, %v1233
        %v1340 = vadd.f32 %v867, %v1238
        %v1341 = vadd.f32 %v870, %v1241
        %v1342 = vadd.f32 %v875, %v1246
        %v1343 = vadd.f32 %v878, %v1249
        %v1344 = vadd.f32 %v883, %v1254
        %v1345 = vadd.f32 %v886, %v1257
        %v1346 = vadd.f32 %v891, %v1262
        %v1347 = vadd.f32 %v894, %v1265
        %v1348 = vadd.f32 %v899, %v1270
        %v1349 = vadd.f32 %v902, %v1273
        %v1350 = vadd.f32 %v907, %v1278
        %v1351 = vadd.f32 %v910, %v1281
        %v1352 = vadd.f32 %v915, %v1286
        %v1353 = vadd.f32 %v918, %v1289
        %v1354 = vadd.f32 %v923, %v1294
        %v1355 = vadd.f32 %v926, %v1297
        %v1356 = vadd.f32 %v931, %v1302
        %v1357 = vadd.f32 %v934, %v1305
        %v1358 = vadd.f32 %v939, %v1310
        %v1359 = vadd.f32 %v942, %v1313
        %v1360 = vadd.f32 %v947, %v1318
        %v1361 = vadd.f32 %v950, %v1321
        %v1362 = vadd.f32 %v955, %v1326
        %v1363 = vadd.f32 %v958, %v1329
        %v1364 = vpack.c.bf16 %v184, %v182
        %v1365 = vpack.c.bf16 %v188, %v186
        %v1366 = vpack.c.bf16 %v192, %v190
        %v1367 = vpack.c.bf16 %v196, %v194
        %v1368 = vpack.c.bf16 %v204, %v202
        %v1369 = vpack.c.bf16 %v208, %v206
        %v1370 = vpack.c.bf16 %v212, %v210
        %v1371 = vpack.c.bf16 %v216, %v214
        %v1372 = vpack.c.bf16 %v224, %v222
        %v1373 = vpack.c.bf16 %v228, %v226
        %v1374 = vpack.c.bf16 %v232, %v230
        %v1375 = vpack.c.bf16 %v236, %v234
        %v1376 = vpack.c.bf16 %v244, %v242
        %v1377 = vpack.c.bf16 %v248, %v246
        %v1378 = vpack.c.bf16 %v252, %v250
        %v1379 = vpack.c.bf16 %v256, %v254
        %s1380 = scalar_lea.vmem %s1, 48
        %v1381 = vld [vmem:[%s1380] sm:$0xf]
        %v1382 = vld [vmem:[%s1380 + $0x4] sm:$0xf]
        %v1383 = vld [vmem:[%s1380 + $0x8] sm:$0xf]
        %v1384 = vld [vmem:[%s1380 + $0xc] sm:$0xf]
        %v1389 = vunpack.c.l.b16 %v1381
        %v1390 = vunpack.c.l.b16 %v1382
        %v1391 = vunpack.c.l.b16 %v1383
        %v1392 = vunpack.c.l.b16 %v1384
        %v1393 = vpack.c.b16 %v1390, %v1389
        %v1394 = vpack.c.b16 %v1392, %v1391
        %v1398 = vsel %vm530, %v1364, 0
        %v1401 = vsel %vm530, %v1365, 0
        %v1404 = vsel %vm530, %v1366, 0
        %v1407 = vsel %vm530, %v1367, 0
        %v1410 = vsel %vm530, %v1368, 0
        %v1413 = vsel %vm530, %v1369, 0
        %v1416 = vsel %vm530, %v1370, 0
        %v1419 = vsel %vm530, %v1371, 0
        %v1422 = vsel %vm530, %v1372, 0
        %v1425 = vsel %vm530, %v1373, 0
        %v1428 = vsel %vm530, %v1374, 0
        %v1431 = vsel %vm530, %v1375, 0
        %v1434 = vsel %vm530, %v1376, 0
        %v1437 = vsel %vm530, %v1377, 0
        %v1440 = vsel %vm530, %v1378, 0
        %v1443 = vsel %vm530, %v1379, 0
        %1445 = vmatprep.subr.bf16.mxu0 0
        %1446 = vmatpush1.bf16.msra.mxu0 0
        %1447 = vmatprep.subr.bf16.mxu0 0
        %1448 = vmatpush1.bf16.msra.mxu0 0
        %1449 = vmatprep.subr.bf16.mxu0 0
        %1450 = vmatpush1.bf16.msra.mxu0 0
        %1451 = vmatprep.subr.bf16.mxu0 0
        %1452 = vmatpush1.bf16.msra.mxu0 0
        %1453 = vmatprep.subr.bf16.mxu0 0
        %1454 = vmatpush1.bf16.msra.mxu0 0
        %1455 = vmatprep.subr.bf16.mxu0 0
        %1456 = vmatpush1.bf16.msra.mxu0 0
        %1457 = vmatprep.subr.bf16.mxu0 0
        %1458 = vmatpush1.bf16.msra.mxu0 %v1394
        %1459 = vmatprep.subr.bf16.mxu0 0
        %1460 = vmatpush1.bf16.msra.mxu0 %v1393
        %1461 = vmatprep.subr.bf16.mxu0 0
        %1462 = vmatpush2.bf16.msra.mxu0 0
        %1463 = vmatprep.subr.bf16.mxu0 0
        %1464 = vmatpush2.bf16.msra.mxu0 0
        %1465 = vmatprep.subr.bf16.mxu0 0
        %1466 = vmatpush2.bf16.msra.mxu0 0
        %1467 = vmatprep.subr.bf16.mxu0 0
        %1468 = vmatpush2.bf16.msra.mxu0 0
        %1469 = vmatprep.subr.bf16.mxu0 0
        %1470 = vmatpush2.bf16.msra.mxu0 0
        %1471 = vmatprep.subr.bf16.mxu0 0
        %1472 = vmatpush2.bf16.msra.mxu0 0
        %1473 = vmatprep.subr.bf16.mxu0 0
        %1474 = vmatpush2.bf16.msra.mxu0 0
        %1475 = vmatprep.subr.bf16.mxu0 0
        %1476 = vmatpush2.bf16.msra.mxu0 0
        %1477 = vmatprep.mubr.bf16.mxu0 0
        %1478 = vmatmul.mubr.bf16.gmra.mxu0 %v1398
        %v1479 = vpop.f32.mrf.mxu0
        %v1480 = vadd.f32 0.0, %v1479
        %v1481 = vpop.f32.mrf.mxu0
        %v1482 = vpop.f32.mrf.mxu0
        %v1483 = vadd.f32 0.0, %v1482
        %v1484 = vpop.f32.mrf.mxu0
        %1485 = vmatprep.mubr.bf16.mxu0 0
        %1486 = vmatmul.mubr.bf16.gmra.mxu0 %v1401
        %v1487 = vpop.f32.mrf.mxu0
        %v1488 = vadd.f32 0.0, %v1487
        %v1489 = vpop.f32.mrf.mxu0
        %v1490 = vpop.f32.mrf.mxu0
        %v1491 = vadd.f32 0.0, %v1490
        %v1492 = vpop.f32.mrf.mxu0
        %1493 = vmatprep.mubr.bf16.mxu0 0
        %1494 = vmatmul.mubr.bf16.gmra.mxu0 %v1404
        %v1495 = vpop.f32.mrf.mxu0
        %v1496 = vadd.f32 0.0, %v1495
        %v1497 = vpop.f32.mrf.mxu0
        %v1498 = vpop.f32.mrf.mxu0
        %v1499 = vadd.f32 0.0, %v1498
        %v1500 = vpop.f32.mrf.mxu0
        %1501 = vmatprep.mubr.bf16.mxu0 0
        %1502 = vmatmul.mubr.bf16.gmra.mxu0 %v1407
        %v1503 = vpop.f32.mrf.mxu0
        %v1504 = vadd.f32 0.0, %v1503
        %v1505 = vpop.f32.mrf.mxu0
        %v1506 = vpop.f32.mrf.mxu0
        %v1507 = vadd.f32 0.0, %v1506
        %v1508 = vpop.f32.mrf.mxu0
        %1509 = vmatprep.mubr.bf16.mxu0 0
        %1510 = vmatmul.mubr.bf16.gmra.mxu0 %v1410
        %v1511 = vpop.f32.mrf.mxu0
        %v1512 = vadd.f32 0.0, %v1511
        %v1513 = vpop.f32.mrf.mxu0
        %v1514 = vpop.f32.mrf.mxu0
        %v1515 = vadd.f32 0.0, %v1514
        %v1516 = vpop.f32.mrf.mxu0
        %1517 = vmatprep.mubr.bf16.mxu0 0
        %1518 = vmatmul.mubr.bf16.gmra.mxu0 %v1413
        %v1519 = vpop.f32.mrf.mxu0
        %v1520 = vadd.f32 0.0, %v1519
        %v1521 = vpop.f32.mrf.mxu0
        %v1522 = vpop.f32.mrf.mxu0
        %v1523 = vadd.f32 0.0, %v1522
        %v1524 = vpop.f32.mrf.mxu0
        %1525 = vmatprep.mubr.bf16.mxu0 0
        %1526 = vmatmul.mubr.bf16.gmra.mxu0 %v1416
        %v1527 = vpop.f32.mrf.mxu0
        %v1528 = vadd.f32 0.0, %v1527
        %v1529 = vpop.f32.mrf.mxu0
        %v1530 = vpop.f32.mrf.mxu0
        %v1531 = vadd.f32 0.0, %v1530
        %v1532 = vpop.f32.mrf.mxu0
        %1533 = vmatprep.mubr.bf16.mxu0 0
        %1534 = vmatmul.mubr.bf16.gmra.mxu0 %v1419
        %v1535 = vpop.f32.mrf.mxu0
        %v1536 = vadd.f32 0.0, %v1535
        %v1537 = vpop.f32.mrf.mxu0
        %v1538 = vpop.f32.mrf.mxu0
        %v1539 = vadd.f32 0.0, %v1538
        %v1540 = vpop.f32.mrf.mxu0
        %1541 = vmatprep.mubr.bf16.mxu0 0
        %1542 = vmatmul.mubr.bf16.gmra.mxu0 %v1422
        %v1543 = vpop.f32.mrf.mxu0
        %v1544 = vadd.f32 0.0, %v1543
        %v1545 = vpop.f32.mrf.mxu0
        %v1546 = vpop.f32.mrf.mxu0
        %v1547 = vadd.f32 0.0, %v1546
        %v1548 = vpop.f32.mrf.mxu0
        %1549 = vmatprep.mubr.bf16.mxu0 0
        %1550 = vmatmul.mubr.bf16.gmra.mxu0 %v1425
        %v1551 = vpop.f32.mrf.mxu0
        %v1552 = vadd.f32 0.0, %v1551
        %v1553 = vpop.f32.mrf.mxu0
        %v1554 = vpop.f32.mrf.mxu0
        %v1555 = vadd.f32 0.0, %v1554
        %v1556 = vpop.f32.mrf.mxu0
        %1557 = vmatprep.mubr.bf16.mxu0 0
        %1558 = vmatmul.mubr.bf16.gmra.mxu0 %v1428
        %v1559 = vpop.f32.mrf.mxu0
        %v1560 = vadd.f32 0.0, %v1559
        %v1561 = vpop.f32.mrf.mxu0
        %v1562 = vpop.f32.mrf.mxu0
        %v1563 = vadd.f32 0.0, %v1562
        %v1564 = vpop.f32.mrf.mxu0
        %1565 = vmatprep.mubr.bf16.mxu0 0
        %1566 = vmatmul.mubr.bf16.gmra.mxu0 %v1431
        %v1567 = vpop.f32.mrf.mxu0
        %v1568 = vadd.f32 0.0, %v1567
        %v1569 = vpop.f32.mrf.mxu0
        %v1570 = vpop.f32.mrf.mxu0
        %v1571 = vadd.f32 0.0, %v1570
        %v1572 = vpop.f32.mrf.mxu0
        %1573 = vmatprep.mubr.bf16.mxu0 0
        %1574 = vmatmul.mubr.bf16.gmra.mxu0 %v1434
        %v1575 = vpop.f32.mrf.mxu0
        %v1576 = vadd.f32 0.0, %v1575
        %v1577 = vpop.f32.mrf.mxu0
        %v1578 = vpop.f32.mrf.mxu0
        %v1579 = vadd.f32 0.0, %v1578
        %v1580 = vpop.f32.mrf.mxu0
        %1581 = vmatprep.mubr.bf16.mxu0 0
        %1582 = vmatmul.mubr.bf16.gmra.mxu0 %v1437
        %v1583 = vpop.f32.mrf.mxu0
        %v1584 = vadd.f32 0.0, %v1583
        %v1585 = vpop.f32.mrf.mxu0
        %v1586 = vpop.f32.mrf.mxu0
        %v1587 = vadd.f32 0.0, %v1586
        %v1588 = vpop.f32.mrf.mxu0
        %1589 = vmatprep.mubr.bf16.mxu0 0
        %1590 = vmatmul.mubr.bf16.gmra.mxu0 %v1440
        %v1591 = vpop.f32.mrf.mxu0
        %v1592 = vadd.f32 0.0, %v1591
        %v1593 = vpop.f32.mrf.mxu0
        %v1594 = vpop.f32.mrf.mxu0
        %v1595 = vadd.f32 0.0, %v1594
        %v1596 = vpop.f32.mrf.mxu0
        %1597 = vmatprep.mubr.bf16.mxu0 0
        %1598 = vmatmul.mubr.bf16.gmra.mxu0 %v1443
        %v1599 = vpop.f32.mrf.mxu0
        %v1600 = vadd.f32 0.0, %v1599
        %v1601 = vpop.f32.mrf.mxu0
        %v1602 = vpop.f32.mrf.mxu0
        %v1603 = vadd.f32 0.0, %v1602
        %v1604 = vpop.f32.mrf.mxu0
        %1605 = vdwg.mxu0
        %v1606 = vadd.f32 %v1332, %v1480
        %v1607 = vadd.f32 %v1333, %v1483
        %v1608 = vadd.f32 %v1334, %v1488
        %v1609 = vadd.f32 %v1335, %v1491
        %v1610 = vadd.f32 %v1336, %v1496
        %v1611 = vadd.f32 %v1337, %v1499
        %v1612 = vadd.f32 %v1338, %v1504
        %v1613 = vadd.f32 %v1339, %v1507
        %v1614 = vadd.f32 %v1340, %v1512
        %v1615 = vadd.f32 %v1341, %v1515
        %v1616 = vadd.f32 %v1342, %v1520
        %v1617 = vadd.f32 %v1343, %v1523
        %v1618 = vadd.f32 %v1344, %v1528
        %v1619 = vadd.f32 %v1345, %v1531
        %v1620 = vadd.f32 %v1346, %v1536
        %v1621 = vadd.f32 %v1347, %v1539
        %v1622 = vadd.f32 %v1348, %v1544
        %v1623 = vadd.f32 %v1349, %v1547
        %v1624 = vadd.f32 %v1350, %v1552
        %v1625 = vadd.f32 %v1351, %v1555
        %v1626 = vadd.f32 %v1352, %v1560
        %v1627 = vadd.f32 %v1353, %v1563
        %v1628 = vadd.f32 %v1354, %v1568
        %v1629 = vadd.f32 %v1355, %v1571
        %v1630 = vadd.f32 %v1356, %v1576
        %v1631 = vadd.f32 %v1357, %v1579
        %v1632 = vadd.f32 %v1358, %v1584
        %v1633 = vadd.f32 %v1359, %v1587
        %v1634 = vadd.f32 %v1360, %v1592
        %v1635 = vadd.f32 %v1361, %v1595
        %v1636 = vadd.f32 %v1362, %v1600
        %v1637 = vadd.f32 %v1363, %v1603
        %v1638 = vpack.c.bf16 %v330, %v327
        %v1639 = vpack.c.bf16 %v336, %v333
        %v1640 = vpack.c.bf16 %v342, %v339
        %v1641 = vpack.c.bf16 %v348, %v345
        %v1642 = vpack.c.bf16 %v354, %v351
        %v1643 = vpack.c.bf16 %v360, %v357
        %v1644 = vpack.c.bf16 %v366, %v363
        %v1645 = vpack.c.bf16 %v372, %v369
        %v1646 = vpack.c.bf16 %v378, %v375
        %v1647 = vpack.c.bf16 %v384, %v381
        %v1648 = vpack.c.bf16 %v390, %v387
        %v1649 = vpack.c.bf16 %v396, %v393
        %v1650 = vpack.c.bf16 %v402, %v399
        %v1651 = vpack.c.bf16 %v408, %v405
        %v1652 = vpack.c.bf16 %v414, %v411
        %v1653 = vpack.c.bf16 %v420, %v417
        %s1654 = scalar_lea.vmem %s1, 64
        %v1655 = vld [vmem:[%s1654] sm:$0xf]
        %v1656 = vld [vmem:[%s1654 + $0x4] sm:$0xf]
        %v1657 = vld [vmem:[%s1654 + $0x8] sm:$0xf]
        %v1658 = vld [vmem:[%s1654 + $0xc] sm:$0xf]
        %v1663 = vunpack.c.l.b16 %v1655
        %v1664 = vunpack.c.l.b16 %v1656
        %v1665 = vunpack.c.l.b16 %v1657
        %v1666 = vunpack.c.l.b16 %v1658
        %v1667 = vpack.c.b16 %v1664, %v1663
        %v1668 = vpack.c.b16 %v1666, %v1665
        %v1672 = vsel %vm530, %v1638, 0
        %v1675 = vsel %vm530, %v1639, 0
        %v1678 = vsel %vm530, %v1640, 0
        %v1681 = vsel %vm530, %v1641, 0
        %v1684 = vsel %vm530, %v1642, 0
        %v1687 = vsel %vm530, %v1643, 0
        %v1690 = vsel %vm530, %v1644, 0
        %v1693 = vsel %vm530, %v1645, 0
        %v1696 = vsel %vm530, %v1646, 0
        %v1699 = vsel %vm530, %v1647, 0
        %v1702 = vsel %vm530, %v1648, 0
        %v1705 = vsel %vm530, %v1649, 0
        %v1708 = vsel %vm530, %v1650, 0
        %v1711 = vsel %vm530, %v1651, 0
        %v1714 = vsel %vm530, %v1652, 0
        %v1717 = vsel %vm530, %v1653, 0
        %1719 = vmatprep.subr.bf16.mxu0 0
        %1720 = vmatpush1.bf16.msra.mxu0 0
        %1721 = vmatprep.subr.bf16.mxu0 0
        %1722 = vmatpush1.bf16.msra.mxu0 0
        %1723 = vmatprep.subr.bf16.mxu0 0
        %1724 = vmatpush1.bf16.msra.mxu0 0
        %1725 = vmatprep.subr.bf16.mxu0 0
        %1726 = vmatpush1.bf16.msra.mxu0 0
        %1727 = vmatprep.subr.bf16.mxu0 0
        %1728 = vmatpush1.bf16.msra.mxu0 0
        %1729 = vmatprep.subr.bf16.mxu0 0
        %1730 = vmatpush1.bf16.msra.mxu0 0
        %1731 = vmatprep.subr.bf16.mxu0 0
        %1732 = vmatpush1.bf16.msra.mxu0 %v1668
        %1733 = vmatprep.subr.bf16.mxu0 0
        %1734 = vmatpush1.bf16.msra.mxu0 %v1667
        %1735 = vmatprep.subr.bf16.mxu0 0
        %1736 = vmatpush2.bf16.msra.mxu0 0
        %1737 = vmatprep.subr.bf16.mxu0 0
        %1738 = vmatpush2.bf16.msra.mxu0 0
        %1739 = vmatprep.subr.bf16.mxu0 0
        %1740 = vmatpush2.bf16.msra.mxu0 0
        %1741 = vmatprep.subr.bf16.mxu0 0
        %1742 = vmatpush2.bf16.msra.mxu0 0
        %1743 = vmatprep.subr.bf16.mxu0 0
        %1744 = vmatpush2.bf16.msra.mxu0 0
        %1745 = vmatprep.subr.bf16.mxu0 0
        %1746 = vmatpush2.bf16.msra.mxu0 0
        %1747 = vmatprep.subr.bf16.mxu0 0
        %1748 = vmatpush2.bf16.msra.mxu0 0
        %1749 = vmatprep.subr.bf16.mxu0 0
        %1750 = vmatpush2.bf16.msra.mxu0 0
        %1751 = vmatprep.mubr.bf16.mxu0 0
        %1752 = vmatmul.mubr.bf16.gmra.mxu0 %v1672
        %v1753 = vpop.f32.mrf.mxu0
        %v1754 = vadd.f32 0.0, %v1753
        %v1755 = vpop.f32.mrf.mxu0
        %v1756 = vpop.f32.mrf.mxu0
        %v1757 = vadd.f32 0.0, %v1756
        %v1758 = vpop.f32.mrf.mxu0
        %1759 = vmatprep.mubr.bf16.mxu0 0
        %1760 = vmatmul.mubr.bf16.gmra.mxu0 %v1675
        %v1761 = vpop.f32.mrf.mxu0
        %v1762 = vadd.f32 0.0, %v1761
        %v1763 = vpop.f32.mrf.mxu0
        %v1764 = vpop.f32.mrf.mxu0
        %v1765 = vadd.f32 0.0, %v1764
        %v1766 = vpop.f32.mrf.mxu0
        %1767 = vmatprep.mubr.bf16.mxu0 0
        %1768 = vmatmul.mubr.bf16.gmra.mxu0 %v1678
        %v1769 = vpop.f32.mrf.mxu0
        %v1770 = vadd.f32 0.0, %v1769
        %v1771 = vpop.f32.mrf.mxu0
        %v1772 = vpop.f32.mrf.mxu0
        %v1773 = vadd.f32 0.0, %v1772
        %v1774 = vpop.f32.mrf.mxu0
        %1775 = vmatprep.mubr.bf16.mxu0 0
        %1776 = vmatmul.mubr.bf16.gmra.mxu0 %v1681
        %v1777 = vpop.f32.mrf.mxu0
        %v1778 = vadd.f32 0.0, %v1777
        %v1779 = vpop.f32.mrf.mxu0
        %v1780 = vpop.f32.mrf.mxu0
        %v1781 = vadd.f32 0.0, %v1780
        %v1782 = vpop.f32.mrf.mxu0
        %1783 = vmatprep.mubr.bf16.mxu0 0
        %1784 = vmatmul.mubr.bf16.gmra.mxu0 %v1684
        %v1785 = vpop.f32.mrf.mxu0
        %v1786 = vadd.f32 0.0, %v1785
        %v1787 = vpop.f32.mrf.mxu0
        %v1788 = vpop.f32.mrf.mxu0
        %v1789 = vadd.f32 0.0, %v1788
        %v1790 = vpop.f32.mrf.mxu0
        %1791 = vmatprep.mubr.bf16.mxu0 0
        %1792 = vmatmul.mubr.bf16.gmra.mxu0 %v1687
        %v1793 = vpop.f32.mrf.mxu0
        %v1794 = vadd.f32 0.0, %v1793
        %v1795 = vpop.f32.mrf.mxu0
        %v1796 = vpop.f32.mrf.mxu0
        %v1797 = vadd.f32 0.0, %v1796
        %v1798 = vpop.f32.mrf.mxu0
        %1799 = vmatprep.mubr.bf16.mxu0 0
        %1800 = vmatmul.mubr.bf16.gmra.mxu0 %v1690
        %v1801 = vpop.f32.mrf.mxu0
        %v1802 = vadd.f32 0.0, %v1801
        %v1803 = vpop.f32.mrf.mxu0
        %v1804 = vpop.f32.mrf.mxu0
        %v1805 = vadd.f32 0.0, %v1804
        %v1806 = vpop.f32.mrf.mxu0
        %1807 = vmatprep.mubr.bf16.mxu0 0
        %1808 = vmatmul.mubr.bf16.gmra.mxu0 %v1693
        %v1809 = vpop.f32.mrf.mxu0
        %v1810 = vadd.f32 0.0, %v1809
        %v1811 = vpop.f32.mrf.mxu0
        %v1812 = vpop.f32.mrf.mxu0
        %v1813 = vadd.f32 0.0, %v1812
        %v1814 = vpop.f32.mrf.mxu0
        %1815 = vmatprep.mubr.bf16.mxu0 0
        %1816 = vmatmul.mubr.bf16.gmra.mxu0 %v1696
        %v1817 = vpop.f32.mrf.mxu0
        %v1818 = vadd.f32 0.0, %v1817
        %v1819 = vpop.f32.mrf.mxu0
        %v1820 = vpop.f32.mrf.mxu0
        %v1821 = vadd.f32 0.0, %v1820
        %v1822 = vpop.f32.mrf.mxu0
        %1823 = vmatprep.mubr.bf16.mxu0 0
        %1824 = vmatmul.mubr.bf16.gmra.mxu0 %v1699
        %v1825 = vpop.f32.mrf.mxu0
        %v1826 = vadd.f32 0.0, %v1825
        %v1827 = vpop.f32.mrf.mxu0
        %v1828 = vpop.f32.mrf.mxu0
        %v1829 = vadd.f32 0.0, %v1828
        %v1830 = vpop.f32.mrf.mxu0
        %1831 = vmatprep.mubr.bf16.mxu0 0
        %1832 = vmatmul.mubr.bf16.gmra.mxu0 %v1702
        %v1833 = vpop.f32.mrf.mxu0
        %v1834 = vadd.f32 0.0, %v1833
        %v1835 = vpop.f32.mrf.mxu0
        %v1836 = vpop.f32.mrf.mxu0
        %v1837 = vadd.f32 0.0, %v1836
        %v1838 = vpop.f32.mrf.mxu0
        %1839 = vmatprep.mubr.bf16.mxu0 0
        %1840 = vmatmul.mubr.bf16.gmra.mxu0 %v1705
        %v1841 = vpop.f32.mrf.mxu0
        %v1842 = vadd.f32 0.0, %v1841
        %v1843 = vpop.f32.mrf.mxu0
        %v1844 = vpop.f32.mrf.mxu0
        %v1845 = vadd.f32 0.0, %v1844
        %v1846 = vpop.f32.mrf.mxu0
        %1847 = vmatprep.mubr.bf16.mxu0 0
        %1848 = vmatmul.mubr.bf16.gmra.mxu0 %v1708
        %v1849 = vpop.f32.mrf.mxu0
        %v1850 = vadd.f32 0.0, %v1849
        %v1851 = vpop.f32.mrf.mxu0
        %v1852 = vpop.f32.mrf.mxu0
        %v1853 = vadd.f32 0.0, %v1852
        %v1854 = vpop.f32.mrf.mxu0
        %1855 = vmatprep.mubr.bf16.mxu0 0
        %1856 = vmatmul.mubr.bf16.gmra.mxu0 %v1711
        %v1857 = vpop.f32.mrf.mxu0
        %v1858 = vadd.f32 0.0, %v1857
        %v1859 = vpop.f32.mrf.mxu0
        %v1860 = vpop.f32.mrf.mxu0
        %v1861 = vadd.f32 0.0, %v1860
        %v1862 = vpop.f32.mrf.mxu0
        %1863 = vmatprep.mubr.bf16.mxu0 0
        %1864 = vmatmul.mubr.bf16.gmra.mxu0 %v1714
        %v1865 = vpop.f32.mrf.mxu0
        %v1866 = vadd.f32 0.0, %v1865
        %v1867 = vpop.f32.mrf.mxu0
        %v1868 = vpop.f32.mrf.mxu0
        %v1869 = vadd.f32 0.0, %v1868
        %v1870 = vpop.f32.mrf.mxu0
        %1871 = vmatprep.mubr.bf16.mxu0 0
        %1872 = vmatmul.mubr.bf16.gmra.mxu0 %v1717
        %v1873 = vpop.f32.mrf.mxu0
        %v1874 = vadd.f32 0.0, %v1873
        %v1875 = vpop.f32.mrf.mxu0
        %v1876 = vpop.f32.mrf.mxu0
        %v1877 = vadd.f32 0.0, %v1876
        %v1878 = vpop.f32.mrf.mxu0
        %1879 = vdwg.mxu0
        %v1880 = vadd.f32 %v1606, %v1754
        %v1881 = vadd.f32 %v1607, %v1757
        %v1882 = vadd.f32 %v1608, %v1762
        %v1883 = vadd.f32 %v1609, %v1765
        %v1884 = vadd.f32 %v1610, %v1770
        %v1885 = vadd.f32 %v1611, %v1773
        %v1886 = vadd.f32 %v1612, %v1778
        %v1887 = vadd.f32 %v1613, %v1781
        %v1888 = vadd.f32 %v1614, %v1786
        %v1889 = vadd.f32 %v1615, %v1789
        %v1890 = vadd.f32 %v1616, %v1794
        %v1891 = vadd.f32 %v1617, %v1797
        %v1892 = vadd.f32 %v1618, %v1802
        %v1893 = vadd.f32 %v1619, %v1805
        %v1894 = vadd.f32 %v1620, %v1810
        %v1895 = vadd.f32 %v1621, %v1813
        %v1896 = vadd.f32 %v1622, %v1818
        %v1897 = vadd.f32 %v1623, %v1821
        %v1898 = vadd.f32 %v1624, %v1826
        %v1899 = vadd.f32 %v1625, %v1829
        %v1900 = vadd.f32 %v1626, %v1834
        %v1901 = vadd.f32 %v1627, %v1837
        %v1902 = vadd.f32 %v1628, %v1842
        %v1903 = vadd.f32 %v1629, %v1845
        %v1904 = vadd.f32 %v1630, %v1850
        %v1905 = vadd.f32 %v1631, %v1853
        %v1906 = vadd.f32 %v1632, %v1858
        %v1907 = vadd.f32 %v1633, %v1861
        %v1908 = vadd.f32 %v1634, %v1866
        %v1909 = vadd.f32 %v1635, %v1869
        %v1910 = vadd.f32 %v1636, %v1874
        %v1911 = vadd.f32 %v1637, %v1877
        %v1912 = vrot.slane %v196, 2
        %v1913 = vrot.slane %v197, 2
        %v1914 = vsel %vm961, %v1912, %v1913
        %v1915 = vrot.slane %v216, 2
        %v1916 = vrot.slane %v217, 2
        %v1917 = vsel %vm961, %v1915, %v1916
        %v1918 = vrot.slane %v236, 2
        %v1919 = vrot.slane %v237, 2
        %v1920 = vsel %vm961, %v1918, %v1919
        %v1921 = vrot.slane %v256, 2
        %v1922 = vrot.slane %v257, 2
        %v1923 = vsel %vm961, %v1921, %v1922
        %v1928 = vpack.c.bf16 %v970, %v967
        %v1929 = vpack.c.bf16 %v976, %v973
        %v1930 = vpack.c.bf16 %v982, %v979
        %v1931 = vpack.c.bf16 %v1914, %v985
        %v1932 = vpack.c.bf16 %v994, %v991
        %v1933 = vpack.c.bf16 %v1000, %v997
        %v1934 = vpack.c.bf16 %v1006, %v1003
        %v1935 = vpack.c.bf16 %v1917, %v1009
        %v1936 = vpack.c.bf16 %v1018, %v1015
        %v1937 = vpack.c.bf16 %v1024, %v1021
        %v1938 = vpack.c.bf16 %v1030, %v1027
        %v1939 = vpack.c.bf16 %v1920, %v1033
        %v1940 = vpack.c.bf16 %v1042, %v1039
        %v1941 = vpack.c.bf16 %v1048, %v1045
        %v1942 = vpack.c.bf16 %v1054, %v1051
        %v1943 = vpack.c.bf16 %v1923, %v1057
        %s1944 = scalar_lea.vmem %s1, 80
        %v1945 = vld [vmem:[%s1944] sm:$0xf]
        %v1946 = vld [vmem:[%s1944 + $0x4] sm:$0xf]
        %v1947 = vld [vmem:[%s1944 + $0x8] sm:$0xf]
        %v1948 = vld [vmem:[%s1944 + $0xc] sm:$0xf]
        %v1953 = vunpack.c.l.b16 %v1945
        %v1954 = vunpack.c.l.b16 %v1946
        %v1955 = vunpack.c.l.b16 %v1947
        %v1956 = vunpack.c.l.b16 %v1948
        %v1957 = vpack.c.b16 %v1954, %v1953
        %v1958 = vpack.c.b16 %v1956, %v1955
        %v1962 = vsel %vm530, %v1928, 0
        %v1965 = vsel %vm530, %v1929, 0
        %v1968 = vsel %vm530, %v1930, 0
        %v1971 = vsel %vm530, %v1931, 0
        %v1974 = vsel %vm530, %v1932, 0
        %v1977 = vsel %vm530, %v1933, 0
        %v1980 = vsel %vm530, %v1934, 0
        %v1983 = vsel %vm530, %v1935, 0
        %v1986 = vsel %vm530, %v1936, 0
        %v1989 = vsel %vm530, %v1937, 0
        %v1992 = vsel %vm530, %v1938, 0
        %v1995 = vsel %vm530, %v1939, 0
        %v1998 = vsel %vm530, %v1940, 0
        %v2001 = vsel %vm530, %v1941, 0
        %v2004 = vsel %vm530, %v1942, 0
        %v2007 = vsel %vm530, %v1943, 0
        %2009 = vmatprep.subr.bf16.mxu0 0
        %2010 = vmatpush1.bf16.msra.mxu0 0
        %2011 = vmatprep.subr.bf16.mxu0 0
        %2012 = vmatpush1.bf16.msra.mxu0 0
        %2013 = vmatprep.subr.bf16.mxu0 0
        %2014 = vmatpush1.bf16.msra.mxu0 0
        %2015 = vmatprep.subr.bf16.mxu0 0
        %2016 = vmatpush1.bf16.msra.mxu0 0
        %2017 = vmatprep.subr.bf16.mxu0 0
        %2018 = vmatpush1.bf16.msra.mxu0 0
        %2019 = vmatprep.subr.bf16.mxu0 0
        %2020 = vmatpush1.bf16.msra.mxu0 0
        %2021 = vmatprep.subr.bf16.mxu0 0
        %2022 = vmatpush1.bf16.msra.mxu0 %v1958
        %2023 = vmatprep.subr.bf16.mxu0 0
        %2024 = vmatpush1.bf16.msra.mxu0 %v1957
        %2025 = vmatprep.subr.bf16.mxu0 0
        %2026 = vmatpush2.bf16.msra.mxu0 0
        %2027 = vmatprep.subr.bf16.mxu0 0
        %2028 = vmatpush2.bf16.msra.mxu0 0
        %2029 = vmatprep.subr.bf16.mxu0 0
        %2030 = vmatpush2.bf16.msra.mxu0 0
        %2031 = vmatprep.subr.bf16.mxu0 0
        %2032 = vmatpush2.bf16.msra.mxu0 0
        %2033 = vmatprep.subr.bf16.mxu0 0
        %2034 = vmatpush2.bf16.msra.mxu0 0
        %2035 = vmatprep.subr.bf16.mxu0 0
        %2036 = vmatpush2.bf16.msra.mxu0 0
        %2037 = vmatprep.subr.bf16.mxu0 0
        %2038 = vmatpush2.bf16.msra.mxu0 0
        %2039 = vmatprep.subr.bf16.mxu0 0
        %2040 = vmatpush2.bf16.msra.mxu0 0
        %2041 = vmatprep.mubr.bf16.mxu0 0
        %2042 = vmatmul.mubr.bf16.gmra.mxu0 %v1962
        %v2043 = vpop.f32.mrf.mxu0
        %v2044 = vadd.f32 0.0, %v2043
        %v2045 = vpop.f32.mrf.mxu0
        %v2046 = vpop.f32.mrf.mxu0
        %v2047 = vadd.f32 0.0, %v2046
        %v2048 = vpop.f32.mrf.mxu0
        %2049 = vmatprep.mubr.bf16.mxu0 0
        %2050 = vmatmul.mubr.bf16.gmra.mxu0 %v1965
        %v2051 = vpop.f32.mrf.mxu0
        %v2052 = vadd.f32 0.0, %v2051
        %v2053 = vpop.f32.mrf.mxu0
        %v2054 = vpop.f32.mrf.mxu0
        %v2055 = vadd.f32 0.0, %v2054
        %v2056 = vpop.f32.mrf.mxu0
        %2057 = vmatprep.mubr.bf16.mxu0 0
        %2058 = vmatmul.mubr.bf16.gmra.mxu0 %v1968
        %v2059 = vpop.f32.mrf.mxu0
        %v2060 = vadd.f32 0.0, %v2059
        %v2061 = vpop.f32.mrf.mxu0
        %v2062 = vpop.f32.mrf.mxu0
        %v2063 = vadd.f32 0.0, %v2062
        %v2064 = vpop.f32.mrf.mxu0
        %2065 = vmatprep.mubr.bf16.mxu0 0
        %2066 = vmatmul.mubr.bf16.gmra.mxu0 %v1971
        %v2067 = vpop.f32.mrf.mxu0
        %v2068 = vadd.f32 0.0, %v2067
        %v2069 = vpop.f32.mrf.mxu0
        %v2070 = vpop.f32.mrf.mxu0
        %v2071 = vadd.f32 0.0, %v2070
        %v2072 = vpop.f32.mrf.mxu0
        %2073 = vmatprep.mubr.bf16.mxu0 0
        %2074 = vmatmul.mubr.bf16.gmra.mxu0 %v1974
        %v2075 = vpop.f32.mrf.mxu0
        %v2076 = vadd.f32 0.0, %v2075
        %v2077 = vpop.f32.mrf.mxu0
        %v2078 = vpop.f32.mrf.mxu0
        %v2079 = vadd.f32 0.0, %v2078
        %v2080 = vpop.f32.mrf.mxu0
        %2081 = vmatprep.mubr.bf16.mxu0 0
        %2082 = vmatmul.mubr.bf16.gmra.mxu0 %v1977
        %v2083 = vpop.f32.mrf.mxu0
        %v2084 = vadd.f32 0.0, %v2083
        %v2085 = vpop.f32.mrf.mxu0
        %v2086 = vpop.f32.mrf.mxu0
        %v2087 = vadd.f32 0.0, %v2086
        %v2088 = vpop.f32.mrf.mxu0
        %2089 = vmatprep.mubr.bf16.mxu0 0
        %2090 = vmatmul.mubr.bf16.gmra.mxu0 %v1980
        %v2091 = vpop.f32.mrf.mxu0
        %v2092 = vadd.f32 0.0, %v2091
        %v2093 = vpop.f32.mrf.mxu0
        %v2094 = vpop.f32.mrf.mxu0
        %v2095 = vadd.f32 0.0, %v2094
        %v2096 = vpop.f32.mrf.mxu0
        %2097 = vmatprep.mubr.bf16.mxu0 0
        %2098 = vmatmul.mubr.bf16.gmra.mxu0 %v1983
        %v2099 = vpop.f32.mrf.mxu0
        %v2100 = vadd.f32 0.0, %v2099
        %v2101 = vpop.f32.mrf.mxu0
        %v2102 = vpop.f32.mrf.mxu0
        %v2103 = vadd.f32 0.0, %v2102
        %v2104 = vpop.f32.mrf.mxu0
        %2105 = vmatprep.mubr.bf16.mxu0 0
        %2106 = vmatmul.mubr.bf16.gmra.mxu0 %v1986
        %v2107 = vpop.f32.mrf.mxu0
        %v2108 = vadd.f32 0.0, %v2107
        %v2109 = vpop.f32.mrf.mxu0
        %v2110 = vpop.f32.mrf.mxu0
        %v2111 = vadd.f32 0.0, %v2110
        %v2112 = vpop.f32.mrf.mxu0
        %2113 = vmatprep.mubr.bf16.mxu0 0
        %2114 = vmatmul.mubr.bf16.gmra.mxu0 %v1989
        %v2115 = vpop.f32.mrf.mxu0
        %v2116 = vadd.f32 0.0, %v2115
        %v2117 = vpop.f32.mrf.mxu0
        %v2118 = vpop.f32.mrf.mxu0
        %v2119 = vadd.f32 0.0, %v2118
        %v2120 = vpop.f32.mrf.mxu0
        %2121 = vmatprep.mubr.bf16.mxu0 0
        %2122 = vmatmul.mubr.bf16.gmra.mxu0 %v1992
        %v2123 = vpop.f32.mrf.mxu0
        %v2124 = vadd.f32 0.0, %v2123
        %v2125 = vpop.f32.mrf.mxu0
        %v2126 = vpop.f32.mrf.mxu0
        %v2127 = vadd.f32 0.0, %v2126
        %v2128 = vpop.f32.mrf.mxu0
        %2129 = vmatprep.mubr.bf16.mxu0 0
        %2130 = vmatmul.mubr.bf16.gmra.mxu0 %v1995
        %v2131 = vpop.f32.mrf.mxu0
        %v2132 = vadd.f32 0.0, %v2131
        %v2133 = vpop.f32.mrf.mxu0
        %v2134 = vpop.f32.mrf.mxu0
        %v2135 = vadd.f32 0.0, %v2134
        %v2136 = vpop.f32.mrf.mxu0
        %2137 = vmatprep.mubr.bf16.mxu0 0
        %2138 = vmatmul.mubr.bf16.gmra.mxu0 %v1998
        %v2139 = vpop.f32.mrf.mxu0
        %v2140 = vadd.f32 0.0, %v2139
        %v2141 = vpop.f32.mrf.mxu0
        %v2142 = vpop.f32.mrf.mxu0
        %v2143 = vadd.f32 0.0, %v2142
        %v2144 = vpop.f32.mrf.mxu0
        %2145 = vmatprep.mubr.bf16.mxu0 0
        %2146 = vmatmul.mubr.bf16.gmra.mxu0 %v2001
        %v2147 = vpop.f32.mrf.mxu0
        %v2148 = vadd.f32 0.0, %v2147
        %v2149 = vpop.f32.mrf.mxu0
        %v2150 = vpop.f32.mrf.mxu0
        %v2151 = vadd.f32 0.0, %v2150
        %v2152 = vpop.f32.mrf.mxu0
        %2153 = vmatprep.mubr.bf16.mxu0 0
        %2154 = vmatmul.mubr.bf16.gmra.mxu0 %v2004
        %v2155 = vpop.f32.mrf.mxu0
        %v2156 = vadd.f32 0.0, %v2155
        %v2157 = vpop.f32.mrf.mxu0
        %v2158 = vpop.f32.mrf.mxu0
        %v2159 = vadd.f32 0.0, %v2158
        %v2160 = vpop.f32.mrf.mxu0
        %2161 = vmatprep.mubr.bf16.mxu0 0
        %2162 = vmatmul.mubr.bf16.gmra.mxu0 %v2007
        %v2163 = vpop.f32.mrf.mxu0
        %v2164 = vadd.f32 0.0, %v2163
        %v2165 = vpop.f32.mrf.mxu0
        %v2166 = vpop.f32.mrf.mxu0
        %v2167 = vadd.f32 0.0, %v2166
        %v2168 = vpop.f32.mrf.mxu0
        %2169 = vdwg.mxu0
        %v2170 = vadd.f32 %v1880, %v2044
        %v2171 = vadd.f32 %v1881, %v2047
        %v2172 = vadd.f32 %v1882, %v2052
        %v2173 = vadd.f32 %v1883, %v2055
        %v2174 = vadd.f32 %v1884, %v2060
        %v2175 = vadd.f32 %v1885, %v2063
        %v2176 = vadd.f32 %v1886, %v2068
        %v2177 = vadd.f32 %v1887, %v2071
        %v2178 = vadd.f32 %v1888, %v2076
        %v2179 = vadd.f32 %v1889, %v2079
        %v2180 = vadd.f32 %v1890, %v2084
        %v2181 = vadd.f32 %v1891, %v2087
        %v2182 = vadd.f32 %v1892, %v2092
        %v2183 = vadd.f32 %v1893, %v2095
        %v2184 = vadd.f32 %v1894, %v2100
        %v2185 = vadd.f32 %v1895, %v2103
        %v2186 = vadd.f32 %v1896, %v2108
        %v2187 = vadd.f32 %v1897, %v2111
        %v2188 = vadd.f32 %v1898, %v2116
        %v2189 = vadd.f32 %v1899, %v2119
        %v2190 = vadd.f32 %v1900, %v2124
        %v2191 = vadd.f32 %v1901, %v2127
        %v2192 = vadd.f32 %v1902, %v2132
        %v2193 = vadd.f32 %v1903, %v2135
        %v2194 = vadd.f32 %v1904, %v2140
        %v2195 = vadd.f32 %v1905, %v2143
        %v2196 = vadd.f32 %v1906, %v2148
        %v2197 = vadd.f32 %v1907, %v2151
        %v2198 = vadd.f32 %v1908, %v2156
        %v2199 = vadd.f32 %v1909, %v2159
        %v2200 = vadd.f32 %v1910, %v2164
        %v2201 = vadd.f32 %v1911, %v2167
        %v2202 = vpack.c.bf16 %v198, %v196
        %v2203 = vpack.c.bf16 %v218, %v216
        %v2204 = vpack.c.bf16 %v238, %v236
        %v2205 = vpack.c.bf16 %v258, %v256
        %s2206 = scalar_lea.vmem %s1, 96
        %v2207 = vld [vmem:[%s2206] sm:$0xf]
        %v2208 = vld [vmem:[%s2206 + $0x4] sm:$0xf]
        %v2209 = vld [vmem:[%s2206 + $0x8] sm:$0xf]
        %v2210 = vld [vmem:[%s2206 + $0xc] sm:$0xf]
        %v2215 = vunpack.c.l.b16 %v2207
        %v2216 = vunpack.c.l.b16 %v2208
        %v2217 = vunpack.c.l.b16 %v2209
        %v2218 = vunpack.c.l.b16 %v2210
        %v2219 = vpack.c.b16 %v2216, %v2215
        %v2220 = vpack.c.b16 %v2218, %v2217
        %v2224 = vsel %vm530, %v2202, 0
        %v2227 = vsel %vm530, %v2203, 0
        %v2230 = vsel %vm530, %v2204, 0
        %v2233 = vsel %vm530, %v2205, 0
        %2235 = vmatprep.subr.bf16.mxu0 0
        %2236 = vmatpush1.bf16.msra.mxu0 0
        %2237 = vmatprep.subr.bf16.mxu0 0
        %2238 = vmatpush1.bf16.msra.mxu0 0
        %2239 = vmatprep.subr.bf16.mxu0 0
        %2240 = vmatpush1.bf16.msra.mxu0 0
        %2241 = vmatprep.subr.bf16.mxu0 0
        %2242 = vmatpush1.bf16.msra.mxu0 0
        %2243 = vmatprep.subr.bf16.mxu0 0
        %2244 = vmatpush1.bf16.msra.mxu0 0
        %2245 = vmatprep.subr.bf16.mxu0 0
        %2246 = vmatpush1.bf16.msra.mxu0 0
        %2247 = vmatprep.subr.bf16.mxu0 0
        %2248 = vmatpush1.bf16.msra.mxu0 %v2220
        %2249 = vmatprep.subr.bf16.mxu0 0
        %2250 = vmatpush1.bf16.msra.mxu0 %v2219
        %2251 = vmatprep.subr.bf16.mxu0 0
        %2252 = vmatpush2.bf16.msra.mxu0 0
        %2253 = vmatprep.subr.bf16.mxu0 0
        %2254 = vmatpush2.bf16.msra.mxu0 0
        %2255 = vmatprep.subr.bf16.mxu0 0
        %2256 = vmatpush2.bf16.msra.mxu0 0
        %2257 = vmatprep.subr.bf16.mxu0 0
        %2258 = vmatpush2.bf16.msra.mxu0 0
        %2259 = vmatprep.subr.bf16.mxu0 0
        %2260 = vmatpush2.bf16.msra.mxu0 0
        %2261 = vmatprep.subr.bf16.mxu0 0
        %2262 = vmatpush2.bf16.msra.mxu0 0
        %2263 = vmatprep.subr.bf16.mxu0 0
        %2264 = vmatpush2.bf16.msra.mxu0 0
        %2265 = vmatprep.subr.bf16.mxu0 0
        %2266 = vmatpush2.bf16.msra.mxu0 0
        %2267 = vmatprep.mubr.bf16.mxu0 0
        %2268 = vmatmul.mubr.bf16.gmra.mxu0 %v756
        %v2269 = vpop.f32.mrf.mxu0
        %v2270 = vadd.f32 0.0, %v2269
        %v2271 = vpop.f32.mrf.mxu0
        %v2272 = vpop.f32.mrf.mxu0
        %v2273 = vadd.f32 0.0, %v2272
        %v2274 = vpop.f32.mrf.mxu0
        %2275 = vmatprep.mubr.bf16.mxu0 0
        %2276 = vmatmul.mubr.bf16.gmra.mxu0 %v759
        %v2277 = vpop.f32.mrf.mxu0
        %v2278 = vadd.f32 0.0, %v2277
        %v2279 = vpop.f32.mrf.mxu0
        %v2280 = vpop.f32.mrf.mxu0
        %v2281 = vadd.f32 0.0, %v2280
        %v2282 = vpop.f32.mrf.mxu0
        %2283 = vmatprep.mubr.bf16.mxu0 0
        %2284 = vmatmul.mubr.bf16.gmra.mxu0 %v762
        %v2285 = vpop.f32.mrf.mxu0
        %v2286 = vadd.f32 0.0, %v2285
        %v2287 = vpop.f32.mrf.mxu0
        %v2288 = vpop.f32.mrf.mxu0
        %v2289 = vadd.f32 0.0, %v2288
        %v2290 = vpop.f32.mrf.mxu0
        %2291 = vmatprep.mubr.bf16.mxu0 0
        %2292 = vmatmul.mubr.bf16.gmra.mxu0 %v2224
        %v2293 = vpop.f32.mrf.mxu0
        %v2294 = vadd.f32 0.0, %v2293
        %v2295 = vpop.f32.mrf.mxu0
        %v2296 = vpop.f32.mrf.mxu0
        %v2297 = vadd.f32 0.0, %v2296
        %v2298 = vpop.f32.mrf.mxu0
        %2299 = vmatprep.mubr.bf16.mxu0 0
        %2300 = vmatmul.mubr.bf16.gmra.mxu0 %v768
        %v2301 = vpop.f32.mrf.mxu0
        %v2302 = vadd.f32 0.0, %v2301
        %v2303 = vpop.f32.mrf.mxu0
        %v2304 = vpop.f32.mrf.mxu0
        %v2305 = vadd.f32 0.0, %v2304
        %v2306 = vpop.f32.mrf.mxu0
        %2307 = vmatprep.mubr.bf16.mxu0 0
        %2308 = vmatmul.mubr.bf16.gmra.mxu0 %v771
        %v2309 = vpop.f32.mrf.mxu0
        %v2310 = vadd.f32 0.0, %v2309
        %v2311 = vpop.f32.mrf.mxu0
        %v2312 = vpop.f32.mrf.mxu0
        %v2313 = vadd.f32 0.0, %v2312
        %v2314 = vpop.f32.mrf.mxu0
        %2315 = vmatprep.mubr.bf16.mxu0 0
        %2316 = vmatmul.mubr.bf16.gmra.mxu0 %v774
        %v2317 = vpop.f32.mrf.mxu0
        %v2318 = vadd.f32 0.0, %v2317
        %v2319 = vpop.f32.mrf.mxu0
        %v2320 = vpop.f32.mrf.mxu0
        %v2321 = vadd.f32 0.0, %v2320
        %v2322 = vpop.f32.mrf.mxu0
        %2323 = vmatprep.mubr.bf16.mxu0 0
        %2324 = vmatmul.mubr.bf16.gmra.mxu0 %v2227
        %v2325 = vpop.f32.mrf.mxu0
        %v2326 = vadd.f32 0.0, %v2325
        %v2327 = vpop.f32.mrf.mxu0
        %v2328 = vpop.f32.mrf.mxu0
        %v2329 = vadd.f32 0.0, %v2328
        %v2330 = vpop.f32.mrf.mxu0
        %2331 = vmatprep.mubr.bf16.mxu0 0
        %2332 = vmatmul.mubr.bf16.gmra.mxu0 %v780
        %v2333 = vpop.f32.mrf.mxu0
        %v2334 = vadd.f32 0.0, %v2333
        %v2335 = vpop.f32.mrf.mxu0
        %v2336 = vpop.f32.mrf.mxu0
        %v2337 = vadd.f32 0.0, %v2336
        %v2338 = vpop.f32.mrf.mxu0
        %2339 = vmatprep.mubr.bf16.mxu0 0
        %2340 = vmatmul.mubr.bf16.gmra.mxu0 %v783
        %v2341 = vpop.f32.mrf.mxu0
        %v2342 = vadd.f32 0.0, %v2341
        %v2343 = vpop.f32.mrf.mxu0
        %v2344 = vpop.f32.mrf.mxu0
        %v2345 = vadd.f32 0.0, %v2344
        %v2346 = vpop.f32.mrf.mxu0
        %2347 = vmatprep.mubr.bf16.mxu0 0
        %2348 = vmatmul.mubr.bf16.gmra.mxu0 %v786
        %v2349 = vpop.f32.mrf.mxu0
        %v2350 = vadd.f32 0.0, %v2349
        %v2351 = vpop.f32.mrf.mxu0
        %v2352 = vpop.f32.mrf.mxu0
        %v2353 = vadd.f32 0.0, %v2352
        %v2354 = vpop.f32.mrf.mxu0
        %2355 = vmatprep.mubr.bf16.mxu0 0
        %2356 = vmatmul.mubr.bf16.gmra.mxu0 %v2230
        %v2357 = vpop.f32.mrf.mxu0
        %v2358 = vadd.f32 0.0, %v2357
        %v2359 = vpop.f32.mrf.mxu0
        %v2360 = vpop.f32.mrf.mxu0
        %v2361 = vadd.f32 0.0, %v2360
        %v2362 = vpop.f32.mrf.mxu0
        %2363 = vmatprep.mubr.bf16.mxu0 0
        %2364 = vmatmul.mubr.bf16.gmra.mxu0 %v792
        %v2365 = vpop.f32.mrf.mxu0
        %v2366 = vadd.f32 0.0, %v2365
        %v2367 = vpop.f32.mrf.mxu0
        %v2368 = vpop.f32.mrf.mxu0
        %v2369 = vadd.f32 0.0, %v2368
        %v2370 = vpop.f32.mrf.mxu0
        %2371 = vmatprep.mubr.bf16.mxu0 0
        %2372 = vmatmul.mubr.bf16.gmra.mxu0 %v795
        %v2373 = vpop.f32.mrf.mxu0
        %v2374 = vadd.f32 0.0, %v2373
        %v2375 = vpop.f32.mrf.mxu0
        %v2376 = vpop.f32.mrf.mxu0
        %v2377 = vadd.f32 0.0, %v2376
        %v2378 = vpop.f32.mrf.mxu0
        %2379 = vmatprep.mubr.bf16.mxu0 0
        %2380 = vmatmul.mubr.bf16.gmra.mxu0 %v798
        %v2381 = vpop.f32.mrf.mxu0
        %v2382 = vadd.f32 0.0, %v2381
        %v2383 = vpop.f32.mrf.mxu0
        %v2384 = vpop.f32.mrf.mxu0
        %v2385 = vadd.f32 0.0, %v2384
        %v2386 = vpop.f32.mrf.mxu0
        %2387 = vmatprep.mubr.bf16.mxu0 0
        %2388 = vmatmul.mubr.bf16.gmra.mxu0 %v2233
        %v2389 = vpop.f32.mrf.mxu0
        %v2390 = vadd.f32 0.0, %v2389
        %v2391 = vpop.f32.mrf.mxu0
        %v2392 = vpop.f32.mrf.mxu0
        %v2393 = vadd.f32 0.0, %v2392
        %v2394 = vpop.f32.mrf.mxu0
        %2395 = vdwg.mxu0
        %v2396 = vadd.f32 %v2170, %v2270
        %v2397 = vadd.f32 %v2171, %v2273
        %v2398 = vadd.f32 %v2172, %v2278
        %v2399 = vadd.f32 %v2173, %v2281
        %v2400 = vadd.f32 %v2174, %v2286
        %v2401 = vadd.f32 %v2175, %v2289
        %v2402 = vadd.f32 %v2176, %v2294
        %v2403 = vadd.f32 %v2177, %v2297
        %v2404 = vadd.f32 %v2178, %v2302
        %v2405 = vadd.f32 %v2179, %v2305
        %v2406 = vadd.f32 %v2180, %v2310
        %v2407 = vadd.f32 %v2181, %v2313
        %v2408 = vadd.f32 %v2182, %v2318
        %v2409 = vadd.f32 %v2183, %v2321
        %v2410 = vadd.f32 %v2184, %v2326
        %v2411 = vadd.f32 %v2185, %v2329
        %v2412 = vadd.f32 %v2186, %v2334
        %v2413 = vadd.f32 %v2187, %v2337
        %v2414 = vadd.f32 %v2188, %v2342
        %v2415 = vadd.f32 %v2189, %v2345
        %v2416 = vadd.f32 %v2190, %v2350
        %v2417 = vadd.f32 %v2191, %v2353
        %v2418 = vadd.f32 %v2192, %v2358
        %v2419 = vadd.f32 %v2193, %v2361
        %v2420 = vadd.f32 %v2194, %v2366
        %v2421 = vadd.f32 %v2195, %v2369
        %v2422 = vadd.f32 %v2196, %v2374
        %v2423 = vadd.f32 %v2197, %v2377
        %v2424 = vadd.f32 %v2198, %v2382
        %v2425 = vadd.f32 %v2199, %v2385
        %v2426 = vadd.f32 %v2200, %v2390
        %v2427 = vadd.f32 %v2201, %v2393
        %v2436 = vrot.slane %v198, 1
        %v2437 = vrot.slane %v199, 1
        %v2438 = vsel %vm324, %v2436, %v2437
        %v2439 = vrot.slane %v218, 1
        %v2440 = vrot.slane %v219, 1
        %v2441 = vsel %vm324, %v2439, %v2440
        %v2442 = vrot.slane %v238, 1
        %v2443 = vrot.slane %v239, 1
        %v2444 = vsel %vm324, %v2442, %v2443
        %v2445 = vrot.slane %v258, 1
        %v2446 = vrot.slane %v259, 1
        %v2447 = vsel %vm324, %v2445, %v2446
        %v2452 = vpack.c.bf16 %v2438, %v348
        %v2453 = vpack.c.bf16 %v2441, %v372
        %v2454 = vpack.c.bf16 %v2444, %v396
        %v2455 = vpack.c.bf16 %v2447, %v420
        %s2456 = scalar_lea.vmem %s1, 112
        %v2457 = vld [vmem:[%s2456] sm:$0xf]
        %v2458 = vld [vmem:[%s2456 + $0x4] sm:$0xf]
        %v2459 = vld [vmem:[%s2456 + $0x8] sm:$0xf]
        %v2460 = vld [vmem:[%s2456 + $0xc] sm:$0xf]
        %v2465 = vunpack.c.l.b16 %v2457
        %v2466 = vunpack.c.l.b16 %v2458
        %v2467 = vunpack.c.l.b16 %v2459
        %v2468 = vunpack.c.l.b16 %v2460
        %v2469 = vpack.c.b16 %v2466, %v2465
        %v2470 = vpack.c.b16 %v2468, %v2467
        %v2474 = vsel %vm530, %v2452, 0
        %v2477 = vsel %vm530, %v2453, 0
        %v2480 = vsel %vm530, %v2454, 0
        %v2483 = vsel %vm530, %v2455, 0
        %2485 = vmatprep.subr.bf16.mxu0 0
        %2486 = vmatpush1.bf16.msra.mxu0 0
        %2487 = vmatprep.subr.bf16.mxu0 0
        %2488 = vmatpush1.bf16.msra.mxu0 0
        %2489 = vmatprep.subr.bf16.mxu0 0
        %2490 = vmatpush1.bf16.msra.mxu0 0
        %2491 = vmatprep.subr.bf16.mxu0 0
        %2492 = vmatpush1.bf16.msra.mxu0 0
        %2493 = vmatprep.subr.bf16.mxu0 0
        %2494 = vmatpush1.bf16.msra.mxu0 0
        %2495 = vmatprep.subr.bf16.mxu0 0
        %2496 = vmatpush1.bf16.msra.mxu0 0
        %2497 = vmatprep.subr.bf16.mxu0 0
        %2498 = vmatpush1.bf16.msra.mxu0 %v2470
        %2499 = vmatprep.subr.bf16.mxu0 0
        %2500 = vmatpush1.bf16.msra.mxu0 %v2469
        %2501 = vmatprep.subr.bf16.mxu0 0
        %2502 = vmatpush2.bf16.msra.mxu0 0
        %2503 = vmatprep.subr.bf16.mxu0 0
        %2504 = vmatpush2.bf16.msra.mxu0 0
        %2505 = vmatprep.subr.bf16.mxu0 0
        %2506 = vmatpush2.bf16.msra.mxu0 0
        %2507 = vmatprep.subr.bf16.mxu0 0
        %2508 = vmatpush2.bf16.msra.mxu0 0
        %2509 = vmatprep.subr.bf16.mxu0 0
        %2510 = vmatpush2.bf16.msra.mxu0 0
        %2511 = vmatprep.subr.bf16.mxu0 0
        %2512 = vmatpush2.bf16.msra.mxu0 0
        %2513 = vmatprep.subr.bf16.mxu0 0
        %2514 = vmatpush2.bf16.msra.mxu0 0
        %2515 = vmatprep.subr.bf16.mxu0 0
        %2516 = vmatpush2.bf16.msra.mxu0 0
        %2517 = vmatprep.mubr.bf16.mxu0 0
        %2518 = vmatmul.mubr.bf16.gmra.mxu0 %v535
        %v2519 = vpop.f32.mrf.mxu0
        %v2520 = vadd.f32 0.0, %v2519
        %v2521 = vpop.f32.mrf.mxu0
        %v2522 = vpop.f32.mrf.mxu0
        %v2523 = vadd.f32 0.0, %v2522
        %v2524 = vpop.f32.mrf.mxu0
        %2525 = vmatprep.mubr.bf16.mxu0 0
        %2526 = vmatmul.mubr.bf16.gmra.mxu0 %v538
        %v2527 = vpop.f32.mrf.mxu0
        %v2528 = vadd.f32 0.0, %v2527
        %v2529 = vpop.f32.mrf.mxu0
        %v2530 = vpop.f32.mrf.mxu0
        %v2531 = vadd.f32 0.0, %v2530
        %v2532 = vpop.f32.mrf.mxu0
        %2533 = vmatprep.mubr.bf16.mxu0 0
        %2534 = vmatmul.mubr.bf16.gmra.mxu0 %v541
        %v2535 = vpop.f32.mrf.mxu0
        %v2536 = vadd.f32 0.0, %v2535
        %v2537 = vpop.f32.mrf.mxu0
        %v2538 = vpop.f32.mrf.mxu0
        %v2539 = vadd.f32 0.0, %v2538
        %v2540 = vpop.f32.mrf.mxu0
        %2541 = vmatprep.mubr.bf16.mxu0 0
        %2542 = vmatmul.mubr.bf16.gmra.mxu0 %v2474
        %v2543 = vpop.f32.mrf.mxu0
        %v2544 = vadd.f32 0.0, %v2543
        %v2545 = vpop.f32.mrf.mxu0
        %v2546 = vpop.f32.mrf.mxu0
        %v2547 = vadd.f32 0.0, %v2546
        %v2548 = vpop.f32.mrf.mxu0
        %2549 = vmatprep.mubr.bf16.mxu0 0
        %2550 = vmatmul.mubr.bf16.gmra.mxu0 %v547
        %v2551 = vpop.f32.mrf.mxu0
        %v2552 = vadd.f32 0.0, %v2551
        %v2553 = vpop.f32.mrf.mxu0
        %v2554 = vpop.f32.mrf.mxu0
        %v2555 = vadd.f32 0.0, %v2554
        %v2556 = vpop.f32.mrf.mxu0
        %2557 = vmatprep.mubr.bf16.mxu0 0
        %2558 = vmatmul.mubr.bf16.gmra.mxu0 %v550
        %v2559 = vpop.f32.mrf.mxu0
        %v2560 = vadd.f32 0.0, %v2559
        %v2561 = vpop.f32.mrf.mxu0
        %v2562 = vpop.f32.mrf.mxu0
        %v2563 = vadd.f32 0.0, %v2562
        %v2564 = vpop.f32.mrf.mxu0
        %2565 = vmatprep.mubr.bf16.mxu0 0
        %2566 = vmatmul.mubr.bf16.gmra.mxu0 %v553
        %v2567 = vpop.f32.mrf.mxu0
        %v2568 = vadd.f32 0.0, %v2567
        %v2569 = vpop.f32.mrf.mxu0
        %v2570 = vpop.f32.mrf.mxu0
        %v2571 = vadd.f32 0.0, %v2570
        %v2572 = vpop.f32.mrf.mxu0
        %2573 = vmatprep.mubr.bf16.mxu0 0
        %2574 = vmatmul.mubr.bf16.gmra.mxu0 %v2477
        %v2575 = vpop.f32.mrf.mxu0
        %v2576 = vadd.f32 0.0, %v2575
        %v2577 = vpop.f32.mrf.mxu0
        %v2578 = vpop.f32.mrf.mxu0
        %v2579 = vadd.f32 0.0, %v2578
        %v2580 = vpop.f32.mrf.mxu0
        %2581 = vmatprep.mubr.bf16.mxu0 0
        %2582 = vmatmul.mubr.bf16.gmra.mxu0 %v559
        %v2583 = vpop.f32.mrf.mxu0
        %v2584 = vadd.f32 0.0, %v2583
        %v2585 = vpop.f32.mrf.mxu0
        %v2586 = vpop.f32.mrf.mxu0
        %v2587 = vadd.f32 0.0, %v2586
        %v2588 = vpop.f32.mrf.mxu0
        %2589 = vmatprep.mubr.bf16.mxu0 0
        %2590 = vmatmul.mubr.bf16.gmra.mxu0 %v562
        %v2591 = vpop.f32.mrf.mxu0
        %v2592 = vadd.f32 0.0, %v2591
        %v2593 = vpop.f32.mrf.mxu0
        %v2594 = vpop.f32.mrf.mxu0
        %v2595 = vadd.f32 0.0, %v2594
        %v2596 = vpop.f32.mrf.mxu0
        %2597 = vmatprep.mubr.bf16.mxu0 0
        %2598 = vmatmul.mubr.bf16.gmra.mxu0 %v565
        %v2599 = vpop.f32.mrf.mxu0
        %v2600 = vadd.f32 0.0, %v2599
        %v2601 = vpop.f32.mrf.mxu0
        %v2602 = vpop.f32.mrf.mxu0
        %v2603 = vadd.f32 0.0, %v2602
        %v2604 = vpop.f32.mrf.mxu0
        %2605 = vmatprep.mubr.bf16.mxu0 0
        %2606 = vmatmul.mubr.bf16.gmra.mxu0 %v2480
        %v2607 = vpop.f32.mrf.mxu0
        %v2608 = vadd.f32 0.0, %v2607
        %v2609 = vpop.f32.mrf.mxu0
        %v2610 = vpop.f32.mrf.mxu0
        %v2611 = vadd.f32 0.0, %v2610
        %v2612 = vpop.f32.mrf.mxu0
        %2613 = vmatprep.mubr.bf16.mxu0 0
        %2614 = vmatmul.mubr.bf16.gmra.mxu0 %v571
        %v2615 = vpop.f32.mrf.mxu0
        %v2616 = vadd.f32 0.0, %v2615
        %v2617 = vpop.f32.mrf.mxu0
        %v2618 = vpop.f32.mrf.mxu0
        %v2619 = vadd.f32 0.0, %v2618
        %v2620 = vpop.f32.mrf.mxu0
        %2621 = vmatprep.mubr.bf16.mxu0 0
        %2622 = vmatmul.mubr.bf16.gmra.mxu0 %v574
        %v2623 = vpop.f32.mrf.mxu0
        %v2624 = vadd.f32 0.0, %v2623
        %v2625 = vpop.f32.mrf.mxu0
        %v2626 = vpop.f32.mrf.mxu0
        %v2627 = vadd.f32 0.0, %v2626
        %v2628 = vpop.f32.mrf.mxu0
        %2629 = vmatprep.mubr.bf16.mxu0 0
        %2630 = vmatmul.mubr.bf16.gmra.mxu0 %v577
        %v2631 = vpop.f32.mrf.mxu0
        %v2632 = vadd.f32 0.0, %v2631
        %v2633 = vpop.f32.mrf.mxu0
        %v2634 = vpop.f32.mrf.mxu0
        %v2635 = vadd.f32 0.0, %v2634
        %v2636 = vpop.f32.mrf.mxu0
        %2637 = vmatprep.mubr.bf16.mxu0 0
        %2638 = vmatmul.mubr.bf16.gmra.mxu0 %v2483
        %v2639 = vpop.f32.mrf.mxu0
        %v2640 = vadd.f32 0.0, %v2639
        %v2641 = vpop.f32.mrf.mxu0
        %v2642 = vpop.f32.mrf.mxu0
        %v2643 = vadd.f32 0.0, %v2642
        %v2644 = vpop.f32.mrf.mxu0
        %2645 = vdwg.mxu0
        %v2646 = vadd.f32 %v2396, %v2520
        %v2647 = vadd.f32 %v2397, %v2523
        %v2648 = vadd.f32 %v2398, %v2528
        %v2649 = vadd.f32 %v2399, %v2531
        %v2650 = vadd.f32 %v2400, %v2536
        %v2651 = vadd.f32 %v2401, %v2539
        %v2652 = vadd.f32 %v2402, %v2544
        %v2653 = vadd.f32 %v2403, %v2547
        %v2654 = vadd.f32 %v2404, %v2552
        %v2655 = vadd.f32 %v2405, %v2555
        %v2656 = vadd.f32 %v2406, %v2560
        %v2657 = vadd.f32 %v2407, %v2563
        %v2658 = vadd.f32 %v2408, %v2568
        %v2659 = vadd.f32 %v2409, %v2571
        %v2660 = vadd.f32 %v2410, %v2576
        %v2661 = vadd.f32 %v2411, %v2579
        %v2662 = vadd.f32 %v2412, %v2584
        %v2663 = vadd.f32 %v2413, %v2587
        %v2664 = vadd.f32 %v2414, %v2592
        %v2665 = vadd.f32 %v2415, %v2595
        %v2666 = vadd.f32 %v2416, %v2600
        %v2667 = vadd.f32 %v2417, %v2603
        %v2668 = vadd.f32 %v2418, %v2608
        %v2669 = vadd.f32 %v2419, %v2611
        %v2670 = vadd.f32 %v2420, %v2616
        %v2671 = vadd.f32 %v2421, %v2619
        %v2672 = vadd.f32 %v2422, %v2624
        %v2673 = vadd.f32 %v2423, %v2627
        %v2674 = vadd.f32 %v2424, %v2632
        %v2675 = vadd.f32 %v2425, %v2635
        %v2676 = vadd.f32 %v2426, %v2640
        %v2677 = vadd.f32 %v2427, %v2643
        %v2678 = vrot.slane %v198, 2
        %v2679 = vrot.slane %v199, 2
        %v2680 = vsel %vm961, %v2678, %v2679
        %v2681 = vrot.slane %v218, 2
        %v2682 = vrot.slane %v219, 2
        %v2683 = vsel %vm961, %v2681, %v2682
        %v2684 = vrot.slane %v238, 2
        %v2685 = vrot.slane %v239, 2
        %v2686 = vsel %vm961, %v2684, %v2685
        %v2687 = vrot.slane %v258, 2
        %v2688 = vrot.slane %v259, 2
        %v2689 = vsel %vm961, %v2687, %v2688
        %v2694 = vpack.c.bf16 %v2680, %v1914
        %v2695 = vpack.c.bf16 %v2683, %v1917
        %v2696 = vpack.c.bf16 %v2686, %v1920
        %v2697 = vpack.c.bf16 %v2689, %v1923
        %s2698 = scalar_lea.vmem %s1, 128
        %v2699 = vld [vmem:[%s2698] sm:$0xf]
        %v2700 = vld [vmem:[%s2698 + $0x4] sm:$0xf]
        %v2701 = vld [vmem:[%s2698 + $0x8] sm:$0xf]
        %v2702 = vld [vmem:[%s2698 + $0xc] sm:$0xf]
        %v2707 = vunpack.c.l.b16 %v2699
        %v2708 = vunpack.c.l.b16 %v2700
        %v2709 = vunpack.c.l.b16 %v2701
        %v2710 = vunpack.c.l.b16 %v2702
        %v2711 = vpack.c.b16 %v2708, %v2707
        %v2712 = vpack.c.b16 %v2710, %v2709
        %v2716 = vsel %vm530, %v2694, 0
        %v2719 = vsel %vm530, %v2695, 0
        %v2722 = vsel %vm530, %v2696, 0
        %v2725 = vsel %vm530, %v2697, 0
        %2727 = vmatprep.subr.bf16.mxu0 0
        %2728 = vmatpush1.bf16.msra.mxu0 0
        %2729 = vmatprep.subr.bf16.mxu0 0
        %2730 = vmatpush1.bf16.msra.mxu0 0
        %2731 = vmatprep.subr.bf16.mxu0 0
        %2732 = vmatpush1.bf16.msra.mxu0 0
        %2733 = vmatprep.subr.bf16.mxu0 0
        %2734 = vmatpush1.bf16.msra.mxu0 0
        %2735 = vmatprep.subr.bf16.mxu0 0
        %2736 = vmatpush1.bf16.msra.mxu0 0
        %2737 = vmatprep.subr.bf16.mxu0 0
        %2738 = vmatpush1.bf16.msra.mxu0 0
        %2739 = vmatprep.subr.bf16.mxu0 0
        %2740 = vmatpush1.bf16.msra.mxu0 %v2712
        %2741 = vmatprep.subr.bf16.mxu0 0
        %2742 = vmatpush1.bf16.msra.mxu0 %v2711
        %2743 = vmatprep.subr.bf16.mxu0 0
        %2744 = vmatpush2.bf16.msra.mxu0 0
        %2745 = vmatprep.subr.bf16.mxu0 0
        %2746 = vmatpush2.bf16.msra.mxu0 0
        %2747 = vmatprep.subr.bf16.mxu0 0
        %2748 = vmatpush2.bf16.msra.mxu0 0
        %2749 = vmatprep.subr.bf16.mxu0 0
        %2750 = vmatpush2.bf16.msra.mxu0 0
        %2751 = vmatprep.subr.bf16.mxu0 0
        %2752 = vmatpush2.bf16.msra.mxu0 0
        %2753 = vmatprep.subr.bf16.mxu0 0
        %2754 = vmatpush2.bf16.msra.mxu0 0
        %2755 = vmatprep.subr.bf16.mxu0 0
        %2756 = vmatpush2.bf16.msra.mxu0 0
        %2757 = vmatprep.subr.bf16.mxu0 0
        %2758 = vmatpush2.bf16.msra.mxu0 0
        %2759 = vmatprep.mubr.bf16.mxu0 0
        %2760 = vmatmul.mubr.bf16.gmra.mxu0 %v1127
        %v2761 = vpop.f32.mrf.mxu0
        %v2762 = vadd.f32 0.0, %v2761
        %v2763 = vpop.f32.mrf.mxu0
        %v2764 = vpop.f32.mrf.mxu0
        %v2765 = vadd.f32 0.0, %v2764
        %v2766 = vpop.f32.mrf.mxu0
        %2767 = vmatprep.mubr.bf16.mxu0 0
        %2768 = vmatmul.mubr.bf16.gmra.mxu0 %v1130
        %v2769 = vpop.f32.mrf.mxu0
        %v2770 = vadd.f32 0.0, %v2769
        %v2771 = vpop.f32.mrf.mxu0
        %v2772 = vpop.f32.mrf.mxu0
        %v2773 = vadd.f32 0.0, %v2772
        %v2774 = vpop.f32.mrf.mxu0
        %2775 = vmatprep.mubr.bf16.mxu0 0
        %2776 = vmatmul.mubr.bf16.gmra.mxu0 %v1133
        %v2777 = vpop.f32.mrf.mxu0
        %v2778 = vadd.f32 0.0, %v2777
        %v2779 = vpop.f32.mrf.mxu0
        %v2780 = vpop.f32.mrf.mxu0
        %v2781 = vadd.f32 0.0, %v2780
        %v2782 = vpop.f32.mrf.mxu0
        %2783 = vmatprep.mubr.bf16.mxu0 0
        %2784 = vmatmul.mubr.bf16.gmra.mxu0 %v2716
        %v2785 = vpop.f32.mrf.mxu0
        %v2786 = vadd.f32 0.0, %v2785
        %v2787 = vpop.f32.mrf.mxu0
        %v2788 = vpop.f32.mrf.mxu0
        %v2789 = vadd.f32 0.0, %v2788
        %v2790 = vpop.f32.mrf.mxu0
        %2791 = vmatprep.mubr.bf16.mxu0 0
        %2792 = vmatmul.mubr.bf16.gmra.mxu0 %v1139
        %v2793 = vpop.f32.mrf.mxu0
        %v2794 = vadd.f32 0.0, %v2793
        %v2795 = vpop.f32.mrf.mxu0
        %v2796 = vpop.f32.mrf.mxu0
        %v2797 = vadd.f32 0.0, %v2796
        %v2798 = vpop.f32.mrf.mxu0
        %2799 = vmatprep.mubr.bf16.mxu0 0
        %2800 = vmatmul.mubr.bf16.gmra.mxu0 %v1142
        %v2801 = vpop.f32.mrf.mxu0
        %v2802 = vadd.f32 0.0, %v2801
        %v2803 = vpop.f32.mrf.mxu0
        %v2804 = vpop.f32.mrf.mxu0
        %v2805 = vadd.f32 0.0, %v2804
        %v2806 = vpop.f32.mrf.mxu0
        %2807 = vmatprep.mubr.bf16.mxu0 0
        %2808 = vmatmul.mubr.bf16.gmra.mxu0 %v1145
        %v2809 = vpop.f32.mrf.mxu0
        %v2810 = vadd.f32 0.0, %v2809
        %v2811 = vpop.f32.mrf.mxu0
        %v2812 = vpop.f32.mrf.mxu0
        %v2813 = vadd.f32 0.0, %v2812
        %v2814 = vpop.f32.mrf.mxu0
        %2815 = vmatprep.mubr.bf16.mxu0 0
        %2816 = vmatmul.mubr.bf16.gmra.mxu0 %v2719
        %v2817 = vpop.f32.mrf.mxu0
        %v2818 = vadd.f32 0.0, %v2817
        %v2819 = vpop.f32.mrf.mxu0
        %v2820 = vpop.f32.mrf.mxu0
        %v2821 = vadd.f32 0.0, %v2820
        %v2822 = vpop.f32.mrf.mxu0
        %2823 = vmatprep.mubr.bf16.mxu0 0
        %2824 = vmatmul.mubr.bf16.gmra.mxu0 %v1151
        %v2825 = vpop.f32.mrf.mxu0
        %v2826 = vadd.f32 0.0, %v2825
        %v2827 = vpop.f32.mrf.mxu0
        %v2828 = vpop.f32.mrf.mxu0
        %v2829 = vadd.f32 0.0, %v2828
        %v2830 = vpop.f32.mrf.mxu0
        %2831 = vmatprep.mubr.bf16.mxu0 0
        %2832 = vmatmul.mubr.bf16.gmra.mxu0 %v1154
        %v2833 = vpop.f32.mrf.mxu0
        %v2834 = vadd.f32 0.0, %v2833
        %v2835 = vpop.f32.mrf.mxu0
        %v2836 = vpop.f32.mrf.mxu0
        %v2837 = vadd.f32 0.0, %v2836
        %v2838 = vpop.f32.mrf.mxu0
        %2839 = vmatprep.mubr.bf16.mxu0 0
        %2840 = vmatmul.mubr.bf16.gmra.mxu0 %v1157
        %v2841 = vpop.f32.mrf.mxu0
        %v2842 = vadd.f32 0.0, %v2841
        %v2843 = vpop.f32.mrf.mxu0
        %v2844 = vpop.f32.mrf.mxu0
        %v2845 = vadd.f32 0.0, %v2844
        %v2846 = vpop.f32.mrf.mxu0
        %2847 = vmatprep.mubr.bf16.mxu0 0
        %2848 = vmatmul.mubr.bf16.gmra.mxu0 %v2722
        %v2849 = vpop.f32.mrf.mxu0
        %v2850 = vadd.f32 0.0, %v2849
        %v2851 = vpop.f32.mrf.mxu0
        %v2852 = vpop.f32.mrf.mxu0
        %v2853 = vadd.f32 0.0, %v2852
        %v2854 = vpop.f32.mrf.mxu0
        %2855 = vmatprep.mubr.bf16.mxu0 0
        %2856 = vmatmul.mubr.bf16.gmra.mxu0 %v1163
        %v2857 = vpop.f32.mrf.mxu0
        %v2858 = vadd.f32 0.0, %v2857
        %v2859 = vpop.f32.mrf.mxu0
        %v2860 = vpop.f32.mrf.mxu0
        %v2861 = vadd.f32 0.0, %v2860
        %v2862 = vpop.f32.mrf.mxu0
        %2863 = vmatprep.mubr.bf16.mxu0 0
        %2864 = vmatmul.mubr.bf16.gmra.mxu0 %v1166
        %v2865 = vpop.f32.mrf.mxu0
        %v2866 = vadd.f32 0.0, %v2865
        %v2867 = vpop.f32.mrf.mxu0
        %v2868 = vpop.f32.mrf.mxu0
        %v2869 = vadd.f32 0.0, %v2868
        %v2870 = vpop.f32.mrf.mxu0
        %2871 = vmatprep.mubr.bf16.mxu0 0
        %2872 = vmatmul.mubr.bf16.gmra.mxu0 %v1169
        %v2873 = vpop.f32.mrf.mxu0
        %v2874 = vadd.f32 0.0, %v2873
        %v2875 = vpop.f32.mrf.mxu0
        %v2876 = vpop.f32.mrf.mxu0
        %v2877 = vadd.f32 0.0, %v2876
        %v2878 = vpop.f32.mrf.mxu0
        %2879 = vmatprep.mubr.bf16.mxu0 0
        %2880 = vmatmul.mubr.bf16.gmra.mxu0 %v2725
        %v2881 = vpop.f32.mrf.mxu0
        %v2882 = vadd.f32 0.0, %v2881
        %v2883 = vpop.f32.mrf.mxu0
        %v2884 = vpop.f32.mrf.mxu0
        %v2885 = vadd.f32 0.0, %v2884
        %v2886 = vpop.f32.mrf.mxu0
        %2887 = vdwg.mxu0
        %v2888 = vadd.f32 %v2646, %v2762
        %v2889 = vadd.f32 %v2647, %v2765
        %v2890 = vadd.f32 %v2648, %v2770
        %v2891 = vadd.f32 %v2649, %v2773
        %v2892 = vadd.f32 %v2650, %v2778
        %v2893 = vadd.f32 %v2651, %v2781
        %v2894 = vadd.f32 %v2652, %v2786
        %v2895 = vadd.f32 %v2653, %v2789
        %v2896 = vadd.f32 %v2654, %v2794
        %v2897 = vadd.f32 %v2655, %v2797
        %v2898 = vadd.f32 %v2656, %v2802
        %v2899 = vadd.f32 %v2657, %v2805
        %v2900 = vadd.f32 %v2658, %v2810
        %v2901 = vadd.f32 %v2659, %v2813
        %v2902 = vadd.f32 %v2660, %v2818
        %v2903 = vadd.f32 %v2661, %v2821
        %v2904 = vadd.f32 %v2662, %v2826
        %v2905 = vadd.f32 %v2663, %v2829
        %v2906 = vadd.f32 %v2664, %v2834
        %v2907 = vadd.f32 %v2665, %v2837
        %v2908 = vadd.f32 %v2666, %v2842
        %v2909 = vadd.f32 %v2667, %v2845
        %v2910 = vadd.f32 %v2668, %v2850
        %v2911 = vadd.f32 %v2669, %v2853
        %v2912 = vadd.f32 %v2670, %v2858
        %v2913 = vadd.f32 %v2671, %v2861
        %v2914 = vadd.f32 %v2672, %v2866
        %v2915 = vadd.f32 %v2673, %v2869
        %v2916 = vadd.f32 %v2674, %v2874
        %v2917 = vadd.f32 %v2675, %v2877
        %v2918 = vadd.f32 %v2676, %v2882
        %v2919 = vadd.f32 %v2677, %v2885
        %v2920 = vlaneseq
        %v2921 = vshrl.u32 %v2920, 7
        %v2922 = vsub.s32 0, %v2921
        %v2923 = vrot.slane %v176, %v2922
        %v2924 = vmul.f32 %v2888, %v2923
        %v2925 = vmul.f32 %v2889, %v2923
        %v2926 = vmul.f32 %v2890, %v2923
        %v2927 = vmul.f32 %v2891, %v2923
        %v2928 = vmul.f32 %v2892, %v2923
        %v2929 = vmul.f32 %v2893, %v2923
        %v2930 = vmul.f32 %v2894, %v2923
        %v2931 = vmul.f32 %v2895, %v2923
        %v2932 = vmul.f32 %v2896, %v2923
        %v2933 = vmul.f32 %v2897, %v2923
        %v2934 = vmul.f32 %v2898, %v2923
        %v2935 = vmul.f32 %v2899, %v2923
        %v2936 = vmul.f32 %v2900, %v2923
        %v2937 = vmul.f32 %v2901, %v2923
        %v2938 = vmul.f32 %v2902, %v2923
        %v2939 = vmul.f32 %v2903, %v2923
        %v2940 = vmul.f32 %v2904, %v2923
        %v2941 = vmul.f32 %v2905, %v2923
        %v2942 = vmul.f32 %v2906, %v2923
        %v2943 = vmul.f32 %v2907, %v2923
        %v2944 = vmul.f32 %v2908, %v2923
        %v2945 = vmul.f32 %v2909, %v2923
        %v2946 = vmul.f32 %v2910, %v2923
        %v2947 = vmul.f32 %v2911, %v2923
        %v2948 = vmul.f32 %v2912, %v2923
        %v2949 = vmul.f32 %v2913, %v2923
        %v2950 = vmul.f32 %v2914, %v2923
        %v2951 = vmul.f32 %v2915, %v2923
        %v2952 = vmul.f32 %v2916, %v2923
        %v2953 = vmul.f32 %v2917, %v2923
        %v2954 = vmul.f32 %v2918, %v2923
        %v2955 = vmul.f32 %v2919, %v2923
        %v2956 = vlaneseq
        %v2957 = vshrl.u32 %v2956, 7
        %v2958 = vsub.s32 0, %v2957
        %v2959 = vrot.slane %v177, %v2958
        %v2960 = vadd.f32 %v2924, %v2959
        %v2961 = vadd.f32 %v2925, %v2959
        %v2962 = vadd.f32 %v2926, %v2959
        %v2963 = vadd.f32 %v2927, %v2959
        %v2964 = vadd.f32 %v2928, %v2959
        %v2965 = vadd.f32 %v2929, %v2959
        %v2966 = vadd.f32 %v2930, %v2959
        %v2967 = vadd.f32 %v2931, %v2959
        %v2968 = vadd.f32 %v2932, %v2959
        %v2969 = vadd.f32 %v2933, %v2959
        %v2970 = vadd.f32 %v2934, %v2959
        %v2971 = vadd.f32 %v2935, %v2959
        %v2972 = vadd.f32 %v2936, %v2959
        %v2973 = vadd.f32 %v2937, %v2959
        %v2974 = vadd.f32 %v2938, %v2959
        %v2975 = vadd.f32 %v2939, %v2959
        %v2976 = vadd.f32 %v2940, %v2959
        %v2977 = vadd.f32 %v2941, %v2959
        %v2978 = vadd.f32 %v2942, %v2959
        %v2979 = vadd.f32 %v2943, %v2959
        %v2980 = vadd.f32 %v2944, %v2959
        %v2981 = vadd.f32 %v2945, %v2959
        %v2982 = vadd.f32 %v2946, %v2959
        %v2983 = vadd.f32 %v2947, %v2959
        %v2984 = vadd.f32 %v2948, %v2959
        %v2985 = vadd.f32 %v2949, %v2959
        %v2986 = vadd.f32 %v2950, %v2959
        %v2987 = vadd.f32 %v2951, %v2959
        %v2988 = vadd.f32 %v2952, %v2959
        %v2989 = vadd.f32 %v2953, %v2959
        %v2990 = vadd.f32 %v2954, %v2959
        %v2991 = vadd.f32 %v2955, %v2959
        %v2992 = vmax.f32 %v2960, 0.0
        %v2993 = vmax.f32 %v2961, 0.0
        %v2994 = vmax.f32 %v2962, 0.0
        %v2995 = vmax.f32 %v2963, 0.0
        %v2996 = vmax.f32 %v2964, 0.0
        %v2997 = vmax.f32 %v2965, 0.0
        %v2998 = vmax.f32 %v2966, 0.0
        %v2999 = vmax.f32 %v2967, 0.0
        %v3000 = vmax.f32 %v2968, 0.0
        %v3001 = vmax.f32 %v2969, 0.0
        %v3002 = vmax.f32 %v2970, 0.0
        %v3003 = vmax.f32 %v2971, 0.0
        %v3004 = vmax.f32 %v2972, 0.0
        %v3005 = vmax.f32 %v2973, 0.0
        %v3006 = vmax.f32 %v2974, 0.0
        %v3007 = vmax.f32 %v2975, 0.0
        %v3008 = vmax.f32 %v2976, 0.0
        %v3009 = vmax.f32 %v2977, 0.0
        %v3010 = vmax.f32 %v2978, 0.0
        %v3011 = vmax.f32 %v2979, 0.0
        %v3012 = vmax.f32 %v2980, 0.0
        %v3013 = vmax.f32 %v2981, 0.0
        %v3014 = vmax.f32 %v2982, 0.0
        %v3015 = vmax.f32 %v2983, 0.0
        %v3016 = vmax.f32 %v2984, 0.0
        %v3017 = vmax.f32 %v2985, 0.0
        %v3018 = vmax.f32 %v2986, 0.0
        %v3019 = vmax.f32 %v2987, 0.0
        %v3020 = vmax.f32 %v2988, 0.0
        %v3021 = vmax.f32 %v2989, 0.0
        %v3022 = vmax.f32 %v2990, 0.0
        %v3023 = vmax.f32 %v2991, 0.0
        %3024 = vst.msk [vmem:[#allocation2] sm:$0xff] %vm530, 0.0
        %vm3025 = vcmask 254976
        %3026 = vst.msk [vmem:[#allocation2 + $0x8] sm:$0x3] %vm3025, 0.0
        %3027 = vst.msk [vmem:[#allocation2 + $0xa0] sm:$0xff] %vm530, 0.0
        %3028 = vst.msk [vmem:[#allocation2 + $0xa8] sm:$0x3] %vm3025, 0.0
        %3029 = vst.msk [vmem:[#allocation2 + $0x140] sm:$0xff] %vm530, 0.0
        %3030 = vst.msk [vmem:[#allocation2 + $0x148] sm:$0x3] %vm3025, 0.0
        %3031 = vst.msk [vmem:[#allocation2 + $0x1e0] sm:$0xff] %vm530, 0.0
        %3032 = vst.msk [vmem:[#allocation2 + $0x1e8] sm:$0x3] %vm3025, 0.0
        %s3033 = scalar_lea.vmem [#allocation2], 144
        %3034 = vst.msk [vmem:[%s3033] sm:$0xff] %vm530, 0.0
        %3035 = vst.msk [vmem:[%s3033 + $0x8] sm:$0x3] %vm3025, 0.0
        %3036 = vst.msk [vmem:[%s3033 + $0xa0] sm:$0xff] %vm530, 0.0
        %3037 = vst.msk [vmem:[%s3033 + $0xa8] sm:$0x3] %vm3025, 0.0
        %3038 = vst.msk [vmem:[%s3033 + $0x140] sm:$0xff] %vm530, 0.0
        %3039 = vst.msk [vmem:[%s3033 + $0x148] sm:$0x3] %vm3025, 0.0
        %3040 = vst.msk [vmem:[%s3033 + $0x1e0] sm:$0xff] %vm530, 0.0
        %3041 = vst.msk [vmem:[%s3033 + $0x1e8] sm:$0x3] %vm3025, 0.0
        %vm3042 = vcmask 253952
        %3043 = vst.msk [vmem:[#allocation2] sm:$0x1] %vm3042, 0.0
        %3044 = vst.msk [vmem:[#allocation2 + $0x10] sm:$0x1] %vm3042, 0.0
        %3045 = vst.msk [vmem:[#allocation2 + $0x20] sm:$0x1] %vm3042, 0.0
        %3046 = vst.msk [vmem:[#allocation2 + $0x30] sm:$0x1] %vm3042, 0.0
        %3047 = vst.msk [vmem:[#allocation2 + $0x40] sm:$0x1] %vm3042, 0.0
        %3048 = vst.msk [vmem:[#allocation2 + $0x50] sm:$0x1] %vm3042, 0.0
        %3049 = vst.msk [vmem:[#allocation2 + $0x60] sm:$0x1] %vm3042, 0.0
        %3050 = vst.msk [vmem:[#allocation2 + $0x70] sm:$0x1] %vm3042, 0.0
        %3051 = vst.msk [vmem:[#allocation2 + $0x80] sm:$0x1] %vm3042, 0.0
        %3052 = vst.msk [vmem:[#allocation2 + $0x90] sm:$0x1] %vm3042, 0.0
        %3053 = vst.msk [vmem:[#allocation2 + $0xa0] sm:$0x1] %vm3042, 0.0
        %3054 = vst.msk [vmem:[#allocation2 + $0xb0] sm:$0x1] %vm3042, 0.0
        %3055 = vst.msk [vmem:[#allocation2 + $0xc0] sm:$0x1] %vm3042, 0.0
        %3056 = vst.msk [vmem:[#allocation2 + $0xd0] sm:$0x1] %vm3042, 0.0
        %3057 = vst.msk [vmem:[#allocation2 + $0xe0] sm:$0x1] %vm3042, 0.0
        %3058 = vst.msk [vmem:[#allocation2 + $0xf0] sm:$0x1] %vm3042, 0.0
        %3059 = vst.msk [vmem:[#allocation2 + $0x100] sm:$0x1] %vm3042, 0.0
        %3060 = vst.msk [vmem:[#allocation2 + $0x110] sm:$0x1] %vm3042, 0.0
        %3061 = vst.msk [vmem:[#allocation2 + $0x120] sm:$0x1] %vm3042, 0.0
        %3062 = vst.msk [vmem:[#allocation2 + $0x130] sm:$0x1] %vm3042, 0.0
        %3063 = vst.msk [vmem:[#allocation2 + $0x140] sm:$0x1] %vm3042, 0.0
        %3064 = vst.msk [vmem:[#allocation2 + $0x150] sm:$0x1] %vm3042, 0.0
        %3065 = vst.msk [vmem:[#allocation2 + $0x160] sm:$0x1] %vm3042, 0.0
        %3066 = vst.msk [vmem:[#allocation2 + $0x170] sm:$0x1] %vm3042, 0.0
        %3067 = vst.msk [vmem:[#allocation2 + $0x180] sm:$0x1] %vm3042, 0.0
        %3068 = vst.msk [vmem:[#allocation2 + $0x190] sm:$0x1] %vm3042, 0.0
        %3069 = vst.msk [vmem:[#allocation2 + $0x1a0] sm:$0x1] %vm3042, 0.0
        %3070 = vst.msk [vmem:[#allocation2 + $0x1b0] sm:$0x1] %vm3042, 0.0
        %3071 = vst.msk [vmem:[#allocation2 + $0x1c0] sm:$0x1] %vm3042, 0.0
        %3072 = vst.msk [vmem:[#allocation2 + $0x1d0] sm:$0x1] %vm3042, 0.0
        %3073 = vst.msk [vmem:[#allocation2 + $0x1e0] sm:$0x1] %vm3042, 0.0
        %3074 = vst.msk [vmem:[#allocation2 + $0x1f0] sm:$0x1] %vm3042, 0.0
        %3075 = vst.msk [vmem:[#allocation2 + $0x200] sm:$0x1] %vm3042, 0.0
        %3076 = vst.msk [vmem:[#allocation2 + $0x210] sm:$0x1] %vm3042, 0.0
        %3077 = vst.msk [vmem:[#allocation2 + $0x220] sm:$0x1] %vm3042, 0.0
        %3078 = vst.msk [vmem:[#allocation2 + $0x230] sm:$0x1] %vm3042, 0.0
        %3079 = vst.msk [vmem:[#allocation2 + $0x240] sm:$0x1] %vm3042, 0.0
        %3080 = vst.msk [vmem:[#allocation2 + $0x250] sm:$0x1] %vm3042, 0.0
        %3081 = vst.msk [vmem:[#allocation2 + $0x260] sm:$0x1] %vm3042, 0.0
        %3082 = vst.msk [vmem:[#allocation2 + $0x270] sm:$0x1] %vm3042, 0.0
        %3083 = vst.msk [vmem:[#allocation2 + $0x9] sm:$0x1] %vm3042, 0.0
        %3084 = vst.msk [vmem:[#allocation2 + $0x19] sm:$0x1] %vm3042, 0.0
        %3085 = vst.msk [vmem:[#allocation2 + $0x29] sm:$0x1] %vm3042, 0.0
        %3086 = vst.msk [vmem:[#allocation2 + $0x39] sm:$0x1] %vm3042, 0.0
        %3087 = vst.msk [vmem:[#allocation2 + $0x49] sm:$0x1] %vm3042, 0.0
        %3088 = vst.msk [vmem:[#allocation2 + $0x59] sm:$0x1] %vm3042, 0.0
        %3089 = vst.msk [vmem:[#allocation2 + $0x69] sm:$0x1] %vm3042, 0.0
        %3090 = vst.msk [vmem:[#allocation2 + $0x79] sm:$0x1] %vm3042, 0.0
        %3091 = vst.msk [vmem:[#allocation2 + $0x89] sm:$0x1] %vm3042, 0.0
        %3092 = vst.msk [vmem:[#allocation2 + $0x99] sm:$0x1] %vm3042, 0.0
        %3093 = vst.msk [vmem:[#allocation2 + $0xa9] sm:$0x1] %vm3042, 0.0
        %3094 = vst.msk [vmem:[#allocation2 + $0xb9] sm:$0x1] %vm3042, 0.0
        %3095 = vst.msk [vmem:[#allocation2 + $0xc9] sm:$0x1] %vm3042, 0.0
        %3096 = vst.msk [vmem:[#allocation2 + $0xd9] sm:$0x1] %vm3042, 0.0
        %3097 = vst.msk [vmem:[#allocation2 + $0xe9] sm:$0x1] %vm3042, 0.0
        %3098 = vst.msk [vmem:[#allocation2 + $0xf9] sm:$0x1] %vm3042, 0.0
        %3099 = vst.msk [vmem:[#allocation2 + $0x109] sm:$0x1] %vm3042, 0.0
        %3100 = vst.msk [vmem:[#allocation2 + $0x119] sm:$0x1] %vm3042, 0.0
        %3101 = vst.msk [vmem:[#allocation2 + $0x129] sm:$0x1] %vm3042, 0.0
        %3102 = vst.msk [vmem:[#allocation2 + $0x139] sm:$0x1] %vm3042, 0.0
        %3103 = vst.msk [vmem:[#allocation2 + $0x149] sm:$0x1] %vm3042, 0.0
        %3104 = vst.msk [vmem:[#allocation2 + $0x159] sm:$0x1] %vm3042, 0.0
        %3105 = vst.msk [vmem:[#allocation2 + $0x169] sm:$0x1] %vm3042, 0.0
        %3106 = vst.msk [vmem:[#allocation2 + $0x179] sm:$0x1] %vm3042, 0.0
        %3107 = vst.msk [vmem:[#allocation2 + $0x189] sm:$0x1] %vm3042, 0.0
        %3108 = vst.msk [vmem:[#allocation2 + $0x199] sm:$0x1] %vm3042, 0.0
        %3109 = vst.msk [vmem:[#allocation2 + $0x1a9] sm:$0x1] %vm3042, 0.0
        %3110 = vst.msk [vmem:[#allocation2 + $0x1b9] sm:$0x1] %vm3042, 0.0
        %3111 = vst.msk [vmem:[#allocation2 + $0x1c9] sm:$0x1] %vm3042, 0.0
        %3112 = vst.msk [vmem:[#allocation2 + $0x1d9] sm:$0x1] %vm3042, 0.0
        %3113 = vst.msk [vmem:[#allocation2 + $0x1e9] sm:$0x1] %vm3042, 0.0
        %3114 = vst.msk [vmem:[#allocation2 + $0x1f9] sm:$0x1] %vm3042, 0.0
        %3115 = vst.msk [vmem:[#allocation2 + $0x209] sm:$0x1] %vm3042, 0.0
        %3116 = vst.msk [vmem:[#allocation2 + $0x219] sm:$0x1] %vm3042, 0.0
        %3117 = vst.msk [vmem:[#allocation2 + $0x229] sm:$0x1] %vm3042, 0.0
        %3118 = vst.msk [vmem:[#allocation2 + $0x239] sm:$0x1] %vm3042, 0.0
        %3119 = vst.msk [vmem:[#allocation2 + $0x249] sm:$0x1] %vm3042, 0.0
        %3120 = vst.msk [vmem:[#allocation2 + $0x259] sm:$0x1] %vm3042, 0.0
        %3121 = vst.msk [vmem:[#allocation2 + $0x269] sm:$0x1] %vm3042, 0.0
        %3122 = vst.msk [vmem:[#allocation2 + $0x279] sm:$0x1] %vm3042, 0.0
        %s3123 = scalar_lea.vmem [#allocation2], 16
        %3124 = vst.msk [vmem:[%s3123 + $0x1] sm:$0xff] %vm530, %v2992
        %3125 = vst.msk [vmem:[%s3123 + $0x11] sm:$0xff] %vm530, %v2993
        %3126 = vst.msk [vmem:[%s3123 + $0x21] sm:$0xff] %vm530, %v2994
        %3127 = vst.msk [vmem:[%s3123 + $0x31] sm:$0xff] %vm530, %v2995
        %3128 = vst.msk [vmem:[%s3123 + $0x41] sm:$0xff] %vm530, %v2996
        %3129 = vst.msk [vmem:[%s3123 + $0x51] sm:$0xff] %vm530, %v2997
        %3130 = vst.msk [vmem:[%s3123 + $0x61] sm:$0xff] %vm530, %v2998
        %3131 = vst.msk [vmem:[%s3123 + $0x71] sm:$0xff] %vm530, %v2999
        %3132 = vst.msk [vmem:[%s3123 + $0xa1] sm:$0xff] %vm530, %v3000
        %3133 = vst.msk [vmem:[%s3123 + $0xb1] sm:$0xff] %vm530, %v3001
        %3134 = vst.msk [vmem:[%s3123 + $0xc1] sm:$0xff] %vm530, %v3002
        %3135 = vst.msk [vmem:[%s3123 + $0xd1] sm:$0xff] %vm530, %v3003
        %3136 = vst.msk [vmem:[%s3123 + $0xe1] sm:$0xff] %vm530, %v3004
        %3137 = vst.msk [vmem:[%s3123 + $0xf1] sm:$0xff] %vm530, %v3005
        %3138 = vst.msk [vmem:[%s3123 + $0x101] sm:$0xff] %vm530, %v3006
        %3139 = vst.msk [vmem:[%s3123 + $0x111] sm:$0xff] %vm530, %v3007
        %3140 = vst.msk [vmem:[%s3123 + $0x141] sm:$0xff] %vm530, %v3008
        %3141 = vst.msk [vmem:[%s3123 + $0x151] sm:$0xff] %vm530, %v3009
        %3142 = vst.msk [vmem:[%s3123 + $0x161] sm:$0xff] %vm530, %v3010
        %3143 = vst.msk [vmem:[%s3123 + $0x171] sm:$0xff] %vm530, %v3011
        %3144 = vst.msk [vmem:[%s3123 + $0x181] sm:$0xff] %vm530, %v3012
        %3145 = vst.msk [vmem:[%s3123 + $0x191] sm:$0xff] %vm530, %v3013
        %3146 = vst.msk [vmem:[%s3123 + $0x1a1] sm:$0xff] %vm530, %v3014
        %3147 = vst.msk [vmem:[%s3123 + $0x1b1] sm:$0xff] %vm530, %v3015
        %3148 = vst.msk [vmem:[%s3123 + $0x1e1] sm:$0xff] %vm530, %v3016
        %3149 = vst.msk [vmem:[%s3123 + $0x1f1] sm:$0xff] %vm530, %v3017
        %3150 = vst.msk [vmem:[%s3123 + $0x201] sm:$0xff] %vm530, %v3018
        %3151 = vst.msk [vmem:[%s3123 + $0x211] sm:$0xff] %vm530, %v3019
        %3152 = vst.msk [vmem:[%s3123 + $0x221] sm:$0xff] %vm530, %v3020
        %3153 = vst.msk [vmem:[%s3123 + $0x231] sm:$0xff] %vm530, %v3021
        %3154 = vst.msk [vmem:[%s3123 + $0x241] sm:$0xff] %vm530, %v3022
        %3155 = vst.msk [vmem:[%s3123 + $0x251] sm:$0xff] %vm530, %v3023
        %v3156 = vld [vmem:[#allocation2] sm:$0xff]
        %v3157 = vld [vmem:[#allocation2 + $0x8] sm:$0x3]
        %v3158 = vld [vmem:[#allocation2 + $0x10] sm:$0xff]
        %v3159 = vld [vmem:[#allocation2 + $0x18] sm:$0x3]
        %v3160 = vld [vmem:[#allocation2 + $0x20] sm:$0xff]
        %v3161 = vld [vmem:[#allocation2 + $0x28] sm:$0x3]
        %v3162 = vld [vmem:[#allocation2 + $0x30] sm:$0xff]
        %v3163 = vld [vmem:[#allocation2 + $0x38] sm:$0x3]
        %v3164 = vld [vmem:[#allocation2 + $0x40] sm:$0xff]
        %v3165 = vld [vmem:[#allocation2 + $0x48] sm:$0x3]
        %v3166 = vld [vmem:[#allocation2 + $0x50] sm:$0xff]
        %v3167 = vld [vmem:[#allocation2 + $0x58] sm:$0x3]
        %v3168 = vld [vmem:[#allocation2 + $0x60] sm:$0xff]
        %v3169 = vld [vmem:[#allocation2 + $0x68] sm:$0x3]
        %v3170 = vld [vmem:[#allocation2 + $0x70] sm:$0xff]
        %v3171 = vld [vmem:[#allocation2 + $0x78] sm:$0x3]
        %v3172 = vld [vmem:[#allocation2 + $0x80] sm:$0xff]
        %v3173 = vld [vmem:[#allocation2 + $0x88] sm:$0x3]
        %v3174 = vld [vmem:[#allocation2 + $0x90] sm:$0xff]
        %v3175 = vld [vmem:[#allocation2 + $0x98] sm:$0x3]
        %v3176 = vld [vmem:[#allocation2 + $0xa0] sm:$0xff]
        %v3177 = vld [vmem:[#allocation2 + $0xa8] sm:$0x3]
        %v3178 = vld [vmem:[#allocation2 + $0xb0] sm:$0xff]
        %v3179 = vld [vmem:[#allocation2 + $0xb8] sm:$0x3]
        %v3180 = vld [vmem:[#allocation2 + $0xc0] sm:$0xff]
        %v3181 = vld [vmem:[#allocation2 + $0xc8] sm:$0x3]
        %v3182 = vld [vmem:[#allocation2 + $0xd0] sm:$0xff]
        %v3183 = vld [vmem:[#allocation2 + $0xd8] sm:$0x3]
        %v3184 = vld [vmem:[#allocation2 + $0xe0] sm:$0xff]
        %v3185 = vld [vmem:[#allocation2 + $0xe8] sm:$0x3]
        %v3186 = vld [vmem:[#allocation2 + $0xf0] sm:$0xff]
        %v3187 = vld [vmem:[#allocation2 + $0xf8] sm:$0x3]
        %v3188 = vld [vmem:[#allocation2 + $0x100] sm:$0xff]
        %v3189 = vld [vmem:[#allocation2 + $0x108] sm:$0x3]
        %v3190 = vld [vmem:[#allocation2 + $0x110] sm:$0xff]
        %v3191 = vld [vmem:[#allocation2 + $0x118] sm:$0x3]
        %v3192 = vld [vmem:[#allocation2 + $0x120] sm:$0xff]
        %v3193 = vld [vmem:[#allocation2 + $0x128] sm:$0x3]
        %v3194 = vld [vmem:[#allocation2 + $0x130] sm:$0xff]
        %v3195 = vld [vmem:[#allocation2 + $0x138] sm:$0x3]
        %v3196 = vld [vmem:[#allocation2 + $0x140] sm:$0xff]
        %v3197 = vld [vmem:[#allocation2 + $0x148] sm:$0x3]
        %v3198 = vld [vmem:[#allocation2 + $0x150] sm:$0xff]
        %v3199 = vld [vmem:[#allocation2 + $0x158] sm:$0x3]
        %v3200 = vld [vmem:[#allocation2 + $0x160] sm:$0xff]
        %v3201 = vld [vmem:[#allocation2 + $0x168] sm:$0x3]
        %v3202 = vld [vmem:[#allocation2 + $0x170] sm:$0xff]
        %v3203 = vld [vmem:[#allocation2 + $0x178] sm:$0x3]
        %v3204 = vld [vmem:[#allocation2 + $0x180] sm:$0xff]
        %v3205 = vld [vmem:[#allocation2 + $0x188] sm:$0x3]
        %v3206 = vld [vmem:[#allocation2 + $0x190] sm:$0xff]
        %v3207 = vld [vmem:[#allocation2 + $0x198] sm:$0x3]
        %v3208 = vld [vmem:[#allocation2 + $0x1a0] sm:$0xff]
        %v3209 = vld [vmem:[#allocation2 + $0x1a8] sm:$0x3]
        %v3210 = vld [vmem:[#allocation2 + $0x1b0] sm:$0xff]
        %v3211 = vld [vmem:[#allocation2 + $0x1b8] sm:$0x3]
        %v3212 = vld [vmem:[#allocation2 + $0x1c0] sm:$0xff]
        %v3213 = vld [vmem:[#allocation2 + $0x1c8] sm:$0x3]
        %v3214 = vld [vmem:[#allocation2 + $0x1d0] sm:$0xff]
        %v3215 = vld [vmem:[#allocation2 + $0x1d8] sm:$0x3]
        %v3216 = vld [vmem:[#allocation2 + $0x1e0] sm:$0xff]
        %v3217 = vld [vmem:[#allocation2 + $0x1e8] sm:$0x3]
        %v3218 = vld [vmem:[#allocation2 + $0x1f0] sm:$0xff]
        %v3219 = vld [vmem:[#allocation2 + $0x1f8] sm:$0x3]
        %v3220 = vld [vmem:[#allocation2 + $0x200] sm:$0xff]
        %v3221 = vld [vmem:[#allocation2 + $0x208] sm:$0x3]
        %v3222 = vld [vmem:[#allocation2 + $0x210] sm:$0xff]
        %v3223 = vld [vmem:[#allocation2 + $0x218] sm:$0x3]
        %v3224 = vld [vmem:[#allocation2 + $0x220] sm:$0xff]
        %v3225 = vld [vmem:[#allocation2 + $0x228] sm:$0x3]
        %v3226 = vld [vmem:[#allocation2 + $0x230] sm:$0xff]
        %v3227 = vld [vmem:[#allocation2 + $0x238] sm:$0x3]
        %v3228 = vld [vmem:[#allocation2 + $0x240] sm:$0xff]
        %v3229 = vld [vmem:[#allocation2 + $0x248] sm:$0x3]
        %v3230 = vld [vmem:[#allocation2 + $0x250] sm:$0xff]
        %v3231 = vld [vmem:[#allocation2 + $0x258] sm:$0x3]
        %v3232 = vld [vmem:[#allocation2 + $0x260] sm:$0xff]
        %v3233 = vld [vmem:[#allocation2 + $0x268] sm:$0x3]
        %v3234 = vld [vmem:[#allocation2 + $0x270] sm:$0xff]
        %v3235 = vld [vmem:[#allocation2 + $0x278] sm:$0x3]
        %v3236 = vpack.c.bf16 %v3158, %v3156
        %v3237 = vpack.c.bf16 %v3162, %v3160
        %v3238 = vpack.c.bf16 %v3166, %v3164
        %v3239 = vpack.c.bf16 %v3170, %v3168
        %v3240 = vpack.c.bf16 %v3178, %v3176
        %v3241 = vpack.c.bf16 %v3182, %v3180
        %v3242 = vpack.c.bf16 %v3186, %v3184
        %v3243 = vpack.c.bf16 %v3190, %v3188
        %v3244 = vpack.c.bf16 %v3198, %v3196
        %v3245 = vpack.c.bf16 %v3202, %v3200
        %v3246 = vpack.c.bf16 %v3206, %v3204
        %v3247 = vpack.c.bf16 %v3210, %v3208
        %v3248 = vpack.c.bf16 %v3218, %v3216
        %v3249 = vpack.c.bf16 %v3222, %v3220
        %v3250 = vpack.c.bf16 %v3226, %v3224
        %v3251 = vpack.c.bf16 %v3230, %v3228
        %v3252 = vld [vmem:[%s1] sm:$0xf]
        %v3253 = vld [vmem:[%s1 + $0x4] sm:$0xf]
        %v3254 = vld [vmem:[%s1 + $0x8] sm:$0xf]
        %v3255 = vld [vmem:[%s1 + $0xc] sm:$0xf]
        %v3320 = vrot.slane %v3156, 1
        %v3321 = vrot.slane %v3157, 1
        %v3322 = vsel %vm324, %v3320, %v3321
        %v3323 = vrot.slane %v3158, 1
        %v3324 = vrot.slane %v3159, 1
        %v3325 = vsel %vm324, %v3323, %v3324
        %v3326 = vrot.slane %v3160, 1
        %v3327 = vrot.slane %v3161, 1
        %v3328 = vsel %vm324, %v3326, %v3327
        %v3329 = vrot.slane %v3162, 1
        %v3330 = vrot.slane %v3163, 1
        %v3331 = vsel %vm324, %v3329, %v3330
        %v3332 = vrot.slane %v3164, 1
        %v3333 = vrot.slane %v3165, 1
        %v3334 = vsel %vm324, %v3332, %v3333
        %v3335 = vrot.slane %v3166, 1
        %v3336 = vrot.slane %v3167, 1
        %v3337 = vsel %vm324, %v3335, %v3336
        %v3338 = vrot.slane %v3168, 1
        %v3339 = vrot.slane %v3169, 1
        %v3340 = vsel %vm324, %v3338, %v3339
        %v3341 = vrot.slane %v3170, 1
        %v3342 = vrot.slane %v3171, 1
        %v3343 = vsel %vm324, %v3341, %v3342
        %v3344 = vrot.slane %v3176, 1
        %v3345 = vrot.slane %v3177, 1
        %v3346 = vsel %vm324, %v3344, %v3345
        %v3347 = vrot.slane %v3178, 1
        %v3348 = vrot.slane %v3179, 1
        %v3349 = vsel %vm324, %v3347, %v3348
        %v3350 = vrot.slane %v3180, 1
        %v3351 = vrot.slane %v3181, 1
        %v3352 = vsel %vm324, %v3350, %v3351
        %v3353 = vrot.slane %v3182, 1
        %v3354 = vrot.slane %v3183, 1
        %v3355 = vsel %vm324, %v3353, %v3354
        %v3356 = vrot.slane %v3184, 1
        %v3357 = vrot.slane %v3185, 1
        %v3358 = vsel %vm324, %v3356, %v3357
        %v3359 = vrot.slane %v3186, 1
        %v3360 = vrot.slane %v3187, 1
        %v3361 = vsel %vm324, %v3359, %v3360
        %v3362 = vrot.slane %v3188, 1
        %v3363 = vrot.slane %v3189, 1
        %v3364 = vsel %vm324, %v3362, %v3363
        %v3365 = vrot.slane %v3190, 1
        %v3366 = vrot.slane %v3191, 1
        %v3367 = vsel %vm324, %v3365, %v3366
        %v3368 = vrot.slane %v3196, 1
        %v3369 = vrot.slane %v3197, 1
        %v3370 = vsel %vm324, %v3368, %v3369
        %v3371 = vrot.slane %v3198, 1
        %v3372 = vrot.slane %v3199, 1
        %v3373 = vsel %vm324, %v3371, %v3372
        %v3374 = vrot.slane %v3200, 1
        %v3375 = vrot.slane %v3201, 1
        %v3376 = vsel %vm324, %v3374, %v3375
        %v3377 = vrot.slane %v3202, 1
        %v3378 = vrot.slane %v3203, 1
        %v3379 = vsel %vm324, %v3377, %v3378
        %v3380 = vrot.slane %v3204, 1
        %v3381 = vrot.slane %v3205, 1
        %v3382 = vsel %vm324, %v3380, %v3381
        %v3383 = vrot.slane %v3206, 1
        %v3384 = vrot.slane %v3207, 1
        %v3385 = vsel %vm324, %v3383, %v3384
        %v3386 = vrot.slane %v3208, 1
        %v3387 = vrot.slane %v3209, 1
        %v3388 = vsel %vm324, %v3386, %v3387
        %v3389 = vrot.slane %v3210, 1
        %v3390 = vrot.slane %v3211, 1
        %v3391 = vsel %vm324, %v3389, %v3390
        %v3392 = vrot.slane %v3216, 1
        %v3393 = vrot.slane %v3217, 1
        %v3394 = vsel %vm324, %v3392, %v3393
        %v3395 = vrot.slane %v3218, 1
        %v3396 = vrot.slane %v3219, 1
        %v3397 = vsel %vm324, %v3395, %v3396
        %v3398 = vrot.slane %v3220, 1
        %v3399 = vrot.slane %v3221, 1
        %v3400 = vsel %vm324, %v3398, %v3399
        %v3401 = vrot.slane %v3222, 1
        %v3402 = vrot.slane %v3223, 1
        %v3403 = vsel %vm324, %v3401, %v3402
        %v3404 = vrot.slane %v3224, 1
        %v3405 = vrot.slane %v3225, 1
        %v3406 = vsel %vm324, %v3404, %v3405
        %v3407 = vrot.slane %v3226, 1
        %v3408 = vrot.slane %v3227, 1
        %v3409 = vsel %vm324, %v3407, %v3408
        %v3410 = vrot.slane %v3228, 1
        %v3411 = vrot.slane %v3229, 1
        %v3412 = vsel %vm324, %v3410, %v3411
        %v3413 = vrot.slane %v3230, 1
        %v3414 = vrot.slane %v3231, 1
        %v3415 = vsel %vm324, %v3413, %v3414
        %v3448 = vpack.c.bf16 %v3325, %v3322
        %v3449 = vpack.c.bf16 %v3331, %v3328
        %v3450 = vpack.c.bf16 %v3337, %v3334
        %v3451 = vpack.c.bf16 %v3343, %v3340
        %v3452 = vpack.c.bf16 %v3349, %v3346
        %v3453 = vpack.c.bf16 %v3355, %v3352
        %v3454 = vpack.c.bf16 %v3361, %v3358
        %v3455 = vpack.c.bf16 %v3367, %v3364
        %v3456 = vpack.c.bf16 %v3373, %v3370
        %v3457 = vpack.c.bf16 %v3379, %v3376
        %v3458 = vpack.c.bf16 %v3385, %v3382
        %v3459 = vpack.c.bf16 %v3391, %v3388
        %v3460 = vpack.c.bf16 %v3397, %v3394
        %v3461 = vpack.c.bf16 %v3403, %v3400
        %v3462 = vpack.c.bf16 %v3409, %v3406
        %v3463 = vpack.c.bf16 %v3415, %v3412
        %v3464 = vld [vmem:[%s513] sm:$0xf]
        %v3465 = vld [vmem:[%s513 + $0x4] sm:$0xf]
        %v3466 = vld [vmem:[%s513 + $0x8] sm:$0xf]
        %v3467 = vld [vmem:[%s513 + $0xc] sm:$0xf]
        %v3472 = vunpack.c.l.b16 %v3464
        %v3473 = vunpack.c.l.b16 %v3465
        %v3474 = vunpack.c.l.b16 %v3466
        %v3475 = vunpack.c.l.b16 %v3467
        %v3476 = vpack.c.b16 %v3473, %v3472
        %v3477 = vpack.c.b16 %v3475, %v3474
        %v3481 = vsel %vm530, %v3448, 0
        %v3484 = vsel %vm530, %v3449, 0
        %v3487 = vsel %vm530, %v3450, 0
        %v3490 = vsel %vm530, %v3451, 0
        %v3493 = vsel %vm530, %v3452, 0
        %v3496 = vsel %vm530, %v3453, 0
        %v3499 = vsel %vm530, %v3454, 0
        %v3502 = vsel %vm530, %v3455, 0
        %v3505 = vsel %vm530, %v3456, 0
        %v3508 = vsel %vm530, %v3457, 0
        %v3511 = vsel %vm530, %v3458, 0
        %v3514 = vsel %vm530, %v3459, 0
        %v3517 = vsel %vm530, %v3460, 0
        %v3520 = vsel %vm530, %v3461, 0
        %v3523 = vsel %vm530, %v3462, 0
        %v3526 = vsel %vm530, %v3463, 0
        %3528 = vmatprep.subr.bf16.mxu0 0
        %3529 = vmatpush1.bf16.msra.mxu0 0
        %3530 = vmatprep.subr.bf16.mxu0 0
        %3531 = vmatpush1.bf16.msra.mxu0 0
        %3532 = vmatprep.subr.bf16.mxu0 0
        %3533 = vmatpush1.bf16.msra.mxu0 0
        %3534 = vmatprep.subr.bf16.mxu0 0
        %3535 = vmatpush1.bf16.msra.mxu0 0
        %3536 = vmatprep.subr.bf16.mxu0 0
        %3537 = vmatpush1.bf16.msra.mxu0 0
        %3538 = vmatprep.subr.bf16.mxu0 0
        %3539 = vmatpush1.bf16.msra.mxu0 0
        %3540 = vmatprep.subr.bf16.mxu0 0
        %3541 = vmatpush1.bf16.msra.mxu0 %v3477
        %3542 = vmatprep.subr.bf16.mxu0 0
        %3543 = vmatpush1.bf16.msra.mxu0 %v3476
        %3544 = vmatprep.subr.bf16.mxu0 0
        %3545 = vmatpush2.bf16.msra.mxu0 0
        %3546 = vmatprep.subr.bf16.mxu0 0
        %3547 = vmatpush2.bf16.msra.mxu0 0
        %3548 = vmatprep.subr.bf16.mxu0 0
        %3549 = vmatpush2.bf16.msra.mxu0 0
        %3550 = vmatprep.subr.bf16.mxu0 0
        %3551 = vmatpush2.bf16.msra.mxu0 0
        %3552 = vmatprep.subr.bf16.mxu0 0
        %3553 = vmatpush2.bf16.msra.mxu0 0
        %3554 = vmatprep.subr.bf16.mxu0 0
        %3555 = vmatpush2.bf16.msra.mxu0 0
        %3556 = vmatprep.subr.bf16.mxu0 0
        %3557 = vmatpush2.bf16.msra.mxu0 0
        %3558 = vmatprep.subr.bf16.mxu0 0
        %3559 = vmatpush2.bf16.msra.mxu0 0
        %3560 = vmatprep.mubr.bf16.mxu0 0
        %3561 = vmatmul.mubr.bf16.gmra.mxu0 %v3481
        %v3562 = vpop.f32.mrf.mxu0
        %v3563 = vadd.f32 0.0, %v3562
        %v3564 = vpop.f32.mrf.mxu0
        %v3565 = vpop.f32.mrf.mxu0
        %v3566 = vadd.f32 0.0, %v3565
        %v3567 = vpop.f32.mrf.mxu0
        %3568 = vmatprep.mubr.bf16.mxu0 0
        %3569 = vmatmul.mubr.bf16.gmra.mxu0 %v3484
        %v3570 = vpop.f32.mrf.mxu0
        %v3571 = vadd.f32 0.0, %v3570
        %v3572 = vpop.f32.mrf.mxu0
        %v3573 = vpop.f32.mrf.mxu0
        %v3574 = vadd.f32 0.0, %v3573
        %v3575 = vpop.f32.mrf.mxu0
        %3576 = vmatprep.mubr.bf16.mxu0 0
        %3577 = vmatmul.mubr.bf16.gmra.mxu0 %v3487
        %v3578 = vpop.f32.mrf.mxu0
        %v3579 = vadd.f32 0.0, %v3578
        %v3580 = vpop.f32.mrf.mxu0
        %v3581 = vpop.f32.mrf.mxu0
        %v3582 = vadd.f32 0.0, %v3581
        %v3583 = vpop.f32.mrf.mxu0
        %3584 = vmatprep.mubr.bf16.mxu0 0
        %3585 = vmatmul.mubr.bf16.gmra.mxu0 %v3490
        %v3586 = vpop.f32.mrf.mxu0
        %v3587 = vadd.f32 0.0, %v3586
        %v3588 = vpop.f32.mrf.mxu0
        %v3589 = vpop.f32.mrf.mxu0
        %v3590 = vadd.f32 0.0, %v3589
        %v3591 = vpop.f32.mrf.mxu0
        %3592 = vmatprep.mubr.bf16.mxu0 0
        %3593 = vmatmul.mubr.bf16.gmra.mxu0 %v3493
        %v3594 = vpop.f32.mrf.mxu0
        %v3595 = vadd.f32 0.0, %v3594
        %v3596 = vpop.f32.mrf.mxu0
        %v3597 = vpop.f32.mrf.mxu0
        %v3598 = vadd.f32 0.0, %v3597
        %v3599 = vpop.f32.mrf.mxu0
        %3600 = vmatprep.mubr.bf16.mxu0 0
        %3601 = vmatmul.mubr.bf16.gmra.mxu0 %v3496
        %v3602 = vpop.f32.mrf.mxu0
        %v3603 = vadd.f32 0.0, %v3602
        %v3604 = vpop.f32.mrf.mxu0
        %v3605 = vpop.f32.mrf.mxu0
        %v3606 = vadd.f32 0.0, %v3605
        %v3607 = vpop.f32.mrf.mxu0
        %3608 = vmatprep.mubr.bf16.mxu0 0
        %3609 = vmatmul.mubr.bf16.gmra.mxu0 %v3499
        %v3610 = vpop.f32.mrf.mxu0
        %v3611 = vadd.f32 0.0, %v3610
        %v3612 = vpop.f32.mrf.mxu0
        %v3613 = vpop.f32.mrf.mxu0
        %v3614 = vadd.f32 0.0, %v3613
        %v3615 = vpop.f32.mrf.mxu0
        %3616 = vmatprep.mubr.bf16.mxu0 0
        %3617 = vmatmul.mubr.bf16.gmra.mxu0 %v3502
        %v3618 = vpop.f32.mrf.mxu0
        %v3619 = vadd.f32 0.0, %v3618
        %v3620 = vpop.f32.mrf.mxu0
        %v3621 = vpop.f32.mrf.mxu0
        %v3622 = vadd.f32 0.0, %v3621
        %v3623 = vpop.f32.mrf.mxu0
        %3624 = vmatprep.mubr.bf16.mxu0 0
        %3625 = vmatmul.mubr.bf16.gmra.mxu0 %v3505
        %v3626 = vpop.f32.mrf.mxu0
        %v3627 = vadd.f32 0.0, %v3626
        %v3628 = vpop.f32.mrf.mxu0
        %v3629 = vpop.f32.mrf.mxu0
        %v3630 = vadd.f32 0.0, %v3629
        %v3631 = vpop.f32.mrf.mxu0
        %3632 = vmatprep.mubr.bf16.mxu0 0
        %3633 = vmatmul.mubr.bf16.gmra.mxu0 %v3508
        %v3634 = vpop.f32.mrf.mxu0
        %v3635 = vadd.f32 0.0, %v3634
        %v3636 = vpop.f32.mrf.mxu0
        %v3637 = vpop.f32.mrf.mxu0
        %v3638 = vadd.f32 0.0, %v3637
        %v3639 = vpop.f32.mrf.mxu0
        %3640 = vmatprep.mubr.bf16.mxu0 0
        %3641 = vmatmul.mubr.bf16.gmra.mxu0 %v3511
        %v3642 = vpop.f32.mrf.mxu0
        %v3643 = vadd.f32 0.0, %v3642
        %v3644 = vpop.f32.mrf.mxu0
        %v3645 = vpop.f32.mrf.mxu0
        %v3646 = vadd.f32 0.0, %v3645
        %v3647 = vpop.f32.mrf.mxu0
        %3648 = vmatprep.mubr.bf16.mxu0 0
        %3649 = vmatmul.mubr.bf16.gmra.mxu0 %v3514
        %v3650 = vpop.f32.mrf.mxu0
        %v3651 = vadd.f32 0.0, %v3650
        %v3652 = vpop.f32.mrf.mxu0
        %v3653 = vpop.f32.mrf.mxu0
        %v3654 = vadd.f32 0.0, %v3653
        %v3655 = vpop.f32.mrf.mxu0
        %3656 = vmatprep.mubr.bf16.mxu0 0
        %3657 = vmatmul.mubr.bf16.gmra.mxu0 %v3517
        %v3658 = vpop.f32.mrf.mxu0
        %v3659 = vadd.f32 0.0, %v3658
        %v3660 = vpop.f32.mrf.mxu0
        %v3661 = vpop.f32.mrf.mxu0
        %v3662 = vadd.f32 0.0, %v3661
        %v3663 = vpop.f32.mrf.mxu0
        %3664 = vmatprep.mubr.bf16.mxu0 0
        %3665 = vmatmul.mubr.bf16.gmra.mxu0 %v3520
        %v3666 = vpop.f32.mrf.mxu0
        %v3667 = vadd.f32 0.0, %v3666
        %v3668 = vpop.f32.mrf.mxu0
        %v3669 = vpop.f32.mrf.mxu0
        %v3670 = vadd.f32 0.0, %v3669
        %v3671 = vpop.f32.mrf.mxu0
        %3672 = vmatprep.mubr.bf16.mxu0 0
        %3673 = vmatmul.mubr.bf16.gmra.mxu0 %v3523
        %v3674 = vpop.f32.mrf.mxu0
        %v3675 = vadd.f32 0.0, %v3674
        %v3676 = vpop.f32.mrf.mxu0
        %v3677 = vpop.f32.mrf.mxu0
        %v3678 = vadd.f32 0.0, %v3677
        %v3679 = vpop.f32.mrf.mxu0
        %3680 = vmatprep.mubr.bf16.mxu0 0
        %3681 = vmatmul.mubr.bf16.gmra.mxu0 %v3526
        %v3682 = vpop.f32.mrf.mxu0
        %v3683 = vadd.f32 0.0, %v3682
        %v3684 = vpop.f32.mrf.mxu0
        %v3685 = vpop.f32.mrf.mxu0
        %v3686 = vadd.f32 0.0, %v3685
        %v3687 = vpop.f32.mrf.mxu0
        %3688 = vdwg.mxu0
        %v3693 = vunpack.c.l.b16 %v3252
        %v3694 = vunpack.c.l.b16 %v3253
        %v3695 = vunpack.c.l.b16 %v3254
        %v3696 = vunpack.c.l.b16 %v3255
        %v3697 = vpack.c.b16 %v3694, %v3693
        %v3698 = vpack.c.b16 %v3696, %v3695
        %v3702 = vsel %vm530, %v3236, 0
        %v3705 = vsel %vm530, %v3237, 0
        %v3708 = vsel %vm530, %v3238, 0
        %v3711 = vsel %vm530, %v3239, 0
        %v3714 = vsel %vm530, %v3240, 0
        %v3717 = vsel %vm530, %v3241, 0
        %v3720 = vsel %vm530, %v3242, 0
        %v3723 = vsel %vm530, %v3243, 0
        %v3726 = vsel %vm530, %v3244, 0
        %v3729 = vsel %vm530, %v3245, 0
        %v3732 = vsel %vm530, %v3246, 0
        %v3735 = vsel %vm530, %v3247, 0
        %v3738 = vsel %vm530, %v3248, 0
        %v3741 = vsel %vm530, %v3249, 0
        %v3744 = vsel %vm530, %v3250, 0
        %v3747 = vsel %vm530, %v3251, 0
        %3749 = vmatprep.subr.bf16.mxu0 0
        %3750 = vmatpush1.bf16.msra.mxu0 0
        %3751 = vmatprep.subr.bf16.mxu0 0
        %3752 = vmatpush1.bf16.msra.mxu0 0
        %3753 = vmatprep.subr.bf16.mxu0 0
        %3754 = vmatpush1.bf16.msra.mxu0 0
        %3755 = vmatprep.subr.bf16.mxu0 0
        %3756 = vmatpush1.bf16.msra.mxu0 0
        %3757 = vmatprep.subr.bf16.mxu0 0
        %3758 = vmatpush1.bf16.msra.mxu0 0
        %3759 = vmatprep.subr.bf16.mxu0 0
        %3760 = vmatpush1.bf16.msra.mxu0 0
        %3761 = vmatprep.subr.bf16.mxu0 0
        %3762 = vmatpush1.bf16.msra.mxu0 %v3698
        %3763 = vmatprep.subr.bf16.mxu0 0
        %3764 = vmatpush1.bf16.msra.mxu0 %v3697
        %3765 = vmatprep.subr.bf16.mxu0 0
        %3766 = vmatpush2.bf16.msra.mxu0 0
        %3767 = vmatprep.subr.bf16.mxu0 0
        %3768 = vmatpush2.bf16.msra.mxu0 0
        %3769 = vmatprep.subr.bf16.mxu0 0
        %3770 = vmatpush2.bf16.msra.mxu0 0
        %3771 = vmatprep.subr.bf16.mxu0 0
        %3772 = vmatpush2.bf16.msra.mxu0 0
        %3773 = vmatprep.subr.bf16.mxu0 0
        %3774 = vmatpush2.bf16.msra.mxu0 0
        %3775 = vmatprep.subr.bf16.mxu0 0
        %3776 = vmatpush2.bf16.msra.mxu0 0
        %3777 = vmatprep.subr.bf16.mxu0 0
        %3778 = vmatpush2.bf16.msra.mxu0 0
        %3779 = vmatprep.subr.bf16.mxu0 0
        %3780 = vmatpush2.bf16.msra.mxu0 0
        %3781 = vmatprep.mubr.bf16.mxu0 0
        %3782 = vmatmul.mubr.bf16.gmra.mxu0 %v3702
        %v3783 = vpop.f32.mrf.mxu0
        %v3784 = vadd.f32 %v3563, %v3783
        %v3785 = vpop.f32.mrf.mxu0
        %v3786 = vpop.f32.mrf.mxu0
        %v3787 = vadd.f32 %v3566, %v3786
        %v3788 = vpop.f32.mrf.mxu0
        %3789 = vmatprep.mubr.bf16.mxu0 0
        %3790 = vmatmul.mubr.bf16.gmra.mxu0 %v3705
        %v3791 = vpop.f32.mrf.mxu0
        %v3792 = vadd.f32 %v3571, %v3791
        %v3793 = vpop.f32.mrf.mxu0
        %v3794 = vpop.f32.mrf.mxu0
        %v3795 = vadd.f32 %v3574, %v3794
        %v3796 = vpop.f32.mrf.mxu0
        %3797 = vmatprep.mubr.bf16.mxu0 0
        %3798 = vmatmul.mubr.bf16.gmra.mxu0 %v3708
        %v3799 = vpop.f32.mrf.mxu0
        %v3800 = vadd.f32 %v3579, %v3799
        %v3801 = vpop.f32.mrf.mxu0
        %v3802 = vpop.f32.mrf.mxu0
        %v3803 = vadd.f32 %v3582, %v3802
        %v3804 = vpop.f32.mrf.mxu0
        %3805 = vmatprep.mubr.bf16.mxu0 0
        %3806 = vmatmul.mubr.bf16.gmra.mxu0 %v3711
        %v3807 = vpop.f32.mrf.mxu0
        %v3808 = vadd.f32 %v3587, %v3807
        %v3809 = vpop.f32.mrf.mxu0
        %v3810 = vpop.f32.mrf.mxu0
        %v3811 = vadd.f32 %v3590, %v3810
        %v3812 = vpop.f32.mrf.mxu0
        %3813 = vmatprep.mubr.bf16.mxu0 0
        %3814 = vmatmul.mubr.bf16.gmra.mxu0 %v3714
        %v3815 = vpop.f32.mrf.mxu0
        %v3816 = vadd.f32 %v3595, %v3815
        %v3817 = vpop.f32.mrf.mxu0
        %v3818 = vpop.f32.mrf.mxu0
        %v3819 = vadd.f32 %v3598, %v3818
        %v3820 = vpop.f32.mrf.mxu0
        %3821 = vmatprep.mubr.bf16.mxu0 0
        %3822 = vmatmul.mubr.bf16.gmra.mxu0 %v3717
        %v3823 = vpop.f32.mrf.mxu0
        %v3824 = vadd.f32 %v3603, %v3823
        %v3825 = vpop.f32.mrf.mxu0
        %v3826 = vpop.f32.mrf.mxu0
        %v3827 = vadd.f32 %v3606, %v3826
        %v3828 = vpop.f32.mrf.mxu0
        %3829 = vmatprep.mubr.bf16.mxu0 0
        %3830 = vmatmul.mubr.bf16.gmra.mxu0 %v3720
        %v3831 = vpop.f32.mrf.mxu0
        %v3832 = vadd.f32 %v3611, %v3831
        %v3833 = vpop.f32.mrf.mxu0
        %v3834 = vpop.f32.mrf.mxu0
        %v3835 = vadd.f32 %v3614, %v3834
        %v3836 = vpop.f32.mrf.mxu0
        %3837 = vmatprep.mubr.bf16.mxu0 0
        %3838 = vmatmul.mubr.bf16.gmra.mxu0 %v3723
        %v3839 = vpop.f32.mrf.mxu0
        %v3840 = vadd.f32 %v3619, %v3839
        %v3841 = vpop.f32.mrf.mxu0
        %v3842 = vpop.f32.mrf.mxu0
        %v3843 = vadd.f32 %v3622, %v3842
        %v3844 = vpop.f32.mrf.mxu0
        %3845 = vmatprep.mubr.bf16.mxu0 0
        %3846 = vmatmul.mubr.bf16.gmra.mxu0 %v3726
        %v3847 = vpop.f32.mrf.mxu0
        %v3848 = vadd.f32 %v3627, %v3847
        %v3849 = vpop.f32.mrf.mxu0
        %v3850 = vpop.f32.mrf.mxu0
        %v3851 = vadd.f32 %v3630, %v3850
        %v3852 = vpop.f32.mrf.mxu0
        %3853 = vmatprep.mubr.bf16.mxu0 0
        %3854 = vmatmul.mubr.bf16.gmra.mxu0 %v3729
        %v3855 = vpop.f32.mrf.mxu0
        %v3856 = vadd.f32 %v3635, %v3855
        %v3857 = vpop.f32.mrf.mxu0
        %v3858 = vpop.f32.mrf.mxu0
        %v3859 = vadd.f32 %v3638, %v3858
        %v3860 = vpop.f32.mrf.mxu0
        %3861 = vmatprep.mubr.bf16.mxu0 0
        %3862 = vmatmul.mubr.bf16.gmra.mxu0 %v3732
        %v3863 = vpop.f32.mrf.mxu0
        %v3864 = vadd.f32 %v3643, %v3863
        %v3865 = vpop.f32.mrf.mxu0
        %v3866 = vpop.f32.mrf.mxu0
        %v3867 = vadd.f32 %v3646, %v3866
        %v3868 = vpop.f32.mrf.mxu0
        %3869 = vmatprep.mubr.bf16.mxu0 0
        %3870 = vmatmul.mubr.bf16.gmra.mxu0 %v3735
        %v3871 = vpop.f32.mrf.mxu0
        %v3872 = vadd.f32 %v3651, %v3871
        %v3873 = vpop.f32.mrf.mxu0
        %v3874 = vpop.f32.mrf.mxu0
        %v3875 = vadd.f32 %v3654, %v3874
        %v3876 = vpop.f32.mrf.mxu0
        %3877 = vmatprep.mubr.bf16.mxu0 0
        %3878 = vmatmul.mubr.bf16.gmra.mxu0 %v3738
        %v3879 = vpop.f32.mrf.mxu0
        %v3880 = vadd.f32 %v3659, %v3879
        %v3881 = vpop.f32.mrf.mxu0
        %v3882 = vpop.f32.mrf.mxu0
        %v3883 = vadd.f32 %v3662, %v3882
        %v3884 = vpop.f32.mrf.mxu0
        %3885 = vmatprep.mubr.bf16.mxu0 0
        %3886 = vmatmul.mubr.bf16.gmra.mxu0 %v3741
        %v3887 = vpop.f32.mrf.mxu0
        %v3888 = vadd.f32 %v3667, %v3887
        %v3889 = vpop.f32.mrf.mxu0
        %v3890 = vpop.f32.mrf.mxu0
        %v3891 = vadd.f32 %v3670, %v3890
        %v3892 = vpop.f32.mrf.mxu0
        %3893 = vmatprep.mubr.bf16.mxu0 0
        %3894 = vmatmul.mubr.bf16.gmra.mxu0 %v3744
        %v3895 = vpop.f32.mrf.mxu0
        %v3896 = vadd.f32 %v3675, %v3895
        %v3897 = vpop.f32.mrf.mxu0
        %v3898 = vpop.f32.mrf.mxu0
        %v3899 = vadd.f32 %v3678, %v3898
        %v3900 = vpop.f32.mrf.mxu0
        %3901 = vmatprep.mubr.bf16.mxu0 0
        %3902 = vmatmul.mubr.bf16.gmra.mxu0 %v3747
        %v3903 = vpop.f32.mrf.mxu0
        %v3904 = vadd.f32 %v3683, %v3903
        %v3905 = vpop.f32.mrf.mxu0
        %v3906 = vpop.f32.mrf.mxu0
        %v3907 = vadd.f32 %v3686, %v3906
        %v3908 = vpop.f32.mrf.mxu0
        %3909 = vdwg.mxu0
        %v3910 = vrot.slane %v3156, 2
        %v3911 = vrot.slane %v3157, 2
        %v3912 = vsel %vm961, %v3910, %v3911
        %v3913 = vrot.slane %v3158, 2
        %v3914 = vrot.slane %v3159, 2
        %v3915 = vsel %vm961, %v3913, %v3914
        %v3916 = vrot.slane %v3160, 2
        %v3917 = vrot.slane %v3161, 2
        %v3918 = vsel %vm961, %v3916, %v3917
        %v3919 = vrot.slane %v3162, 2
        %v3920 = vrot.slane %v3163, 2
        %v3921 = vsel %vm961, %v3919, %v3920
        %v3922 = vrot.slane %v3164, 2
        %v3923 = vrot.slane %v3165, 2
        %v3924 = vsel %vm961, %v3922, %v3923
        %v3925 = vrot.slane %v3166, 2
        %v3926 = vrot.slane %v3167, 2
        %v3927 = vsel %vm961, %v3925, %v3926
        %v3928 = vrot.slane %v3168, 2
        %v3929 = vrot.slane %v3169, 2
        %v3930 = vsel %vm961, %v3928, %v3929
        %v3931 = vrot.slane %v3170, 2
        %v3932 = vrot.slane %v3171, 2
        %v3933 = vsel %vm961, %v3931, %v3932
        %v3934 = vrot.slane %v3176, 2
        %v3935 = vrot.slane %v3177, 2
        %v3936 = vsel %vm961, %v3934, %v3935
        %v3937 = vrot.slane %v3178, 2
        %v3938 = vrot.slane %v3179, 2
        %v3939 = vsel %vm961, %v3937, %v3938
        %v3940 = vrot.slane %v3180, 2
        %v3941 = vrot.slane %v3181, 2
        %v3942 = vsel %vm961, %v3940, %v3941
        %v3943 = vrot.slane %v3182, 2
        %v3944 = vrot.slane %v3183, 2
        %v3945 = vsel %vm961, %v3943, %v3944
        %v3946 = vrot.slane %v3184, 2
        %v3947 = vrot.slane %v3185, 2
        %v3948 = vsel %vm961, %v3946, %v3947
        %v3949 = vrot.slane %v3186, 2
        %v3950 = vrot.slane %v3187, 2
        %v3951 = vsel %vm961, %v3949, %v3950
        %v3952 = vrot.slane %v3188, 2
        %v3953 = vrot.slane %v3189, 2
        %v3954 = vsel %vm961, %v3952, %v3953
        %v3955 = vrot.slane %v3190, 2
        %v3956 = vrot.slane %v3191, 2
        %v3957 = vsel %vm961, %v3955, %v3956
        %v3958 = vrot.slane %v3196, 2
        %v3959 = vrot.slane %v3197, 2
        %v3960 = vsel %vm961, %v3958, %v3959
        %v3961 = vrot.slane %v3198, 2
        %v3962 = vrot.slane %v3199, 2
        %v3963 = vsel %vm961, %v3961, %v3962
        %v3964 = vrot.slane %v3200, 2
        %v3965 = vrot.slane %v3201, 2
        %v3966 = vsel %vm961, %v3964, %v3965
        %v3967 = vrot.slane %v3202, 2
        %v3968 = vrot.slane %v3203, 2
        %v3969 = vsel %vm961, %v3967, %v3968
        %v3970 = vrot.slane %v3204, 2
        %v3971 = vrot.slane %v3205, 2
        %v3972 = vsel %vm961, %v3970, %v3971
        %v3973 = vrot.slane %v3206, 2
        %v3974 = vrot.slane %v3207, 2
        %v3975 = vsel %vm961, %v3973, %v3974
        %v3976 = vrot.slane %v3208, 2
        %v3977 = vrot.slane %v3209, 2
        %v3978 = vsel %vm961, %v3976, %v3977
        %v3979 = vrot.slane %v3210, 2
        %v3980 = vrot.slane %v3211, 2
        %v3981 = vsel %vm961, %v3979, %v3980
        %v3982 = vrot.slane %v3216, 2
        %v3983 = vrot.slane %v3217, 2
        %v3984 = vsel %vm961, %v3982, %v3983
        %v3985 = vrot.slane %v3218, 2
        %v3986 = vrot.slane %v3219, 2
        %v3987 = vsel %vm961, %v3985, %v3986
        %v3988 = vrot.slane %v3220, 2
        %v3989 = vrot.slane %v3221, 2
        %v3990 = vsel %vm961, %v3988, %v3989
        %v3991 = vrot.slane %v3222, 2
        %v3992 = vrot.slane %v3223, 2
        %v3993 = vsel %vm961, %v3991, %v3992
        %v3994 = vrot.slane %v3224, 2
        %v3995 = vrot.slane %v3225, 2
        %v3996 = vsel %vm961, %v3994, %v3995
        %v3997 = vrot.slane %v3226, 2
        %v3998 = vrot.slane %v3227, 2
        %v3999 = vsel %vm961, %v3997, %v3998
        %v4000 = vrot.slane %v3228, 2
        %v4001 = vrot.slane %v3229, 2
        %v4002 = vsel %vm961, %v4000, %v4001
        %v4003 = vrot.slane %v3230, 2
        %v4004 = vrot.slane %v3231, 2
        %v4005 = vsel %vm961, %v4003, %v4004
        %v4038 = vpack.c.bf16 %v3915, %v3912
        %v4039 = vpack.c.bf16 %v3921, %v3918
        %v4040 = vpack.c.bf16 %v3927, %v3924
        %v4041 = vpack.c.bf16 %v3933, %v3930
        %v4042 = vpack.c.bf16 %v3939, %v3936
        %v4043 = vpack.c.bf16 %v3945, %v3942
        %v4044 = vpack.c.bf16 %v3951, %v3948
        %v4045 = vpack.c.bf16 %v3957, %v3954
        %v4046 = vpack.c.bf16 %v3963, %v3960
        %v4047 = vpack.c.bf16 %v3969, %v3966
        %v4048 = vpack.c.bf16 %v3975, %v3972
        %v4049 = vpack.c.bf16 %v3981, %v3978
        %v4050 = vpack.c.bf16 %v3987, %v3984
        %v4051 = vpack.c.bf16 %v3993, %v3990
        %v4052 = vpack.c.bf16 %v3999, %v3996
        %v4053 = vpack.c.bf16 %v4005, %v4002
        %v4054 = vld [vmem:[%s1106] sm:$0xf]
        %v4055 = vld [vmem:[%s1106 + $0x4] sm:$0xf]
        %v4056 = vld [vmem:[%s1106 + $0x8] sm:$0xf]
        %v4057 = vld [vmem:[%s1106 + $0xc] sm:$0xf]
        %v4062 = vunpack.c.l.b16 %v4054
        %v4063 = vunpack.c.l.b16 %v4055
        %v4064 = vunpack.c.l.b16 %v4056
        %v4065 = vunpack.c.l.b16 %v4057
        %v4066 = vpack.c.b16 %v4063, %v4062
        %v4067 = vpack.c.b16 %v4065, %v4064
        %v4071 = vsel %vm530, %v4038, 0
        %v4074 = vsel %vm530, %v4039, 0
        %v4077 = vsel %vm530, %v4040, 0
        %v4080 = vsel %vm530, %v4041, 0
        %v4083 = vsel %vm530, %v4042, 0
        %v4086 = vsel %vm530, %v4043, 0
        %v4089 = vsel %vm530, %v4044, 0
        %v4092 = vsel %vm530, %v4045, 0
        %v4095 = vsel %vm530, %v4046, 0
        %v4098 = vsel %vm530, %v4047, 0
        %v4101 = vsel %vm530, %v4048, 0
        %v4104 = vsel %vm530, %v4049, 0
        %v4107 = vsel %vm530, %v4050, 0
        %v4110 = vsel %vm530, %v4051, 0
        %v4113 = vsel %vm530, %v4052, 0
        %v4116 = vsel %vm530, %v4053, 0
        %4118 = vmatprep.subr.bf16.mxu0 0
        %4119 = vmatpush1.bf16.msra.mxu0 0
        %4120 = vmatprep.subr.bf16.mxu0 0
        %4121 = vmatpush1.bf16.msra.mxu0 0
        %4122 = vmatprep.subr.bf16.mxu0 0
        %4123 = vmatpush1.bf16.msra.mxu0 0
        %4124 = vmatprep.subr.bf16.mxu0 0
        %4125 = vmatpush1.bf16.msra.mxu0 0
        %4126 = vmatprep.subr.bf16.mxu0 0
        %4127 = vmatpush1.bf16.msra.mxu0 0
        %4128 = vmatprep.subr.bf16.mxu0 0
        %4129 = vmatpush1.bf16.msra.mxu0 0
        %4130 = vmatprep.subr.bf16.mxu0 0
        %4131 = vmatpush1.bf16.msra.mxu0 %v4067
        %4132 = vmatprep.subr.bf16.mxu0 0
        %4133 = vmatpush1.bf16.msra.mxu0 %v4066
        %4134 = vmatprep.subr.bf16.mxu0 0
        %4135 = vmatpush2.bf16.msra.mxu0 0
        %4136 = vmatprep.subr.bf16.mxu0 0
        %4137 = vmatpush2.bf16.msra.mxu0 0
        %4138 = vmatprep.subr.bf16.mxu0 0
        %4139 = vmatpush2.bf16.msra.mxu0 0
        %4140 = vmatprep.subr.bf16.mxu0 0
        %4141 = vmatpush2.bf16.msra.mxu0 0
        %4142 = vmatprep.subr.bf16.mxu0 0
        %4143 = vmatpush2.bf16.msra.mxu0 0
        %4144 = vmatprep.subr.bf16.mxu0 0
        %4145 = vmatpush2.bf16.msra.mxu0 0
        %4146 = vmatprep.subr.bf16.mxu0 0
        %4147 = vmatpush2.bf16.msra.mxu0 0
        %4148 = vmatprep.subr.bf16.mxu0 0
        %4149 = vmatpush2.bf16.msra.mxu0 0
        %4150 = vmatprep.mubr.bf16.mxu0 0
        %4151 = vmatmul.mubr.bf16.gmra.mxu0 %v4071
        %v4152 = vpop.f32.mrf.mxu0
        %v4153 = vadd.f32 0.0, %v4152
        %v4154 = vpop.f32.mrf.mxu0
        %v4155 = vpop.f32.mrf.mxu0
        %v4156 = vadd.f32 0.0, %v4155
        %v4157 = vpop.f32.mrf.mxu0
        %4158 = vmatprep.mubr.bf16.mxu0 0
        %4159 = vmatmul.mubr.bf16.gmra.mxu0 %v4074
        %v4160 = vpop.f32.mrf.mxu0
        %v4161 = vadd.f32 0.0, %v4160
        %v4162 = vpop.f32.mrf.mxu0
        %v4163 = vpop.f32.mrf.mxu0
        %v4164 = vadd.f32 0.0, %v4163
        %v4165 = vpop.f32.mrf.mxu0
        %4166 = vmatprep.mubr.bf16.mxu0 0
        %4167 = vmatmul.mubr.bf16.gmra.mxu0 %v4077
        %v4168 = vpop.f32.mrf.mxu0
        %v4169 = vadd.f32 0.0, %v4168
        %v4170 = vpop.f32.mrf.mxu0
        %v4171 = vpop.f32.mrf.mxu0
        %v4172 = vadd.f32 0.0, %v4171
        %v4173 = vpop.f32.mrf.mxu0
        %4174 = vmatprep.mubr.bf16.mxu0 0
        %4175 = vmatmul.mubr.bf16.gmra.mxu0 %v4080
        %v4176 = vpop.f32.mrf.mxu0
        %v4177 = vadd.f32 0.0, %v4176
        %v4178 = vpop.f32.mrf.mxu0
        %v4179 = vpop.f32.mrf.mxu0
        %v4180 = vadd.f32 0.0, %v4179
        %v4181 = vpop.f32.mrf.mxu0
        %4182 = vmatprep.mubr.bf16.mxu0 0
        %4183 = vmatmul.mubr.bf16.gmra.mxu0 %v4083
        %v4184 = vpop.f32.mrf.mxu0
        %v4185 = vadd.f32 0.0, %v4184
        %v4186 = vpop.f32.mrf.mxu0
        %v4187 = vpop.f32.mrf.mxu0
        %v4188 = vadd.f32 0.0, %v4187
        %v4189 = vpop.f32.mrf.mxu0
        %4190 = vmatprep.mubr.bf16.mxu0 0
        %4191 = vmatmul.mubr.bf16.gmra.mxu0 %v4086
        %v4192 = vpop.f32.mrf.mxu0
        %v4193 = vadd.f32 0.0, %v4192
        %v4194 = vpop.f32.mrf.mxu0
        %v4195 = vpop.f32.mrf.mxu0
        %v4196 = vadd.f32 0.0, %v4195
        %v4197 = vpop.f32.mrf.mxu0
        %4198 = vmatprep.mubr.bf16.mxu0 0
        %4199 = vmatmul.mubr.bf16.gmra.mxu0 %v4089
        %v4200 = vpop.f32.mrf.mxu0
        %v4201 = vadd.f32 0.0, %v4200
        %v4202 = vpop.f32.mrf.mxu0
        %v4203 = vpop.f32.mrf.mxu0
        %v4204 = vadd.f32 0.0, %v4203
        %v4205 = vpop.f32.mrf.mxu0
        %4206 = vmatprep.mubr.bf16.mxu0 0
        %4207 = vmatmul.mubr.bf16.gmra.mxu0 %v4092
        %v4208 = vpop.f32.mrf.mxu0
        %v4209 = vadd.f32 0.0, %v4208
        %v4210 = vpop.f32.mrf.mxu0
        %v4211 = vpop.f32.mrf.mxu0
        %v4212 = vadd.f32 0.0, %v4211
        %v4213 = vpop.f32.mrf.mxu0
        %4214 = vmatprep.mubr.bf16.mxu0 0
        %4215 = vmatmul.mubr.bf16.gmra.mxu0 %v4095
        %v4216 = vpop.f32.mrf.mxu0
        %v4217 = vadd.f32 0.0, %v4216
        %v4218 = vpop.f32.mrf.mxu0
        %v4219 = vpop.f32.mrf.mxu0
        %v4220 = vadd.f32 0.0, %v4219
        %v4221 = vpop.f32.mrf.mxu0
        %4222 = vmatprep.mubr.bf16.mxu0 0
        %4223 = vmatmul.mubr.bf16.gmra.mxu0 %v4098
        %v4224 = vpop.f32.mrf.mxu0
        %v4225 = vadd.f32 0.0, %v4224
        %v4226 = vpop.f32.mrf.mxu0
        %v4227 = vpop.f32.mrf.mxu0
        %v4228 = vadd.f32 0.0, %v4227
        %v4229 = vpop.f32.mrf.mxu0
        %4230 = vmatprep.mubr.bf16.mxu0 0
        %4231 = vmatmul.mubr.bf16.gmra.mxu0 %v4101
        %v4232 = vpop.f32.mrf.mxu0
        %v4233 = vadd.f32 0.0, %v4232
        %v4234 = vpop.f32.mrf.mxu0
        %v4235 = vpop.f32.mrf.mxu0
        %v4236 = vadd.f32 0.0, %v4235
        %v4237 = vpop.f32.mrf.mxu0
        %4238 = vmatprep.mubr.bf16.mxu0 0
        %4239 = vmatmul.mubr.bf16.gmra.mxu0 %v4104
        %v4240 = vpop.f32.mrf.mxu0
        %v4241 = vadd.f32 0.0, %v4240
        %v4242 = vpop.f32.mrf.mxu0
        %v4243 = vpop.f32.mrf.mxu0
        %v4244 = vadd.f32 0.0, %v4243
        %v4245 = vpop.f32.mrf.mxu0
        %4246 = vmatprep.mubr.bf16.mxu0 0
        %4247 = vmatmul.mubr.bf16.gmra.mxu0 %v4107
        %v4248 = vpop.f32.mrf.mxu0
        %v4249 = vadd.f32 0.0, %v4248
        %v4250 = vpop.f32.mrf.mxu0
        %v4251 = vpop.f32.mrf.mxu0
        %v4252 = vadd.f32 0.0, %v4251
        %v4253 = vpop.f32.mrf.mxu0
        %4254 = vmatprep.mubr.bf16.mxu0 0
        %4255 = vmatmul.mubr.bf16.gmra.mxu0 %v4110
        %v4256 = vpop.f32.mrf.mxu0
        %v4257 = vadd.f32 0.0, %v4256
        %v4258 = vpop.f32.mrf.mxu0
        %v4259 = vpop.f32.mrf.mxu0
        %v4260 = vadd.f32 0.0, %v4259
        %v4261 = vpop.f32.mrf.mxu0
        %4262 = vmatprep.mubr.bf16.mxu0 0
        %4263 = vmatmul.mubr.bf16.gmra.mxu0 %v4113
        %v4264 = vpop.f32.mrf.mxu0
        %v4265 = vadd.f32 0.0, %v4264
        %v4266 = vpop.f32.mrf.mxu0
        %v4267 = vpop.f32.mrf.mxu0
        %v4268 = vadd.f32 0.0, %v4267
        %v4269 = vpop.f32.mrf.mxu0
        %4270 = vmatprep.mubr.bf16.mxu0 0
        %4271 = vmatmul.mubr.bf16.gmra.mxu0 %v4116
        %v4272 = vpop.f32.mrf.mxu0
        %v4273 = vadd.f32 0.0, %v4272
        %v4274 = vpop.f32.mrf.mxu0
        %v4275 = vpop.f32.mrf.mxu0
        %v4276 = vadd.f32 0.0, %v4275
        %v4277 = vpop.f32.mrf.mxu0
        %4278 = vdwg.mxu0
        %v4279 = vadd.f32 %v3784, %v4153
        %v4280 = vadd.f32 %v3787, %v4156
        %v4281 = vadd.f32 %v3792, %v4161
        %v4282 = vadd.f32 %v3795, %v4164
        %v4283 = vadd.f32 %v3800, %v4169
        %v4284 = vadd.f32 %v3803, %v4172
        %v4285 = vadd.f32 %v3808, %v4177
        %v4286 = vadd.f32 %v3811, %v4180
        %v4287 = vadd.f32 %v3816, %v4185
        %v4288 = vadd.f32 %v3819, %v4188
        %v4289 = vadd.f32 %v3824, %v4193
        %v4290 = vadd.f32 %v3827, %v4196
        %v4291 = vadd.f32 %v3832, %v4201
        %v4292 = vadd.f32 %v3835, %v4204
        %v4293 = vadd.f32 %v3840, %v4209
        %v4294 = vadd.f32 %v3843, %v4212
        %v4295 = vadd.f32 %v3848, %v4217
        %v4296 = vadd.f32 %v3851, %v4220
        %v4297 = vadd.f32 %v3856, %v4225
        %v4298 = vadd.f32 %v3859, %v4228
        %v4299 = vadd.f32 %v3864, %v4233
        %v4300 = vadd.f32 %v3867, %v4236
        %v4301 = vadd.f32 %v3872, %v4241
        %v4302 = vadd.f32 %v3875, %v4244
        %v4303 = vadd.f32 %v3880, %v4249
        %v4304 = vadd.f32 %v3883, %v4252
        %v4305 = vadd.f32 %v3888, %v4257
        %v4306 = vadd.f32 %v3891, %v4260
        %v4307 = vadd.f32 %v3896, %v4265
        %v4308 = vadd.f32 %v3899, %v4268
        %v4309 = vadd.f32 %v3904, %v4273
        %v4310 = vadd.f32 %v3907, %v4276
        %v4311 = vpack.c.bf16 %v3160, %v3158
        %v4312 = vpack.c.bf16 %v3164, %v3162
        %v4313 = vpack.c.bf16 %v3168, %v3166
        %v4314 = vpack.c.bf16 %v3172, %v3170
        %v4315 = vpack.c.bf16 %v3180, %v3178
        %v4316 = vpack.c.bf16 %v3184, %v3182
        %v4317 = vpack.c.bf16 %v3188, %v3186
        %v4318 = vpack.c.bf16 %v3192, %v3190
        %v4319 = vpack.c.bf16 %v3200, %v3198
        %v4320 = vpack.c.bf16 %v3204, %v3202
        %v4321 = vpack.c.bf16 %v3208, %v3206
        %v4322 = vpack.c.bf16 %v3212, %v3210
        %v4323 = vpack.c.bf16 %v3220, %v3218
        %v4324 = vpack.c.bf16 %v3224, %v3222
        %v4325 = vpack.c.bf16 %v3228, %v3226
        %v4326 = vpack.c.bf16 %v3232, %v3230
        %v4327 = vld [vmem:[%s1380] sm:$0xf]
        %v4328 = vld [vmem:[%s1380 + $0x4] sm:$0xf]
        %v4329 = vld [vmem:[%s1380 + $0x8] sm:$0xf]
        %v4330 = vld [vmem:[%s1380 + $0xc] sm:$0xf]
        %v4335 = vunpack.c.l.b16 %v4327
        %v4336 = vunpack.c.l.b16 %v4328
        %v4337 = vunpack.c.l.b16 %v4329
        %v4338 = vunpack.c.l.b16 %v4330
        %v4339 = vpack.c.b16 %v4336, %v4335
        %v4340 = vpack.c.b16 %v4338, %v4337
        %v4344 = vsel %vm530, %v4311, 0
        %v4347 = vsel %vm530, %v4312, 0
        %v4350 = vsel %vm530, %v4313, 0
        %v4353 = vsel %vm530, %v4314, 0
        %v4356 = vsel %vm530, %v4315, 0
        %v4359 = vsel %vm530, %v4316, 0
        %v4362 = vsel %vm530, %v4317, 0
        %v4365 = vsel %vm530, %v4318, 0
        %v4368 = vsel %vm530, %v4319, 0
        %v4371 = vsel %vm530, %v4320, 0
        %v4374 = vsel %vm530, %v4321, 0
        %v4377 = vsel %vm530, %v4322, 0
        %v4380 = vsel %vm530, %v4323, 0
        %v4383 = vsel %vm530, %v4324, 0
        %v4386 = vsel %vm530, %v4325, 0
        %v4389 = vsel %vm530, %v4326, 0
        %4391 = vmatprep.subr.bf16.mxu0 0
        %4392 = vmatpush1.bf16.msra.mxu0 0
        %4393 = vmatprep.subr.bf16.mxu0 0
        %4394 = vmatpush1.bf16.msra.mxu0 0
        %4395 = vmatprep.subr.bf16.mxu0 0
        %4396 = vmatpush1.bf16.msra.mxu0 0
        %4397 = vmatprep.subr.bf16.mxu0 0
        %4398 = vmatpush1.bf16.msra.mxu0 0
        %4399 = vmatprep.subr.bf16.mxu0 0
        %4400 = vmatpush1.bf16.msra.mxu0 0
        %4401 = vmatprep.subr.bf16.mxu0 0
        %4402 = vmatpush1.bf16.msra.mxu0 0
        %4403 = vmatprep.subr.bf16.mxu0 0
        %4404 = vmatpush1.bf16.msra.mxu0 %v4340
        %4405 = vmatprep.subr.bf16.mxu0 0
        %4406 = vmatpush1.bf16.msra.mxu0 %v4339
        %4407 = vmatprep.subr.bf16.mxu0 0
        %4408 = vmatpush2.bf16.msra.mxu0 0
        %4409 = vmatprep.subr.bf16.mxu0 0
        %4410 = vmatpush2.bf16.msra.mxu0 0
        %4411 = vmatprep.subr.bf16.mxu0 0
        %4412 = vmatpush2.bf16.msra.mxu0 0
        %4413 = vmatprep.subr.bf16.mxu0 0
        %4414 = vmatpush2.bf16.msra.mxu0 0
        %4415 = vmatprep.subr.bf16.mxu0 0
        %4416 = vmatpush2.bf16.msra.mxu0 0
        %4417 = vmatprep.subr.bf16.mxu0 0
        %4418 = vmatpush2.bf16.msra.mxu0 0
        %4419 = vmatprep.subr.bf16.mxu0 0
        %4420 = vmatpush2.bf16.msra.mxu0 0
        %4421 = vmatprep.subr.bf16.mxu0 0
        %4422 = vmatpush2.bf16.msra.mxu0 0
        %4423 = vmatprep.mubr.bf16.mxu0 0
        %4424 = vmatmul.mubr.bf16.gmra.mxu0 %v4344
        %v4425 = vpop.f32.mrf.mxu0
        %v4426 = vadd.f32 0.0, %v4425
        %v4427 = vpop.f32.mrf.mxu0
        %v4428 = vpop.f32.mrf.mxu0
        %v4429 = vadd.f32 0.0, %v4428
        %v4430 = vpop.f32.mrf.mxu0
        %4431 = vmatprep.mubr.bf16.mxu0 0
        %4432 = vmatmul.mubr.bf16.gmra.mxu0 %v4347
        %v4433 = vpop.f32.mrf.mxu0
        %v4434 = vadd.f32 0.0, %v4433
        %v4435 = vpop.f32.mrf.mxu0
        %v4436 = vpop.f32.mrf.mxu0
        %v4437 = vadd.f32 0.0, %v4436
        %v4438 = vpop.f32.mrf.mxu0
        %4439 = vmatprep.mubr.bf16.mxu0 0
        %4440 = vmatmul.mubr.bf16.gmra.mxu0 %v4350
        %v4441 = vpop.f32.mrf.mxu0
        %v4442 = vadd.f32 0.0, %v4441
        %v4443 = vpop.f32.mrf.mxu0
        %v4444 = vpop.f32.mrf.mxu0
        %v4445 = vadd.f32 0.0, %v4444
        %v4446 = vpop.f32.mrf.mxu0
        %4447 = vmatprep.mubr.bf16.mxu0 0
        %4448 = vmatmul.mubr.bf16.gmra.mxu0 %v4353
        %v4449 = vpop.f32.mrf.mxu0
        %v4450 = vadd.f32 0.0, %v4449
        %v4451 = vpop.f32.mrf.mxu0
        %v4452 = vpop.f32.mrf.mxu0
        %v4453 = vadd.f32 0.0, %v4452
        %v4454 = vpop.f32.mrf.mxu0
        %4455 = vmatprep.mubr.bf16.mxu0 0
        %4456 = vmatmul.mubr.bf16.gmra.mxu0 %v4356
        %v4457 = vpop.f32.mrf.mxu0
        %v4458 = vadd.f32 0.0, %v4457
        %v4459 = vpop.f32.mrf.mxu0
        %v4460 = vpop.f32.mrf.mxu0
        %v4461 = vadd.f32 0.0, %v4460
        %v4462 = vpop.f32.mrf.mxu0
        %4463 = vmatprep.mubr.bf16.mxu0 0
        %4464 = vmatmul.mubr.bf16.gmra.mxu0 %v4359
        %v4465 = vpop.f32.mrf.mxu0
        %v4466 = vadd.f32 0.0, %v4465
        %v4467 = vpop.f32.mrf.mxu0
        %v4468 = vpop.f32.mrf.mxu0
        %v4469 = vadd.f32 0.0, %v4468
        %v4470 = vpop.f32.mrf.mxu0
        %4471 = vmatprep.mubr.bf16.mxu0 0
        %4472 = vmatmul.mubr.bf16.gmra.mxu0 %v4362
        %v4473 = vpop.f32.mrf.mxu0
        %v4474 = vadd.f32 0.0, %v4473
        %v4475 = vpop.f32.mrf.mxu0
        %v4476 = vpop.f32.mrf.mxu0
        %v4477 = vadd.f32 0.0, %v4476
        %v4478 = vpop.f32.mrf.mxu0
        %4479 = vmatprep.mubr.bf16.mxu0 0
        %4480 = vmatmul.mubr.bf16.gmra.mxu0 %v4365
        %v4481 = vpop.f32.mrf.mxu0
        %v4482 = vadd.f32 0.0, %v4481
        %v4483 = vpop.f32.mrf.mxu0
        %v4484 = vpop.f32.mrf.mxu0
        %v4485 = vadd.f32 0.0, %v4484
        %v4486 = vpop.f32.mrf.mxu0
        %4487 = vmatprep.mubr.bf16.mxu0 0
        %4488 = vmatmul.mubr.bf16.gmra.mxu0 %v4368
        %v4489 = vpop.f32.mrf.mxu0
        %v4490 = vadd.f32 0.0, %v4489
        %v4491 = vpop.f32.mrf.mxu0
        %v4492 = vpop.f32.mrf.mxu0
        %v4493 = vadd.f32 0.0, %v4492
        %v4494 = vpop.f32.mrf.mxu0
        %4495 = vmatprep.mubr.bf16.mxu0 0
        %4496 = vmatmul.mubr.bf16.gmra.mxu0 %v4371
        %v4497 = vpop.f32.mrf.mxu0
        %v4498 = vadd.f32 0.0, %v4497
        %v4499 = vpop.f32.mrf.mxu0
        %v4500 = vpop.f32.mrf.mxu0
        %v4501 = vadd.f32 0.0, %v4500
        %v4502 = vpop.f32.mrf.mxu0
        %4503 = vmatprep.mubr.bf16.mxu0 0
        %4504 = vmatmul.mubr.bf16.gmra.mxu0 %v4374
        %v4505 = vpop.f32.mrf.mxu0
        %v4506 = vadd.f32 0.0, %v4505
        %v4507 = vpop.f32.mrf.mxu0
        %v4508 = vpop.f32.mrf.mxu0
        %v4509 = vadd.f32 0.0, %v4508
        %v4510 = vpop.f32.mrf.mxu0
        %4511 = vmatprep.mubr.bf16.mxu0 0
        %4512 = vmatmul.mubr.bf16.gmra.mxu0 %v4377
        %v4513 = vpop.f32.mrf.mxu0
        %v4514 = vadd.f32 0.0, %v4513
        %v4515 = vpop.f32.mrf.mxu0
        %v4516 = vpop.f32.mrf.mxu0
        %v4517 = vadd.f32 0.0, %v4516
        %v4518 = vpop.f32.mrf.mxu0
        %4519 = vmatprep.mubr.bf16.mxu0 0
        %4520 = vmatmul.mubr.bf16.gmra.mxu0 %v4380
        %v4521 = vpop.f32.mrf.mxu0
        %v4522 = vadd.f32 0.0, %v4521
        %v4523 = vpop.f32.mrf.mxu0
        %v4524 = vpop.f32.mrf.mxu0
        %v4525 = vadd.f32 0.0, %v4524
        %v4526 = vpop.f32.mrf.mxu0
        %4527 = vmatprep.mubr.bf16.mxu0 0
        %4528 = vmatmul.mubr.bf16.gmra.mxu0 %v4383
        %v4529 = vpop.f32.mrf.mxu0
        %v4530 = vadd.f32 0.0, %v4529
        %v4531 = vpop.f32.mrf.mxu0
        %v4532 = vpop.f32.mrf.mxu0
        %v4533 = vadd.f32 0.0, %v4532
        %v4534 = vpop.f32.mrf.mxu0
        %4535 = vmatprep.mubr.bf16.mxu0 0
        %4536 = vmatmul.mubr.bf16.gmra.mxu0 %v4386
        %v4537 = vpop.f32.mrf.mxu0
        %v4538 = vadd.f32 0.0, %v4537
        %v4539 = vpop.f32.mrf.mxu0
        %v4540 = vpop.f32.mrf.mxu0
        %v4541 = vadd.f32 0.0, %v4540
        %v4542 = vpop.f32.mrf.mxu0
        %4543 = vmatprep.mubr.bf16.mxu0 0
        %4544 = vmatmul.mubr.bf16.gmra.mxu0 %v4389
        %v4545 = vpop.f32.mrf.mxu0
        %v4546 = vadd.f32 0.0, %v4545
        %v4547 = vpop.f32.mrf.mxu0
        %v4548 = vpop.f32.mrf.mxu0
        %v4549 = vadd.f32 0.0, %v4548
        %v4550 = vpop.f32.mrf.mxu0
        %4551 = vdwg.mxu0
        %v4552 = vadd.f32 %v4279, %v4426
        %v4553 = vadd.f32 %v4280, %v4429
        %v4554 = vadd.f32 %v4281, %v4434
        %v4555 = vadd.f32 %v4282, %v4437
        %v4556 = vadd.f32 %v4283, %v4442
        %v4557 = vadd.f32 %v4284, %v4445
        %v4558 = vadd.f32 %v4285, %v4450
        %v4559 = vadd.f32 %v4286, %v4453
        %v4560 = vadd.f32 %v4287, %v4458
        %v4561 = vadd.f32 %v4288, %v4461
        %v4562 = vadd.f32 %v4289, %v4466
        %v4563 = vadd.f32 %v4290, %v4469
        %v4564 = vadd.f32 %v4291, %v4474
        %v4565 = vadd.f32 %v4292, %v4477
        %v4566 = vadd.f32 %v4293, %v4482
        %v4567 = vadd.f32 %v4294, %v4485
        %v4568 = vadd.f32 %v4295, %v4490
        %v4569 = vadd.f32 %v4296, %v4493
        %v4570 = vadd.f32 %v4297, %v4498
        %v4571 = vadd.f32 %v4298, %v4501
        %v4572 = vadd.f32 %v4299, %v4506
        %v4573 = vadd.f32 %v4300, %v4509
        %v4574 = vadd.f32 %v4301, %v4514
        %v4575 = vadd.f32 %v4302, %v4517
        %v4576 = vadd.f32 %v4303, %v4522
        %v4577 = vadd.f32 %v4304, %v4525
        %v4578 = vadd.f32 %v4305, %v4530
        %v4579 = vadd.f32 %v4306, %v4533
        %v4580 = vadd.f32 %v4307, %v4538
        %v4581 = vadd.f32 %v4308, %v4541
        %v4582 = vadd.f32 %v4309, %v4546
        %v4583 = vadd.f32 %v4310, %v4549
        %v4592 = vrot.slane %v3172, 1
        %v4593 = vrot.slane %v3173, 1
        %v4594 = vsel %vm324, %v4592, %v4593
        %v4595 = vrot.slane %v3192, 1
        %v4596 = vrot.slane %v3193, 1
        %v4597 = vsel %vm324, %v4595, %v4596
        %v4598 = vrot.slane %v3212, 1
        %v4599 = vrot.slane %v3213, 1
        %v4600 = vsel %vm324, %v4598, %v4599
        %v4601 = vrot.slane %v3232, 1
        %v4602 = vrot.slane %v3233, 1
        %v4603 = vsel %vm324, %v4601, %v4602
        %v4608 = vpack.c.bf16 %v3328, %v3325
        %v4609 = vpack.c.bf16 %v3334, %v3331
        %v4610 = vpack.c.bf16 %v3340, %v3337
        %v4611 = vpack.c.bf16 %v4594, %v3343
        %v4612 = vpack.c.bf16 %v3352, %v3349
        %v4613 = vpack.c.bf16 %v3358, %v3355
        %v4614 = vpack.c.bf16 %v3364, %v3361
        %v4615 = vpack.c.bf16 %v4597, %v3367
        %v4616 = vpack.c.bf16 %v3376, %v3373
        %v4617 = vpack.c.bf16 %v3382, %v3379
        %v4618 = vpack.c.bf16 %v3388, %v3385
        %v4619 = vpack.c.bf16 %v4600, %v3391
        %v4620 = vpack.c.bf16 %v3400, %v3397
        %v4621 = vpack.c.bf16 %v3406, %v3403
        %v4622 = vpack.c.bf16 %v3412, %v3409
        %v4623 = vpack.c.bf16 %v4603, %v3415
        %v4624 = vld [vmem:[%s1654] sm:$0xf]
        %v4625 = vld [vmem:[%s1654 + $0x4] sm:$0xf]
        %v4626 = vld [vmem:[%s1654 + $0x8] sm:$0xf]
        %v4627 = vld [vmem:[%s1654 + $0xc] sm:$0xf]
        %v4632 = vunpack.c.l.b16 %v4624
        %v4633 = vunpack.c.l.b16 %v4625
        %v4634 = vunpack.c.l.b16 %v4626
        %v4635 = vunpack.c.l.b16 %v4627
        %v4636 = vpack.c.b16 %v4633, %v4632
        %v4637 = vpack.c.b16 %v4635, %v4634
        %v4641 = vsel %vm530, %v4608, 0
        %v4644 = vsel %vm530, %v4609, 0
        %v4647 = vsel %vm530, %v4610, 0
        %v4650 = vsel %vm530, %v4611, 0
        %v4653 = vsel %vm530, %v4612, 0
        %v4656 = vsel %vm530, %v4613, 0
        %v4659 = vsel %vm530, %v4614, 0
        %v4662 = vsel %vm530, %v4615, 0
        %v4665 = vsel %vm530, %v4616, 0
        %v4668 = vsel %vm530, %v4617, 0
        %v4671 = vsel %vm530, %v4618, 0
        %v4674 = vsel %vm530, %v4619, 0
        %v4677 = vsel %vm530, %v4620, 0
        %v4680 = vsel %vm530, %v4621, 0
        %v4683 = vsel %vm530, %v4622, 0
        %v4686 = vsel %vm530, %v4623, 0
        %4688 = vmatprep.subr.bf16.mxu0 0
        %4689 = vmatpush1.bf16.msra.mxu0 0
        %4690 = vmatprep.subr.bf16.mxu0 0
        %4691 = vmatpush1.bf16.msra.mxu0 0
        %4692 = vmatprep.subr.bf16.mxu0 0
        %4693 = vmatpush1.bf16.msra.mxu0 0
        %4694 = vmatprep.subr.bf16.mxu0 0
        %4695 = vmatpush1.bf16.msra.mxu0 0
        %4696 = vmatprep.subr.bf16.mxu0 0
        %4697 = vmatpush1.bf16.msra.mxu0 0
        %4698 = vmatprep.subr.bf16.mxu0 0
        %4699 = vmatpush1.bf16.msra.mxu0 0
        %4700 = vmatprep.subr.bf16.mxu0 0
        %4701 = vmatpush1.bf16.msra.mxu0 %v4637
        %4702 = vmatprep.subr.bf16.mxu0 0
        %4703 = vmatpush1.bf16.msra.mxu0 %v4636
        %4704 = vmatprep.subr.bf16.mxu0 0
        %4705 = vmatpush2.bf16.msra.mxu0 0
        %4706 = vmatprep.subr.bf16.mxu0 0
        %4707 = vmatpush2.bf16.msra.mxu0 0
        %4708 = vmatprep.subr.bf16.mxu0 0
        %4709 = vmatpush2.bf16.msra.mxu0 0
        %4710 = vmatprep.subr.bf16.mxu0 0
        %4711 = vmatpush2.bf16.msra.mxu0 0
        %4712 = vmatprep.subr.bf16.mxu0 0
        %4713 = vmatpush2.bf16.msra.mxu0 0
        %4714 = vmatprep.subr.bf16.mxu0 0
        %4715 = vmatpush2.bf16.msra.mxu0 0
        %4716 = vmatprep.subr.bf16.mxu0 0
        %4717 = vmatpush2.bf16.msra.mxu0 0
        %4718 = vmatprep.subr.bf16.mxu0 0
        %4719 = vmatpush2.bf16.msra.mxu0 0
        %4720 = vmatprep.mubr.bf16.mxu0 0
        %4721 = vmatmul.mubr.bf16.gmra.mxu0 %v4641
        %v4722 = vpop.f32.mrf.mxu0
        %v4723 = vadd.f32 0.0, %v4722
        %v4724 = vpop.f32.mrf.mxu0
        %v4725 = vpop.f32.mrf.mxu0
        %v4726 = vadd.f32 0.0, %v4725
        %v4727 = vpop.f32.mrf.mxu0
        %4728 = vmatprep.mubr.bf16.mxu0 0
        %4729 = vmatmul.mubr.bf16.gmra.mxu0 %v4644
        %v4730 = vpop.f32.mrf.mxu0
        %v4731 = vadd.f32 0.0, %v4730
        %v4732 = vpop.f32.mrf.mxu0
        %v4733 = vpop.f32.mrf.mxu0
        %v4734 = vadd.f32 0.0, %v4733
        %v4735 = vpop.f32.mrf.mxu0
        %4736 = vmatprep.mubr.bf16.mxu0 0
        %4737 = vmatmul.mubr.bf16.gmra.mxu0 %v4647
        %v4738 = vpop.f32.mrf.mxu0
        %v4739 = vadd.f32 0.0, %v4738
        %v4740 = vpop.f32.mrf.mxu0
        %v4741 = vpop.f32.mrf.mxu0
        %v4742 = vadd.f32 0.0, %v4741
        %v4743 = vpop.f32.mrf.mxu0
        %4744 = vmatprep.mubr.bf16.mxu0 0
        %4745 = vmatmul.mubr.bf16.gmra.mxu0 %v4650
        %v4746 = vpop.f32.mrf.mxu0
        %v4747 = vadd.f32 0.0, %v4746
        %v4748 = vpop.f32.mrf.mxu0
        %v4749 = vpop.f32.mrf.mxu0
        %v4750 = vadd.f32 0.0, %v4749
        %v4751 = vpop.f32.mrf.mxu0
        %4752 = vmatprep.mubr.bf16.mxu0 0
        %4753 = vmatmul.mubr.bf16.gmra.mxu0 %v4653
        %v4754 = vpop.f32.mrf.mxu0
        %v4755 = vadd.f32 0.0, %v4754
        %v4756 = vpop.f32.mrf.mxu0
        %v4757 = vpop.f32.mrf.mxu0
        %v4758 = vadd.f32 0.0, %v4757
        %v4759 = vpop.f32.mrf.mxu0
        %4760 = vmatprep.mubr.bf16.mxu0 0
        %4761 = vmatmul.mubr.bf16.gmra.mxu0 %v4656
        %v4762 = vpop.f32.mrf.mxu0
        %v4763 = vadd.f32 0.0, %v4762
        %v4764 = vpop.f32.mrf.mxu0
        %v4765 = vpop.f32.mrf.mxu0
        %v4766 = vadd.f32 0.0, %v4765
        %v4767 = vpop.f32.mrf.mxu0
        %4768 = vmatprep.mubr.bf16.mxu0 0
        %4769 = vmatmul.mubr.bf16.gmra.mxu0 %v4659
        %v4770 = vpop.f32.mrf.mxu0
        %v4771 = vadd.f32 0.0, %v4770
        %v4772 = vpop.f32.mrf.mxu0
        %v4773 = vpop.f32.mrf.mxu0
        %v4774 = vadd.f32 0.0, %v4773
        %v4775 = vpop.f32.mrf.mxu0
        %4776 = vmatprep.mubr.bf16.mxu0 0
        %4777 = vmatmul.mubr.bf16.gmra.mxu0 %v4662
        %v4778 = vpop.f32.mrf.mxu0
        %v4779 = vadd.f32 0.0, %v4778
        %v4780 = vpop.f32.mrf.mxu0
        %v4781 = vpop.f32.mrf.mxu0
        %v4782 = vadd.f32 0.0, %v4781
        %v4783 = vpop.f32.mrf.mxu0
        %4784 = vmatprep.mubr.bf16.mxu0 0
        %4785 = vmatmul.mubr.bf16.gmra.mxu0 %v4665
        %v4786 = vpop.f32.mrf.mxu0
        %v4787 = vadd.f32 0.0, %v4786
        %v4788 = vpop.f32.mrf.mxu0
        %v4789 = vpop.f32.mrf.mxu0
        %v4790 = vadd.f32 0.0, %v4789
        %v4791 = vpop.f32.mrf.mxu0
        %4792 = vmatprep.mubr.bf16.mxu0 0
        %4793 = vmatmul.mubr.bf16.gmra.mxu0 %v4668
        %v4794 = vpop.f32.mrf.mxu0
        %v4795 = vadd.f32 0.0, %v4794
        %v4796 = vpop.f32.mrf.mxu0
        %v4797 = vpop.f32.mrf.mxu0
        %v4798 = vadd.f32 0.0, %v4797
        %v4799 = vpop.f32.mrf.mxu0
        %4800 = vmatprep.mubr.bf16.mxu0 0
        %4801 = vmatmul.mubr.bf16.gmra.mxu0 %v4671
        %v4802 = vpop.f32.mrf.mxu0
        %v4803 = vadd.f32 0.0, %v4802
        %v4804 = vpop.f32.mrf.mxu0
        %v4805 = vpop.f32.mrf.mxu0
        %v4806 = vadd.f32 0.0, %v4805
        %v4807 = vpop.f32.mrf.mxu0
        %4808 = vmatprep.mubr.bf16.mxu0 0
        %4809 = vmatmul.mubr.bf16.gmra.mxu0 %v4674
        %v4810 = vpop.f32.mrf.mxu0
        %v4811 = vadd.f32 0.0, %v4810
        %v4812 = vpop.f32.mrf.mxu0
        %v4813 = vpop.f32.mrf.mxu0
        %v4814 = vadd.f32 0.0, %v4813
        %v4815 = vpop.f32.mrf.mxu0
        %4816 = vmatprep.mubr.bf16.mxu0 0
        %4817 = vmatmul.mubr.bf16.gmra.mxu0 %v4677
        %v4818 = vpop.f32.mrf.mxu0
        %v4819 = vadd.f32 0.0, %v4818
        %v4820 = vpop.f32.mrf.mxu0
        %v4821 = vpop.f32.mrf.mxu0
        %v4822 = vadd.f32 0.0, %v4821
        %v4823 = vpop.f32.mrf.mxu0
        %4824 = vmatprep.mubr.bf16.mxu0 0
        %4825 = vmatmul.mubr.bf16.gmra.mxu0 %v4680
        %v4826 = vpop.f32.mrf.mxu0
        %v4827 = vadd.f32 0.0, %v4826
        %v4828 = vpop.f32.mrf.mxu0
        %v4829 = vpop.f32.mrf.mxu0
        %v4830 = vadd.f32 0.0, %v4829
        %v4831 = vpop.f32.mrf.mxu0
        %4832 = vmatprep.mubr.bf16.mxu0 0
        %4833 = vmatmul.mubr.bf16.gmra.mxu0 %v4683
        %v4834 = vpop.f32.mrf.mxu0
        %v4835 = vadd.f32 0.0, %v4834
        %v4836 = vpop.f32.mrf.mxu0
        %v4837 = vpop.f32.mrf.mxu0
        %v4838 = vadd.f32 0.0, %v4837
        %v4839 = vpop.f32.mrf.mxu0
        %4840 = vmatprep.mubr.bf16.mxu0 0
        %4841 = vmatmul.mubr.bf16.gmra.mxu0 %v4686
        %v4842 = vpop.f32.mrf.mxu0
        %v4843 = vadd.f32 0.0, %v4842
        %v4844 = vpop.f32.mrf.mxu0
        %v4845 = vpop.f32.mrf.mxu0
        %v4846 = vadd.f32 0.0, %v4845
        %v4847 = vpop.f32.mrf.mxu0
        %4848 = vdwg.mxu0
        %v4849 = vadd.f32 %v4552, %v4723
        %v4850 = vadd.f32 %v4553, %v4726
        %v4851 = vadd.f32 %v4554, %v4731
        %v4852 = vadd.f32 %v4555, %v4734
        %v4853 = vadd.f32 %v4556, %v4739
        %v4854 = vadd.f32 %v4557, %v4742
        %v4855 = vadd.f32 %v4558, %v4747
        %v4856 = vadd.f32 %v4559, %v4750
        %v4857 = vadd.f32 %v4560, %v4755
        %v4858 = vadd.f32 %v4561, %v4758
        %v4859 = vadd.f32 %v4562, %v4763
        %v4860 = vadd.f32 %v4563, %v4766
        %v4861 = vadd.f32 %v4564, %v4771
        %v4862 = vadd.f32 %v4565, %v4774
        %v4863 = vadd.f32 %v4566, %v4779
        %v4864 = vadd.f32 %v4567, %v4782
        %v4865 = vadd.f32 %v4568, %v4787
        %v4866 = vadd.f32 %v4569, %v4790
        %v4867 = vadd.f32 %v4570, %v4795
        %v4868 = vadd.f32 %v4571, %v4798
        %v4869 = vadd.f32 %v4572, %v4803
        %v4870 = vadd.f32 %v4573, %v4806
        %v4871 = vadd.f32 %v4574, %v4811
        %v4872 = vadd.f32 %v4575, %v4814
        %v4873 = vadd.f32 %v4576, %v4819
        %v4874 = vadd.f32 %v4577, %v4822
        %v4875 = vadd.f32 %v4578, %v4827
        %v4876 = vadd.f32 %v4579, %v4830
        %v4877 = vadd.f32 %v4580, %v4835
        %v4878 = vadd.f32 %v4581, %v4838
        %v4879 = vadd.f32 %v4582, %v4843
        %v4880 = vadd.f32 %v4583, %v4846
        %v4881 = vrot.slane %v3172, 2
        %v4882 = vrot.slane %v3173, 2
        %v4883 = vsel %vm961, %v4881, %v4882
        %v4884 = vrot.slane %v3192, 2
        %v4885 = vrot.slane %v3193, 2
        %v4886 = vsel %vm961, %v4884, %v4885
        %v4887 = vrot.slane %v3212, 2
        %v4888 = vrot.slane %v3213, 2
        %v4889 = vsel %vm961, %v4887, %v4888
        %v4890 = vrot.slane %v3232, 2
        %v4891 = vrot.slane %v3233, 2
        %v4892 = vsel %vm961, %v4890, %v4891
        %v4897 = vpack.c.bf16 %v3918, %v3915
        %v4898 = vpack.c.bf16 %v3924, %v3921
        %v4899 = vpack.c.bf16 %v3930, %v3927
        %v4900 = vpack.c.bf16 %v4883, %v3933
        %v4901 = vpack.c.bf16 %v3942, %v3939
        %v4902 = vpack.c.bf16 %v3948, %v3945
        %v4903 = vpack.c.bf16 %v3954, %v3951
        %v4904 = vpack.c.bf16 %v4886, %v3957
        %v4905 = vpack.c.bf16 %v3966, %v3963
        %v4906 = vpack.c.bf16 %v3972, %v3969
        %v4907 = vpack.c.bf16 %v3978, %v3975
        %v4908 = vpack.c.bf16 %v4889, %v3981
        %v4909 = vpack.c.bf16 %v3990, %v3987
        %v4910 = vpack.c.bf16 %v3996, %v3993
        %v4911 = vpack.c.bf16 %v4002, %v3999
        %v4912 = vpack.c.bf16 %v4892, %v4005
        %v4913 = vld [vmem:[%s1944] sm:$0xf]
        %v4914 = vld [vmem:[%s1944 + $0x4] sm:$0xf]
        %v4915 = vld [vmem:[%s1944 + $0x8] sm:$0xf]
        %v4916 = vld [vmem:[%s1944 + $0xc] sm:$0xf]
        %v4921 = vunpack.c.l.b16 %v4913
        %v4922 = vunpack.c.l.b16 %v4914
        %v4923 = vunpack.c.l.b16 %v4915
        %v4924 = vunpack.c.l.b16 %v4916
        %v4925 = vpack.c.b16 %v4922, %v4921
        %v4926 = vpack.c.b16 %v4924, %v4923
        %v4930 = vsel %vm530, %v4897, 0
        %v4933 = vsel %vm530, %v4898, 0
        %v4936 = vsel %vm530, %v4899, 0
        %v4939 = vsel %vm530, %v4900, 0
        %v4942 = vsel %vm530, %v4901, 0
        %v4945 = vsel %vm530, %v4902, 0
        %v4948 = vsel %vm530, %v4903, 0
        %v4951 = vsel %vm530, %v4904, 0
        %v4954 = vsel %vm530, %v4905, 0
        %v4957 = vsel %vm530, %v4906, 0
        %v4960 = vsel %vm530, %v4907, 0
        %v4963 = vsel %vm530, %v4908, 0
        %v4966 = vsel %vm530, %v4909, 0
        %v4969 = vsel %vm530, %v4910, 0
        %v4972 = vsel %vm530, %v4911, 0
        %v4975 = vsel %vm530, %v4912, 0
        %4977 = vmatprep.subr.bf16.mxu0 0
        %4978 = vmatpush1.bf16.msra.mxu0 0
        %4979 = vmatprep.subr.bf16.mxu0 0
        %4980 = vmatpush1.bf16.msra.mxu0 0
        %4981 = vmatprep.subr.bf16.mxu0 0
        %4982 = vmatpush1.bf16.msra.mxu0 0
        %4983 = vmatprep.subr.bf16.mxu0 0
        %4984 = vmatpush1.bf16.msra.mxu0 0
        %4985 = vmatprep.subr.bf16.mxu0 0
        %4986 = vmatpush1.bf16.msra.mxu0 0
        %4987 = vmatprep.subr.bf16.mxu0 0
        %4988 = vmatpush1.bf16.msra.mxu0 0
        %4989 = vmatprep.subr.bf16.mxu0 0
        %4990 = vmatpush1.bf16.msra.mxu0 %v4926
        %4991 = vmatprep.subr.bf16.mxu0 0
        %4992 = vmatpush1.bf16.msra.mxu0 %v4925
        %4993 = vmatprep.subr.bf16.mxu0 0
        %4994 = vmatpush2.bf16.msra.mxu0 0
        %4995 = vmatprep.subr.bf16.mxu0 0
        %4996 = vmatpush2.bf16.msra.mxu0 0
        %4997 = vmatprep.subr.bf16.mxu0 0
        %4998 = vmatpush2.bf16.msra.mxu0 0
        %4999 = vmatprep.subr.bf16.mxu0 0
        %5000 = vmatpush2.bf16.msra.mxu0 0
        %5001 = vmatprep.subr.bf16.mxu0 0
        %5002 = vmatpush2.bf16.msra.mxu0 0
        %5003 = vmatprep.subr.bf16.mxu0 0
        %5004 = vmatpush2.bf16.msra.mxu0 0
        %5005 = vmatprep.subr.bf16.mxu0 0
        %5006 = vmatpush2.bf16.msra.mxu0 0
        %5007 = vmatprep.subr.bf16.mxu0 0
        %5008 = vmatpush2.bf16.msra.mxu0 0
        %5009 = vmatprep.mubr.bf16.mxu0 0
        %5010 = vmatmul.mubr.bf16.gmra.mxu0 %v4930
        %v5011 = vpop.f32.mrf.mxu0
        %v5012 = vadd.f32 0.0, %v5011
        %v5013 = vpop.f32.mrf.mxu0
        %v5014 = vpop.f32.mrf.mxu0
        %v5015 = vadd.f32 0.0, %v5014
        %v5016 = vpop.f32.mrf.mxu0
        %5017 = vmatprep.mubr.bf16.mxu0 0
        %5018 = vmatmul.mubr.bf16.gmra.mxu0 %v4933
        %v5019 = vpop.f32.mrf.mxu0
        %v5020 = vadd.f32 0.0, %v5019
        %v5021 = vpop.f32.mrf.mxu0
        %v5022 = vpop.f32.mrf.mxu0
        %v5023 = vadd.f32 0.0, %v5022
        %v5024 = vpop.f32.mrf.mxu0
        %5025 = vmatprep.mubr.bf16.mxu0 0
        %5026 = vmatmul.mubr.bf16.gmra.mxu0 %v4936
        %v5027 = vpop.f32.mrf.mxu0
        %v5028 = vadd.f32 0.0, %v5027
        %v5029 = vpop.f32.mrf.mxu0
        %v5030 = vpop.f32.mrf.mxu0
        %v5031 = vadd.f32 0.0, %v5030
        %v5032 = vpop.f32.mrf.mxu0
        %5033 = vmatprep.mubr.bf16.mxu0 0
        %5034 = vmatmul.mubr.bf16.gmra.mxu0 %v4939
        %v5035 = vpop.f32.mrf.mxu0
        %v5036 = vadd.f32 0.0, %v5035
        %v5037 = vpop.f32.mrf.mxu0
        %v5038 = vpop.f32.mrf.mxu0
        %v5039 = vadd.f32 0.0, %v5038
        %v5040 = vpop.f32.mrf.mxu0
        %5041 = vmatprep.mubr.bf16.mxu0 0
        %5042 = vmatmul.mubr.bf16.gmra.mxu0 %v4942
        %v5043 = vpop.f32.mrf.mxu0
        %v5044 = vadd.f32 0.0, %v5043
        %v5045 = vpop.f32.mrf.mxu0
        %v5046 = vpop.f32.mrf.mxu0
        %v5047 = vadd.f32 0.0, %v5046
        %v5048 = vpop.f32.mrf.mxu0
        %5049 = vmatprep.mubr.bf16.mxu0 0
        %5050 = vmatmul.mubr.bf16.gmra.mxu0 %v4945
        %v5051 = vpop.f32.mrf.mxu0
        %v5052 = vadd.f32 0.0, %v5051
        %v5053 = vpop.f32.mrf.mxu0
        %v5054 = vpop.f32.mrf.mxu0
        %v5055 = vadd.f32 0.0, %v5054
        %v5056 = vpop.f32.mrf.mxu0
        %5057 = vmatprep.mubr.bf16.mxu0 0
        %5058 = vmatmul.mubr.bf16.gmra.mxu0 %v4948
        %v5059 = vpop.f32.mrf.mxu0
        %v5060 = vadd.f32 0.0, %v5059
        %v5061 = vpop.f32.mrf.mxu0
        %v5062 = vpop.f32.mrf.mxu0
        %v5063 = vadd.f32 0.0, %v5062
        %v5064 = vpop.f32.mrf.mxu0
        %5065 = vmatprep.mubr.bf16.mxu0 0
        %5066 = vmatmul.mubr.bf16.gmra.mxu0 %v4951
        %v5067 = vpop.f32.mrf.mxu0
        %v5068 = vadd.f32 0.0, %v5067
        %v5069 = vpop.f32.mrf.mxu0
        %v5070 = vpop.f32.mrf.mxu0
        %v5071 = vadd.f32 0.0, %v5070
        %v5072 = vpop.f32.mrf.mxu0
        %5073 = vmatprep.mubr.bf16.mxu0 0
        %5074 = vmatmul.mubr.bf16.gmra.mxu0 %v4954
        %v5075 = vpop.f32.mrf.mxu0
        %v5076 = vadd.f32 0.0, %v5075
        %v5077 = vpop.f32.mrf.mxu0
        %v5078 = vpop.f32.mrf.mxu0
        %v5079 = vadd.f32 0.0, %v5078
        %v5080 = vpop.f32.mrf.mxu0
        %5081 = vmatprep.mubr.bf16.mxu0 0
        %5082 = vmatmul.mubr.bf16.gmra.mxu0 %v4957
        %v5083 = vpop.f32.mrf.mxu0
        %v5084 = vadd.f32 0.0, %v5083
        %v5085 = vpop.f32.mrf.mxu0
        %v5086 = vpop.f32.mrf.mxu0
        %v5087 = vadd.f32 0.0, %v5086
        %v5088 = vpop.f32.mrf.mxu0
        %5089 = vmatprep.mubr.bf16.mxu0 0
        %5090 = vmatmul.mubr.bf16.gmra.mxu0 %v4960
        %v5091 = vpop.f32.mrf.mxu0
        %v5092 = vadd.f32 0.0, %v5091
        %v5093 = vpop.f32.mrf.mxu0
        %v5094 = vpop.f32.mrf.mxu0
        %v5095 = vadd.f32 0.0, %v5094
        %v5096 = vpop.f32.mrf.mxu0
        %5097 = vmatprep.mubr.bf16.mxu0 0
        %5098 = vmatmul.mubr.bf16.gmra.mxu0 %v4963
        %v5099 = vpop.f32.mrf.mxu0
        %v5100 = vadd.f32 0.0, %v5099
        %v5101 = vpop.f32.mrf.mxu0
        %v5102 = vpop.f32.mrf.mxu0
        %v5103 = vadd.f32 0.0, %v5102
        %v5104 = vpop.f32.mrf.mxu0
        %5105 = vmatprep.mubr.bf16.mxu0 0
        %5106 = vmatmul.mubr.bf16.gmra.mxu0 %v4966
        %v5107 = vpop.f32.mrf.mxu0
        %v5108 = vadd.f32 0.0, %v5107
        %v5109 = vpop.f32.mrf.mxu0
        %v5110 = vpop.f32.mrf.mxu0
        %v5111 = vadd.f32 0.0, %v5110
        %v5112 = vpop.f32.mrf.mxu0
        %5113 = vmatprep.mubr.bf16.mxu0 0
        %5114 = vmatmul.mubr.bf16.gmra.mxu0 %v4969
        %v5115 = vpop.f32.mrf.mxu0
        %v5116 = vadd.f32 0.0, %v5115
        %v5117 = vpop.f32.mrf.mxu0
        %v5118 = vpop.f32.mrf.mxu0
        %v5119 = vadd.f32 0.0, %v5118
        %v5120 = vpop.f32.mrf.mxu0
        %5121 = vmatprep.mubr.bf16.mxu0 0
        %5122 = vmatmul.mubr.bf16.gmra.mxu0 %v4972
        %v5123 = vpop.f32.mrf.mxu0
        %v5124 = vadd.f32 0.0, %v5123
        %v5125 = vpop.f32.mrf.mxu0
        %v5126 = vpop.f32.mrf.mxu0
        %v5127 = vadd.f32 0.0, %v5126
        %v5128 = vpop.f32.mrf.mxu0
        %5129 = vmatprep.mubr.bf16.mxu0 0
        %5130 = vmatmul.mubr.bf16.gmra.mxu0 %v4975
        %v5131 = vpop.f32.mrf.mxu0
        %v5132 = vadd.f32 0.0, %v5131
        %v5133 = vpop.f32.mrf.mxu0
        %v5134 = vpop.f32.mrf.mxu0
        %v5135 = vadd.f32 0.0, %v5134
        %v5136 = vpop.f32.mrf.mxu0
        %5137 = vdwg.mxu0
        %v5138 = vadd.f32 %v4849, %v5012
        %v5139 = vadd.f32 %v4850, %v5015
        %v5140 = vadd.f32 %v4851, %v5020
        %v5141 = vadd.f32 %v4852, %v5023
        %v5142 = vadd.f32 %v4853, %v5028
        %v5143 = vadd.f32 %v4854, %v5031
        %v5144 = vadd.f32 %v4855, %v5036
        %v5145 = vadd.f32 %v4856, %v5039
        %v5146 = vadd.f32 %v4857, %v5044
        %v5147 = vadd.f32 %v4858, %v5047
        %v5148 = vadd.f32 %v4859, %v5052
        %v5149 = vadd.f32 %v4860, %v5055
        %v5150 = vadd.f32 %v4861, %v5060
        %v5151 = vadd.f32 %v4862, %v5063
        %v5152 = vadd.f32 %v4863, %v5068
        %v5153 = vadd.f32 %v4864, %v5071
        %v5154 = vadd.f32 %v4865, %v5076
        %v5155 = vadd.f32 %v4866, %v5079
        %v5156 = vadd.f32 %v4867, %v5084
        %v5157 = vadd.f32 %v4868, %v5087
        %v5158 = vadd.f32 %v4869, %v5092
        %v5159 = vadd.f32 %v4870, %v5095
        %v5160 = vadd.f32 %v4871, %v5100
        %v5161 = vadd.f32 %v4872, %v5103
        %v5162 = vadd.f32 %v4873, %v5108
        %v5163 = vadd.f32 %v4874, %v5111
        %v5164 = vadd.f32 %v4875, %v5116
        %v5165 = vadd.f32 %v4876, %v5119
        %v5166 = vadd.f32 %v4877, %v5124
        %v5167 = vadd.f32 %v4878, %v5127
        %v5168 = vadd.f32 %v4879, %v5132
        %v5169 = vadd.f32 %v4880, %v5135
        %v5170 = vpack.c.bf16 %v3174, %v3172
        %v5171 = vpack.c.bf16 %v3194, %v3192
        %v5172 = vpack.c.bf16 %v3214, %v3212
        %v5173 = vpack.c.bf16 %v3234, %v3232
        %v5174 = vld [vmem:[%s2206] sm:$0xf]
        %v5175 = vld [vmem:[%s2206 + $0x4] sm:$0xf]
        %v5176 = vld [vmem:[%s2206 + $0x8] sm:$0xf]
        %v5177 = vld [vmem:[%s2206 + $0xc] sm:$0xf]
        %v5182 = vunpack.c.l.b16 %v5174
        %v5183 = vunpack.c.l.b16 %v5175
        %v5184 = vunpack.c.l.b16 %v5176
        %v5185 = vunpack.c.l.b16 %v5177
        %v5186 = vpack.c.b16 %v5183, %v5182
        %v5187 = vpack.c.b16 %v5185, %v5184
        %v5191 = vsel %vm530, %v5170, 0
        %v5194 = vsel %vm530, %v5171, 0
        %v5197 = vsel %vm530, %v5172, 0
        %v5200 = vsel %vm530, %v5173, 0
        %5202 = vmatprep.subr.bf16.mxu0 0
        %5203 = vmatpush1.bf16.msra.mxu0 0
        %5204 = vmatprep.subr.bf16.mxu0 0
        %5205 = vmatpush1.bf16.msra.mxu0 0
        %5206 = vmatprep.subr.bf16.mxu0 0
        %5207 = vmatpush1.bf16.msra.mxu0 0
        %5208 = vmatprep.subr.bf16.mxu0 0
        %5209 = vmatpush1.bf16.msra.mxu0 0
        %5210 = vmatprep.subr.bf16.mxu0 0
        %5211 = vmatpush1.bf16.msra.mxu0 0
        %5212 = vmatprep.subr.bf16.mxu0 0
        %5213 = vmatpush1.bf16.msra.mxu0 0
        %5214 = vmatprep.subr.bf16.mxu0 0
        %5215 = vmatpush1.bf16.msra.mxu0 %v5187
        %5216 = vmatprep.subr.bf16.mxu0 0
        %5217 = vmatpush1.bf16.msra.mxu0 %v5186
        %5218 = vmatprep.subr.bf16.mxu0 0
        %5219 = vmatpush2.bf16.msra.mxu0 0
        %5220 = vmatprep.subr.bf16.mxu0 0
        %5221 = vmatpush2.bf16.msra.mxu0 0
        %5222 = vmatprep.subr.bf16.mxu0 0
        %5223 = vmatpush2.bf16.msra.mxu0 0
        %5224 = vmatprep.subr.bf16.mxu0 0
        %5225 = vmatpush2.bf16.msra.mxu0 0
        %5226 = vmatprep.subr.bf16.mxu0 0
        %5227 = vmatpush2.bf16.msra.mxu0 0
        %5228 = vmatprep.subr.bf16.mxu0 0
        %5229 = vmatpush2.bf16.msra.mxu0 0
        %5230 = vmatprep.subr.bf16.mxu0 0
        %5231 = vmatpush2.bf16.msra.mxu0 0
        %5232 = vmatprep.subr.bf16.mxu0 0
        %5233 = vmatpush2.bf16.msra.mxu0 0
        %5234 = vmatprep.mubr.bf16.mxu0 0
        %5235 = vmatmul.mubr.bf16.gmra.mxu0 %v3705
        %v5236 = vpop.f32.mrf.mxu0
        %v5237 = vadd.f32 0.0, %v5236
        %v5238 = vpop.f32.mrf.mxu0
        %v5239 = vpop.f32.mrf.mxu0
        %v5240 = vadd.f32 0.0, %v5239
        %v5241 = vpop.f32.mrf.mxu0
        %5242 = vmatprep.mubr.bf16.mxu0 0
        %5243 = vmatmul.mubr.bf16.gmra.mxu0 %v3708
        %v5244 = vpop.f32.mrf.mxu0
        %v5245 = vadd.f32 0.0, %v5244
        %v5246 = vpop.f32.mrf.mxu0
        %v5247 = vpop.f32.mrf.mxu0
        %v5248 = vadd.f32 0.0, %v5247
        %v5249 = vpop.f32.mrf.mxu0
        %5250 = vmatprep.mubr.bf16.mxu0 0
        %5251 = vmatmul.mubr.bf16.gmra.mxu0 %v3711
        %v5252 = vpop.f32.mrf.mxu0
        %v5253 = vadd.f32 0.0, %v5252
        %v5254 = vpop.f32.mrf.mxu0
        %v5255 = vpop.f32.mrf.mxu0
        %v5256 = vadd.f32 0.0, %v5255
        %v5257 = vpop.f32.mrf.mxu0
        %5258 = vmatprep.mubr.bf16.mxu0 0
        %5259 = vmatmul.mubr.bf16.gmra.mxu0 %v5191
        %v5260 = vpop.f32.mrf.mxu0
        %v5261 = vadd.f32 0.0, %v5260
        %v5262 = vpop.f32.mrf.mxu0
        %v5263 = vpop.f32.mrf.mxu0
        %v5264 = vadd.f32 0.0, %v5263
        %v5265 = vpop.f32.mrf.mxu0
        %5266 = vmatprep.mubr.bf16.mxu0 0
        %5267 = vmatmul.mubr.bf16.gmra.mxu0 %v3717
        %v5268 = vpop.f32.mrf.mxu0
        %v5269 = vadd.f32 0.0, %v5268
        %v5270 = vpop.f32.mrf.mxu0
        %v5271 = vpop.f32.mrf.mxu0
        %v5272 = vadd.f32 0.0, %v5271
        %v5273 = vpop.f32.mrf.mxu0
        %5274 = vmatprep.mubr.bf16.mxu0 0
        %5275 = vmatmul.mubr.bf16.gmra.mxu0 %v3720
        %v5276 = vpop.f32.mrf.mxu0
        %v5277 = vadd.f32 0.0, %v5276
        %v5278 = vpop.f32.mrf.mxu0
        %v5279 = vpop.f32.mrf.mxu0
        %v5280 = vadd.f32 0.0, %v5279
        %v5281 = vpop.f32.mrf.mxu0
        %5282 = vmatprep.mubr.bf16.mxu0 0
        %5283 = vmatmul.mubr.bf16.gmra.mxu0 %v3723
        %v5284 = vpop.f32.mrf.mxu0
        %v5285 = vadd.f32 0.0, %v5284
        %v5286 = vpop.f32.mrf.mxu0
        %v5287 = vpop.f32.mrf.mxu0
        %v5288 = vadd.f32 0.0, %v5287
        %v5289 = vpop.f32.mrf.mxu0
        %5290 = vmatprep.mubr.bf16.mxu0 0
        %5291 = vmatmul.mubr.bf16.gmra.mxu0 %v5194
        %v5292 = vpop.f32.mrf.mxu0
        %v5293 = vadd.f32 0.0, %v5292
        %v5294 = vpop.f32.mrf.mxu0
        %v5295 = vpop.f32.mrf.mxu0
        %v5296 = vadd.f32 0.0, %v5295
        %v5297 = vpop.f32.mrf.mxu0
        %5298 = vmatprep.mubr.bf16.mxu0 0
        %5299 = vmatmul.mubr.bf16.gmra.mxu0 %v3729
        %v5300 = vpop.f32.mrf.mxu0
        %v5301 = vadd.f32 0.0, %v5300
        %v5302 = vpop.f32.mrf.mxu0
        %v5303 = vpop.f32.mrf.mxu0
        %v5304 = vadd.f32 0.0, %v5303
        %v5305 = vpop.f32.mrf.mxu0
        %5306 = vmatprep.mubr.bf16.mxu0 0
        %5307 = vmatmul.mubr.bf16.gmra.mxu0 %v3732
        %v5308 = vpop.f32.mrf.mxu0
        %v5309 = vadd.f32 0.0, %v5308
        %v5310 = vpop.f32.mrf.mxu0
        %v5311 = vpop.f32.mrf.mxu0
        %v5312 = vadd.f32 0.0, %v5311
        %v5313 = vpop.f32.mrf.mxu0
        %5314 = vmatprep.mubr.bf16.mxu0 0
        %5315 = vmatmul.mubr.bf16.gmra.mxu0 %v3735
        %v5316 = vpop.f32.mrf.mxu0
        %v5317 = vadd.f32 0.0, %v5316
        %v5318 = vpop.f32.mrf.mxu0
        %v5319 = vpop.f32.mrf.mxu0
        %v5320 = vadd.f32 0.0, %v5319
        %v5321 = vpop.f32.mrf.mxu0
        %5322 = vmatprep.mubr.bf16.mxu0 0
        %5323 = vmatmul.mubr.bf16.gmra.mxu0 %v5197
        %v5324 = vpop.f32.mrf.mxu0
        %v5325 = vadd.f32 0.0, %v5324
        %v5326 = vpop.f32.mrf.mxu0
        %v5327 = vpop.f32.mrf.mxu0
        %v5328 = vadd.f32 0.0, %v5327
        %v5329 = vpop.f32.mrf.mxu0
        %5330 = vmatprep.mubr.bf16.mxu0 0
        %5331 = vmatmul.mubr.bf16.gmra.mxu0 %v3741
        %v5332 = vpop.f32.mrf.mxu0
        %v5333 = vadd.f32 0.0, %v5332
        %v5334 = vpop.f32.mrf.mxu0
        %v5335 = vpop.f32.mrf.mxu0
        %v5336 = vadd.f32 0.0, %v5335
        %v5337 = vpop.f32.mrf.mxu0
        %5338 = vmatprep.mubr.bf16.mxu0 0
        %5339 = vmatmul.mubr.bf16.gmra.mxu0 %v3744
        %v5340 = vpop.f32.mrf.mxu0
        %v5341 = vadd.f32 0.0, %v5340
        %v5342 = vpop.f32.mrf.mxu0
        %v5343 = vpop.f32.mrf.mxu0
        %v5344 = vadd.f32 0.0, %v5343
        %v5345 = vpop.f32.mrf.mxu0
        %5346 = vmatprep.mubr.bf16.mxu0 0
        %5347 = vmatmul.mubr.bf16.gmra.mxu0 %v3747
        %v5348 = vpop.f32.mrf.mxu0
        %v5349 = vadd.f32 0.0, %v5348
        %v5350 = vpop.f32.mrf.mxu0
        %v5351 = vpop.f32.mrf.mxu0
        %v5352 = vadd.f32 0.0, %v5351
        %v5353 = vpop.f32.mrf.mxu0
        %5354 = vmatprep.mubr.bf16.mxu0 0
        %5355 = vmatmul.mubr.bf16.gmra.mxu0 %v5200
        %v5356 = vpop.f32.mrf.mxu0
        %v5357 = vadd.f32 0.0, %v5356
        %v5358 = vpop.f32.mrf.mxu0
        %v5359 = vpop.f32.mrf.mxu0
        %v5360 = vadd.f32 0.0, %v5359
        %v5361 = vpop.f32.mrf.mxu0
        %5362 = vdwg.mxu0
        %v5363 = vadd.f32 %v5138, %v5237
        %v5364 = vadd.f32 %v5139, %v5240
        %v5365 = vadd.f32 %v5140, %v5245
        %v5366 = vadd.f32 %v5141, %v5248
        %v5367 = vadd.f32 %v5142, %v5253
        %v5368 = vadd.f32 %v5143, %v5256
        %v5369 = vadd.f32 %v5144, %v5261
        %v5370 = vadd.f32 %v5145, %v5264
        %v5371 = vadd.f32 %v5146, %v5269
        %v5372 = vadd.f32 %v5147, %v5272
        %v5373 = vadd.f32 %v5148, %v5277
        %v5374 = vadd.f32 %v5149, %v5280
        %v5375 = vadd.f32 %v5150, %v5285
        %v5376 = vadd.f32 %v5151, %v5288
        %v5377 = vadd.f32 %v5152, %v5293
        %v5378 = vadd.f32 %v5153, %v5296
        %v5379 = vadd.f32 %v5154, %v5301
        %v5380 = vadd.f32 %v5155, %v5304
        %v5381 = vadd.f32 %v5156, %v5309
        %v5382 = vadd.f32 %v5157, %v5312
        %v5383 = vadd.f32 %v5158, %v5317
        %v5384 = vadd.f32 %v5159, %v5320
        %v5385 = vadd.f32 %v5160, %v5325
        %v5386 = vadd.f32 %v5161, %v5328
        %v5387 = vadd.f32 %v5162, %v5333
        %v5388 = vadd.f32 %v5163, %v5336
        %v5389 = vadd.f32 %v5164, %v5341
        %v5390 = vadd.f32 %v5165, %v5344
        %v5391 = vadd.f32 %v5166, %v5349
        %v5392 = vadd.f32 %v5167, %v5352
        %v5393 = vadd.f32 %v5168, %v5357
        %v5394 = vadd.f32 %v5169, %v5360
        %v5403 = vrot.slane %v3174, 1
        %v5404 = vrot.slane %v3175, 1
        %v5405 = vsel %vm324, %v5403, %v5404
        %v5406 = vrot.slane %v3194, 1
        %v5407 = vrot.slane %v3195, 1
        %v5408 = vsel %vm324, %v5406, %v5407
        %v5409 = vrot.slane %v3214, 1
        %v5410 = vrot.slane %v3215, 1
        %v5411 = vsel %vm324, %v5409, %v5410
        %v5412 = vrot.slane %v3234, 1
        %v5413 = vrot.slane %v3235, 1
        %v5414 = vsel %vm324, %v5412, %v5413
        %v5419 = vpack.c.bf16 %v5405, %v4594
        %v5420 = vpack.c.bf16 %v5408, %v4597
        %v5421 = vpack.c.bf16 %v5411, %v4600
        %v5422 = vpack.c.bf16 %v5414, %v4603
        %v5423 = vld [vmem:[%s2456] sm:$0xf]
        %v5424 = vld [vmem:[%s2456 + $0x4] sm:$0xf]
        %v5425 = vld [vmem:[%s2456 + $0x8] sm:$0xf]
        %v5426 = vld [vmem:[%s2456 + $0xc] sm:$0xf]
        %v5431 = vunpack.c.l.b16 %v5423
        %v5432 = vunpack.c.l.b16 %v5424
        %v5433 = vunpack.c.l.b16 %v5425
        %v5434 = vunpack.c.l.b16 %v5426
        %v5435 = vpack.c.b16 %v5432, %v5431
        %v5436 = vpack.c.b16 %v5434, %v5433
        %v5440 = vsel %vm530, %v5419, 0
        %v5443 = vsel %vm530, %v5420, 0
        %v5446 = vsel %vm530, %v5421, 0
        %v5449 = vsel %vm530, %v5422, 0
        %5451 = vmatprep.subr.bf16.mxu0 0
        %5452 = vmatpush1.bf16.msra.mxu0 0
        %5453 = vmatprep.subr.bf16.mxu0 0
        %5454 = vmatpush1.bf16.msra.mxu0 0
        %5455 = vmatprep.subr.bf16.mxu0 0
        %5456 = vmatpush1.bf16.msra.mxu0 0
        %5457 = vmatprep.subr.bf16.mxu0 0
        %5458 = vmatpush1.bf16.msra.mxu0 0
        %5459 = vmatprep.subr.bf16.mxu0 0
        %5460 = vmatpush1.bf16.msra.mxu0 0
        %5461 = vmatprep.subr.bf16.mxu0 0
        %5462 = vmatpush1.bf16.msra.mxu0 0
        %5463 = vmatprep.subr.bf16.mxu0 0
        %5464 = vmatpush1.bf16.msra.mxu0 %v5436
        %5465 = vmatprep.subr.bf16.mxu0 0
        %5466 = vmatpush1.bf16.msra.mxu0 %v5435
        %5467 = vmatprep.subr.bf16.mxu0 0
        %5468 = vmatpush2.bf16.msra.mxu0 0
        %5469 = vmatprep.subr.bf16.mxu0 0
        %5470 = vmatpush2.bf16.msra.mxu0 0
        %5471 = vmatprep.subr.bf16.mxu0 0
        %5472 = vmatpush2.bf16.msra.mxu0 0
        %5473 = vmatprep.subr.bf16.mxu0 0
        %5474 = vmatpush2.bf16.msra.mxu0 0
        %5475 = vmatprep.subr.bf16.mxu0 0
        %5476 = vmatpush2.bf16.msra.mxu0 0
        %5477 = vmatprep.subr.bf16.mxu0 0
        %5478 = vmatpush2.bf16.msra.mxu0 0
        %5479 = vmatprep.subr.bf16.mxu0 0
        %5480 = vmatpush2.bf16.msra.mxu0 0
        %5481 = vmatprep.subr.bf16.mxu0 0
        %5482 = vmatpush2.bf16.msra.mxu0 0
        %5483 = vmatprep.mubr.bf16.mxu0 0
        %5484 = vmatmul.mubr.bf16.gmra.mxu0 %v3484
        %v5485 = vpop.f32.mrf.mxu0
        %v5486 = vadd.f32 0.0, %v5485
        %v5487 = vpop.f32.mrf.mxu0
        %v5488 = vpop.f32.mrf.mxu0
        %v5489 = vadd.f32 0.0, %v5488
        %v5490 = vpop.f32.mrf.mxu0
        %5491 = vmatprep.mubr.bf16.mxu0 0
        %5492 = vmatmul.mubr.bf16.gmra.mxu0 %v3487
        %v5493 = vpop.f32.mrf.mxu0
        %v5494 = vadd.f32 0.0, %v5493
        %v5495 = vpop.f32.mrf.mxu0
        %v5496 = vpop.f32.mrf.mxu0
        %v5497 = vadd.f32 0.0, %v5496
        %v5498 = vpop.f32.mrf.mxu0
        %5499 = vmatprep.mubr.bf16.mxu0 0
        %5500 = vmatmul.mubr.bf16.gmra.mxu0 %v3490
        %v5501 = vpop.f32.mrf.mxu0
        %v5502 = vadd.f32 0.0, %v5501
        %v5503 = vpop.f32.mrf.mxu0
        %v5504 = vpop.f32.mrf.mxu0
        %v5505 = vadd.f32 0.0, %v5504
        %v5506 = vpop.f32.mrf.mxu0
        %5507 = vmatprep.mubr.bf16.mxu0 0
        %5508 = vmatmul.mubr.bf16.gmra.mxu0 %v5440
        %v5509 = vpop.f32.mrf.mxu0
        %v5510 = vadd.f32 0.0, %v5509
        %v5511 = vpop.f32.mrf.mxu0
        %v5512 = vpop.f32.mrf.mxu0
        %v5513 = vadd.f32 0.0, %v5512
        %v5514 = vpop.f32.mrf.mxu0
        %5515 = vmatprep.mubr.bf16.mxu0 0
        %5516 = vmatmul.mubr.bf16.gmra.mxu0 %v3496
        %v5517 = vpop.f32.mrf.mxu0
        %v5518 = vadd.f32 0.0, %v5517
        %v5519 = vpop.f32.mrf.mxu0
        %v5520 = vpop.f32.mrf.mxu0
        %v5521 = vadd.f32 0.0, %v5520
        %v5522 = vpop.f32.mrf.mxu0
        %5523 = vmatprep.mubr.bf16.mxu0 0
        %5524 = vmatmul.mubr.bf16.gmra.mxu0 %v3499
        %v5525 = vpop.f32.mrf.mxu0
        %v5526 = vadd.f32 0.0, %v5525
        %v5527 = vpop.f32.mrf.mxu0
        %v5528 = vpop.f32.mrf.mxu0
        %v5529 = vadd.f32 0.0, %v5528
        %v5530 = vpop.f32.mrf.mxu0
        %5531 = vmatprep.mubr.bf16.mxu0 0
        %5532 = vmatmul.mubr.bf16.gmra.mxu0 %v3502
        %v5533 = vpop.f32.mrf.mxu0
        %v5534 = vadd.f32 0.0, %v5533
        %v5535 = vpop.f32.mrf.mxu0
        %v5536 = vpop.f32.mrf.mxu0
        %v5537 = vadd.f32 0.0, %v5536
        %v5538 = vpop.f32.mrf.mxu0
        %5539 = vmatprep.mubr.bf16.mxu0 0
        %5540 = vmatmul.mubr.bf16.gmra.mxu0 %v5443
        %v5541 = vpop.f32.mrf.mxu0
        %v5542 = vadd.f32 0.0, %v5541
        %v5543 = vpop.f32.mrf.mxu0
        %v5544 = vpop.f32.mrf.mxu0
        %v5545 = vadd.f32 0.0, %v5544
        %v5546 = vpop.f32.mrf.mxu0
        %5547 = vmatprep.mubr.bf16.mxu0 0
        %5548 = vmatmul.mubr.bf16.gmra.mxu0 %v3508
        %v5549 = vpop.f32.mrf.mxu0
        %v5550 = vadd.f32 0.0, %v5549
        %v5551 = vpop.f32.mrf.mxu0
        %v5552 = vpop.f32.mrf.mxu0
        %v5553 = vadd.f32 0.0, %v5552
        %v5554 = vpop.f32.mrf.mxu0
        %5555 = vmatprep.mubr.bf16.mxu0 0
        %5556 = vmatmul.mubr.bf16.gmra.mxu0 %v3511
        %v5557 = vpop.f32.mrf.mxu0
        %v5558 = vadd.f32 0.0, %v5557
        %v5559 = vpop.f32.mrf.mxu0
        %v5560 = vpop.f32.mrf.mxu0
        %v5561 = vadd.f32 0.0, %v5560
        %v5562 = vpop.f32.mrf.mxu0
        %5563 = vmatprep.mubr.bf16.mxu0 0
        %5564 = vmatmul.mubr.bf16.gmra.mxu0 %v3514
        %v5565 = vpop.f32.mrf.mxu0
        %v5566 = vadd.f32 0.0, %v5565
        %v5567 = vpop.f32.mrf.mxu0
        %v5568 = vpop.f32.mrf.mxu0
        %v5569 = vadd.f32 0.0, %v5568
        %v5570 = vpop.f32.mrf.mxu0
        %5571 = vmatprep.mubr.bf16.mxu0 0
        %5572 = vmatmul.mubr.bf16.gmra.mxu0 %v5446
        %v5573 = vpop.f32.mrf.mxu0
        %v5574 = vadd.f32 0.0, %v5573
        %v5575 = vpop.f32.mrf.mxu0
        %v5576 = vpop.f32.mrf.mxu0
        %v5577 = vadd.f32 0.0, %v5576
        %v5578 = vpop.f32.mrf.mxu0
        %5579 = vmatprep.mubr.bf16.mxu0 0
        %5580 = vmatmul.mubr.bf16.gmra.mxu0 %v3520
        %v5581 = vpop.f32.mrf.mxu0
        %v5582 = vadd.f32 0.0, %v5581
        %v5583 = vpop.f32.mrf.mxu0
        %v5584 = vpop.f32.mrf.mxu0
        %v5585 = vadd.f32 0.0, %v5584
        %v5586 = vpop.f32.mrf.mxu0
        %5587 = vmatprep.mubr.bf16.mxu0 0
        %5588 = vmatmul.mubr.bf16.gmra.mxu0 %v3523
        %v5589 = vpop.f32.mrf.mxu0
        %v5590 = vadd.f32 0.0, %v5589
        %v5591 = vpop.f32.mrf.mxu0
        %v5592 = vpop.f32.mrf.mxu0
        %v5593 = vadd.f32 0.0, %v5592
        %v5594 = vpop.f32.mrf.mxu0
        %5595 = vmatprep.mubr.bf16.mxu0 0
        %5596 = vmatmul.mubr.bf16.gmra.mxu0 %v3526
        %v5597 = vpop.f32.mrf.mxu0
        %v5598 = vadd.f32 0.0, %v5597
        %v5599 = vpop.f32.mrf.mxu0
        %v5600 = vpop.f32.mrf.mxu0
        %v5601 = vadd.f32 0.0, %v5600
        %v5602 = vpop.f32.mrf.mxu0
        %5603 = vmatprep.mubr.bf16.mxu0 0
        %5604 = vmatmul.mubr.bf16.gmra.mxu0 %v5449
        %v5605 = vpop.f32.mrf.mxu0
        %v5606 = vadd.f32 0.0, %v5605
        %v5607 = vpop.f32.mrf.mxu0
        %v5608 = vpop.f32.mrf.mxu0
        %v5609 = vadd.f32 0.0, %v5608
        %v5610 = vpop.f32.mrf.mxu0
        %5611 = vdwg.mxu0
        %v5612 = vadd.f32 %v5363, %v5486
        %v5613 = vadd.f32 %v5364, %v5489
        %v5614 = vadd.f32 %v5365, %v5494
        %v5615 = vadd.f32 %v5366, %v5497
        %v5616 = vadd.f32 %v5367, %v5502
        %v5617 = vadd.f32 %v5368, %v5505
        %v5618 = vadd.f32 %v5369, %v5510
        %v5619 = vadd.f32 %v5370, %v5513
        %v5620 = vadd.f32 %v5371, %v5518
        %v5621 = vadd.f32 %v5372, %v5521
        %v5622 = vadd.f32 %v5373, %v5526
        %v5623 = vadd.f32 %v5374, %v5529
        %v5624 = vadd.f32 %v5375, %v5534
        %v5625 = vadd.f32 %v5376, %v5537
        %v5626 = vadd.f32 %v5377, %v5542
        %v5627 = vadd.f32 %v5378, %v5545
        %v5628 = vadd.f32 %v5379, %v5550
        %v5629 = vadd.f32 %v5380, %v5553
        %v5630 = vadd.f32 %v5381, %v5558
        %v5631 = vadd.f32 %v5382, %v5561
        %v5632 = vadd.f32 %v5383, %v5566
        %v5633 = vadd.f32 %v5384, %v5569
        %v5634 = vadd.f32 %v5385, %v5574
        %v5635 = vadd.f32 %v5386, %v5577
        %v5636 = vadd.f32 %v5387, %v5582
        %v5637 = vadd.f32 %v5388, %v5585
        %v5638 = vadd.f32 %v5389, %v5590
        %v5639 = vadd.f32 %v5390, %v5593
        %v5640 = vadd.f32 %v5391, %v5598
        %v5641 = vadd.f32 %v5392, %v5601
        %v5642 = vadd.f32 %v5393, %v5606
        %v5643 = vadd.f32 %v5394, %v5609
        %v5644 = vrot.slane %v3174, 2
        %v5645 = vrot.slane %v3175, 2
        %v5646 = vsel %vm961, %v5644, %v5645
        %v5647 = vrot.slane %v3194, 2
        %v5648 = vrot.slane %v3195, 2
        %v5649 = vsel %vm961, %v5647, %v5648
        %v5650 = vrot.slane %v3214, 2
        %v5651 = vrot.slane %v3215, 2
        %v5652 = vsel %vm961, %v5650, %v5651
        %v5653 = vrot.slane %v3234, 2
        %v5654 = vrot.slane %v3235, 2
        %v5655 = vsel %vm961, %v5653, %v5654
        %v5660 = vpack.c.bf16 %v5646, %v4883
        %v5661 = vpack.c.bf16 %v5649, %v4886
        %v5662 = vpack.c.bf16 %v5652, %v4889
        %v5663 = vpack.c.bf16 %v5655, %v4892
        %v5664 = vld [vmem:[%s2698] sm:$0xf]
        %v5665 = vld [vmem:[%s2698 + $0x4] sm:$0xf]
        %v5666 = vld [vmem:[%s2698 + $0x8] sm:$0xf]
        %v5667 = vld [vmem:[%s2698 + $0xc] sm:$0xf]
        %v5672 = vunpack.c.l.b16 %v5664
        %v5673 = vunpack.c.l.b16 %v5665
        %v5674 = vunpack.c.l.b16 %v5666
        %v5675 = vunpack.c.l.b16 %v5667
        %v5676 = vpack.c.b16 %v5673, %v5672
        %v5677 = vpack.c.b16 %v5675, %v5674
        %v5681 = vsel %vm530, %v5660, 0
        %v5684 = vsel %vm530, %v5661, 0
        %v5687 = vsel %vm530, %v5662, 0
        %v5690 = vsel %vm530, %v5663, 0
        %5692 = vmatprep.subr.bf16.mxu0 0
        %5693 = vmatpush1.bf16.msra.mxu0 0
        %5694 = vmatprep.subr.bf16.mxu0 0
        %5695 = vmatpush1.bf16.msra.mxu0 0
        %5696 = vmatprep.subr.bf16.mxu0 0
        %5697 = vmatpush1.bf16.msra.mxu0 0
        %5698 = vmatprep.subr.bf16.mxu0 0
        %5699 = vmatpush1.bf16.msra.mxu0 0
        %5700 = vmatprep.subr.bf16.mxu0 0
        %5701 = vmatpush1.bf16.msra.mxu0 0
        %5702 = vmatprep.subr.bf16.mxu0 0
        %5703 = vmatpush1.bf16.msra.mxu0 0
        %5704 = vmatprep.subr.bf16.mxu0 0
        %5705 = vmatpush1.bf16.msra.mxu0 %v5677
        %5706 = vmatprep.subr.bf16.mxu0 0
        %5707 = vmatpush1.bf16.msra.mxu0 %v5676
        %5708 = vmatprep.subr.bf16.mxu0 0
        %5709 = vmatpush2.bf16.msra.mxu0 0
        %5710 = vmatprep.subr.bf16.mxu0 0
        %5711 = vmatpush2.bf16.msra.mxu0 0
        %5712 = vmatprep.subr.bf16.mxu0 0
        %5713 = vmatpush2.bf16.msra.mxu0 0
        %5714 = vmatprep.subr.bf16.mxu0 0
        %5715 = vmatpush2.bf16.msra.mxu0 0
        %5716 = vmatprep.subr.bf16.mxu0 0
        %5717 = vmatpush2.bf16.msra.mxu0 0
        %5718 = vmatprep.subr.bf16.mxu0 0
        %5719 = vmatpush2.bf16.msra.mxu0 0
        %5720 = vmatprep.subr.bf16.mxu0 0
        %5721 = vmatpush2.bf16.msra.mxu0 0
        %5722 = vmatprep.subr.bf16.mxu0 0
        %5723 = vmatpush2.bf16.msra.mxu0 0
        %5724 = vmatprep.mubr.bf16.mxu0 0
        %5725 = vmatmul.mubr.bf16.gmra.mxu0 %v4074
        %v5726 = vpop.f32.mrf.mxu0
        %v5727 = vadd.f32 0.0, %v5726
        %v5728 = vpop.f32.mrf.mxu0
        %v5729 = vpop.f32.mrf.mxu0
        %v5730 = vadd.f32 0.0, %v5729
        %v5731 = vpop.f32.mrf.mxu0
        %5732 = vmatprep.mubr.bf16.mxu0 0
        %5733 = vmatmul.mubr.bf16.gmra.mxu0 %v4077
        %v5734 = vpop.f32.mrf.mxu0
        %v5735 = vadd.f32 0.0, %v5734
        %v5736 = vpop.f32.mrf.mxu0
        %v5737 = vpop.f32.mrf.mxu0
        %v5738 = vadd.f32 0.0, %v5737
        %v5739 = vpop.f32.mrf.mxu0
        %5740 = vmatprep.mubr.bf16.mxu0 0
        %5741 = vmatmul.mubr.bf16.gmra.mxu0 %v4080
        %v5742 = vpop.f32.mrf.mxu0
        %v5743 = vadd.f32 0.0, %v5742
        %v5744 = vpop.f32.mrf.mxu0
        %v5745 = vpop.f32.mrf.mxu0
        %v5746 = vadd.f32 0.0, %v5745
        %v5747 = vpop.f32.mrf.mxu0
        %5748 = vmatprep.mubr.bf16.mxu0 0
        %5749 = vmatmul.mubr.bf16.gmra.mxu0 %v5681
        %v5750 = vpop.f32.mrf.mxu0
        %v5751 = vadd.f32 0.0, %v5750
        %v5752 = vpop.f32.mrf.mxu0
        %v5753 = vpop.f32.mrf.mxu0
        %v5754 = vadd.f32 0.0, %v5753
        %v5755 = vpop.f32.mrf.mxu0
        %5756 = vmatprep.mubr.bf16.mxu0 0
        %5757 = vmatmul.mubr.bf16.gmra.mxu0 %v4086
        %v5758 = vpop.f32.mrf.mxu0
        %v5759 = vadd.f32 0.0, %v5758
        %v5760 = vpop.f32.mrf.mxu0
        %v5761 = vpop.f32.mrf.mxu0
        %v5762 = vadd.f32 0.0, %v5761
        %v5763 = vpop.f32.mrf.mxu0
        %5764 = vmatprep.mubr.bf16.mxu0 0
        %5765 = vmatmul.mubr.bf16.gmra.mxu0 %v4089
        %v5766 = vpop.f32.mrf.mxu0
        %v5767 = vadd.f32 0.0, %v5766
        %v5768 = vpop.f32.mrf.mxu0
        %v5769 = vpop.f32.mrf.mxu0
        %v5770 = vadd.f32 0.0, %v5769
        %v5771 = vpop.f32.mrf.mxu0
        %5772 = vmatprep.mubr.bf16.mxu0 0
        %5773 = vmatmul.mubr.bf16.gmra.mxu0 %v4092
        %v5774 = vpop.f32.mrf.mxu0
        %v5775 = vadd.f32 0.0, %v5774
        %v5776 = vpop.f32.mrf.mxu0
        %v5777 = vpop.f32.mrf.mxu0
        %v5778 = vadd.f32 0.0, %v5777
        %v5779 = vpop.f32.mrf.mxu0
        %5780 = vmatprep.mubr.bf16.mxu0 0
        %5781 = vmatmul.mubr.bf16.gmra.mxu0 %v5684
        %v5782 = vpop.f32.mrf.mxu0
        %v5783 = vadd.f32 0.0, %v5782
        %v5784 = vpop.f32.mrf.mxu0
        %v5785 = vpop.f32.mrf.mxu0
        %v5786 = vadd.f32 0.0, %v5785
        %v5787 = vpop.f32.mrf.mxu0
        %5788 = vmatprep.mubr.bf16.mxu0 0
        %5789 = vmatmul.mubr.bf16.gmra.mxu0 %v4098
        %v5790 = vpop.f32.mrf.mxu0
        %v5791 = vadd.f32 0.0, %v5790
        %v5792 = vpop.f32.mrf.mxu0
        %v5793 = vpop.f32.mrf.mxu0
        %v5794 = vadd.f32 0.0, %v5793
        %v5795 = vpop.f32.mrf.mxu0
        %5796 = vmatprep.mubr.bf16.mxu0 0
        %5797 = vmatmul.mubr.bf16.gmra.mxu0 %v4101
        %v5798 = vpop.f32.mrf.mxu0
        %v5799 = vadd.f32 0.0, %v5798
        %v5800 = vpop.f32.mrf.mxu0
        %v5801 = vpop.f32.mrf.mxu0
        %v5802 = vadd.f32 0.0, %v5801
        %v5803 = vpop.f32.mrf.mxu0
        %5804 = vmatprep.mubr.bf16.mxu0 0
        %5805 = vmatmul.mubr.bf16.gmra.mxu0 %v4104
        %v5806 = vpop.f32.mrf.mxu0
        %v5807 = vadd.f32 0.0, %v5806
        %v5808 = vpop.f32.mrf.mxu0
        %v5809 = vpop.f32.mrf.mxu0
        %v5810 = vadd.f32 0.0, %v5809
        %v5811 = vpop.f32.mrf.mxu0
        %5812 = vmatprep.mubr.bf16.mxu0 0
        %5813 = vmatmul.mubr.bf16.gmra.mxu0 %v5687
        %v5814 = vpop.f32.mrf.mxu0
        %v5815 = vadd.f32 0.0, %v5814
        %v5816 = vpop.f32.mrf.mxu0
        %v5817 = vpop.f32.mrf.mxu0
        %v5818 = vadd.f32 0.0, %v5817
        %v5819 = vpop.f32.mrf.mxu0
        %5820 = vmatprep.mubr.bf16.mxu0 0
        %5821 = vmatmul.mubr.bf16.gmra.mxu0 %v4110
        %v5822 = vpop.f32.mrf.mxu0
        %v5823 = vadd.f32 0.0, %v5822
        %v5824 = vpop.f32.mrf.mxu0
        %v5825 = vpop.f32.mrf.mxu0
        %v5826 = vadd.f32 0.0, %v5825
        %v5827 = vpop.f32.mrf.mxu0
        %5828 = vmatprep.mubr.bf16.mxu0 0
        %5829 = vmatmul.mubr.bf16.gmra.mxu0 %v4113
        %v5830 = vpop.f32.mrf.mxu0
        %v5831 = vadd.f32 0.0, %v5830
        %v5832 = vpop.f32.mrf.mxu0
        %v5833 = vpop.f32.mrf.mxu0
        %v5834 = vadd.f32 0.0, %v5833
        %v5835 = vpop.f32.mrf.mxu0
        %5836 = vmatprep.mubr.bf16.mxu0 0
        %5837 = vmatmul.mubr.bf16.gmra.mxu0 %v4116
        %v5838 = vpop.f32.mrf.mxu0
        %v5839 = vadd.f32 0.0, %v5838
        %v5840 = vpop.f32.mrf.mxu0
        %v5841 = vpop.f32.mrf.mxu0
        %v5842 = vadd.f32 0.0, %v5841
        %v5843 = vpop.f32.mrf.mxu0
        %5844 = vmatprep.mubr.bf16.mxu0 0
        %5845 = vmatmul.mubr.bf16.gmra.mxu0 %v5690
        %v5846 = vpop.f32.mrf.mxu0
        %v5847 = vadd.f32 0.0, %v5846
        %v5848 = vpop.f32.mrf.mxu0
        %v5849 = vpop.f32.mrf.mxu0
        %v5850 = vadd.f32 0.0, %v5849
        %v5851 = vpop.f32.mrf.mxu0
        %5852 = vdwg.mxu0
        %v5853 = vadd.f32 %v5612, %v5727
        %v5854 = vadd.f32 %v5613, %v5730
        %v5855 = vadd.f32 %v5614, %v5735
        %v5856 = vadd.f32 %v5615, %v5738
        %v5857 = vadd.f32 %v5616, %v5743
        %v5858 = vadd.f32 %v5617, %v5746
        %v5859 = vadd.f32 %v5618, %v5751
        %v5860 = vadd.f32 %v5619, %v5754
        %v5861 = vadd.f32 %v5620, %v5759
        %v5862 = vadd.f32 %v5621, %v5762
        %v5863 = vadd.f32 %v5622, %v5767
        %v5864 = vadd.f32 %v5623, %v5770
        %v5865 = vadd.f32 %v5624, %v5775
        %v5866 = vadd.f32 %v5625, %v5778
        %v5867 = vadd.f32 %v5626, %v5783
        %v5868 = vadd.f32 %v5627, %v5786
        %v5869 = vadd.f32 %v5628, %v5791
        %v5870 = vadd.f32 %v5629, %v5794
        %v5871 = vadd.f32 %v5630, %v5799
        %v5872 = vadd.f32 %v5631, %v5802
        %v5873 = vadd.f32 %v5632, %v5807
        %v5874 = vadd.f32 %v5633, %v5810
        %v5875 = vadd.f32 %v5634, %v5815
        %v5876 = vadd.f32 %v5635, %v5818
        %v5877 = vadd.f32 %v5636, %v5823
        %v5878 = vadd.f32 %v5637, %v5826
        %v5879 = vadd.f32 %v5638, %v5831
        %v5880 = vadd.f32 %v5639, %v5834
        %v5881 = vadd.f32 %v5640, %v5839
        %v5882 = vadd.f32 %v5641, %v5842
        %v5883 = vadd.f32 %v5642, %v5847
        %v5884 = vadd.f32 %v5643, %v5850
        %v5885 = vlaneseq
        %v5886 = vshrl.u32 %v5885, 7
        %v5887 = vsub.s32 0, %v5886
        %v5888 = vrot.slane %v178, %v5887
        %v5889 = vmul.f32 %v5853, %v5888
        %v5890 = vmul.f32 %v5854, %v5888
        %v5891 = vmul.f32 %v5855, %v5888
        %v5892 = vmul.f32 %v5856, %v5888
        %v5893 = vmul.f32 %v5857, %v5888
        %v5894 = vmul.f32 %v5858, %v5888
        %v5895 = vmul.f32 %v5859, %v5888
        %v5896 = vmul.f32 %v5860, %v5888
        %v5897 = vmul.f32 %v5861, %v5888
        %v5898 = vmul.f32 %v5862, %v5888
        %v5899 = vmul.f32 %v5863, %v5888
        %v5900 = vmul.f32 %v5864, %v5888
        %v5901 = vmul.f32 %v5865, %v5888
        %v5902 = vmul.f32 %v5866, %v5888
        %v5903 = vmul.f32 %v5867, %v5888
        %v5904 = vmul.f32 %v5868, %v5888
        %v5905 = vmul.f32 %v5869, %v5888
        %v5906 = vmul.f32 %v5870, %v5888
        %v5907 = vmul.f32 %v5871, %v5888
        %v5908 = vmul.f32 %v5872, %v5888
        %v5909 = vmul.f32 %v5873, %v5888
        %v5910 = vmul.f32 %v5874, %v5888
        %v5911 = vmul.f32 %v5875, %v5888
        %v5912 = vmul.f32 %v5876, %v5888
        %v5913 = vmul.f32 %v5877, %v5888
        %v5914 = vmul.f32 %v5878, %v5888
        %v5915 = vmul.f32 %v5879, %v5888
        %v5916 = vmul.f32 %v5880, %v5888
        %v5917 = vmul.f32 %v5881, %v5888
        %v5918 = vmul.f32 %v5882, %v5888
        %v5919 = vmul.f32 %v5883, %v5888
        %v5920 = vmul.f32 %v5884, %v5888
        %v5921 = vlaneseq
        %v5922 = vshrl.u32 %v5921, 7
        %v5923 = vsub.s32 0, %v5922
        %v5924 = vrot.slane %v179, %v5923
        %v5925 = vadd.f32 %v5889, %v5924
        %v5926 = vadd.f32 %v5890, %v5924
        %v5927 = vadd.f32 %v5891, %v5924
        %v5928 = vadd.f32 %v5892, %v5924
        %v5929 = vadd.f32 %v5893, %v5924
        %v5930 = vadd.f32 %v5894, %v5924
        %v5931 = vadd.f32 %v5895, %v5924
        %v5932 = vadd.f32 %v5896, %v5924
        %v5933 = vadd.f32 %v5897, %v5924
        %v5934 = vadd.f32 %v5898, %v5924
        %v5935 = vadd.f32 %v5899, %v5924
        %v5936 = vadd.f32 %v5900, %v5924
        %v5937 = vadd.f32 %v5901, %v5924
        %v5938 = vadd.f32 %v5902, %v5924
        %v5939 = vadd.f32 %v5903, %v5924
        %v5940 = vadd.f32 %v5904, %v5924
        %v5941 = vadd.f32 %v5905, %v5924
        %v5942 = vadd.f32 %v5906, %v5924
        %v5943 = vadd.f32 %v5907, %v5924
        %v5944 = vadd.f32 %v5908, %v5924
        %v5945 = vadd.f32 %v5909, %v5924
        %v5946 = vadd.f32 %v5910, %v5924
        %v5947 = vadd.f32 %v5911, %v5924
        %v5948 = vadd.f32 %v5912, %v5924
        %v5949 = vadd.f32 %v5913, %v5924
        %v5950 = vadd.f32 %v5914, %v5924
        %v5951 = vadd.f32 %v5915, %v5924
        %v5952 = vadd.f32 %v5916, %v5924
        %v5953 = vadd.f32 %v5917, %v5924
        %v5954 = vadd.f32 %v5918, %v5924
        %v5955 = vadd.f32 %v5919, %v5924
        %v5956 = vadd.f32 %v5920, %v5924
        %v5957 = vadd.f32 %v5925, %v327
        %v5958 = vadd.f32 %v5926, %v330
        %v5959 = vadd.f32 %v5927, %v333
        %v5960 = vadd.f32 %v5928, %v336
        %v5961 = vadd.f32 %v5929, %v339
        %v5962 = vadd.f32 %v5930, %v342
        %v5963 = vadd.f32 %v5931, %v345
        %v5964 = vadd.f32 %v5932, %v348
        %v5965 = vadd.f32 %v5933, %v351
        %v5966 = vadd.f32 %v5934, %v354
        %v5967 = vadd.f32 %v5935, %v357
        %v5968 = vadd.f32 %v5936, %v360
        %v5969 = vadd.f32 %v5937, %v363
        %v5970 = vadd.f32 %v5938, %v366
        %v5971 = vadd.f32 %v5939, %v369
        %v5972 = vadd.f32 %v5940, %v372
        %v5973 = vadd.f32 %v5941, %v375
        %v5974 = vadd.f32 %v5942, %v378
        %v5975 = vadd.f32 %v5943, %v381
        %v5976 = vadd.f32 %v5944, %v384
        %v5977 = vadd.f32 %v5945, %v387
        %v5978 = vadd.f32 %v5946, %v390
        %v5979 = vadd.f32 %v5947, %v393
        %v5980 = vadd.f32 %v5948, %v396
        %v5981 = vadd.f32 %v5949, %v399
        %v5982 = vadd.f32 %v5950, %v402
        %v5983 = vadd.f32 %v5951, %v405
        %v5984 = vadd.f32 %v5952, %v408
        %v5985 = vadd.f32 %v5953, %v411
        %v5986 = vadd.f32 %v5954, %v414
        %v5987 = vadd.f32 %v5955, %v417
        %v5988 = vadd.f32 %v5956, %v420
        %v5989 = vmax.f32 %v5957, 0.0
        %v5990 = vmax.f32 %v5958, 0.0
        %v5991 = vmax.f32 %v5959, 0.0
        %v5992 = vmax.f32 %v5960, 0.0
        %v5993 = vmax.f32 %v5961, 0.0
        %v5994 = vmax.f32 %v5962, 0.0
        %v5995 = vmax.f32 %v5963, 0.0
        %v5996 = vmax.f32 %v5964, 0.0
        %v5997 = vmax.f32 %v5965, 0.0
        %v5998 = vmax.f32 %v5966, 0.0
        %v5999 = vmax.f32 %v5967, 0.0
        %v6000 = vmax.f32 %v5968, 0.0
        %v6001 = vmax.f32 %v5969, 0.0
        %v6002 = vmax.f32 %v5970, 0.0
        %v6003 = vmax.f32 %v5971, 0.0
        %v6004 = vmax.f32 %v5972, 0.0
        %v6005 = vmax.f32 %v5973, 0.0
        %v6006 = vmax.f32 %v5974, 0.0
        %v6007 = vmax.f32 %v5975, 0.0
        %v6008 = vmax.f32 %v5976, 0.0
        %v6009 = vmax.f32 %v5977, 0.0
        %v6010 = vmax.f32 %v5978, 0.0
        %v6011 = vmax.f32 %v5979, 0.0
        %v6012 = vmax.f32 %v5980, 0.0
        %v6013 = vmax.f32 %v5981, 0.0
        %v6014 = vmax.f32 %v5982, 0.0
        %v6015 = vmax.f32 %v5983, 0.0
        %v6016 = vmax.f32 %v5984, 0.0
        %v6017 = vmax.f32 %v5985, 0.0
        %v6018 = vmax.f32 %v5986, 0.0
        %v6019 = vmax.f32 %v5987, 0.0
        %v6020 = vmax.f32 %v5988, 0.0
        %6021 = vst.msk [vmem:[%s166] sm:$0xff] %vm530, %v5989
        %6022 = vst.msk [vmem:[%s166 + $0x8] sm:$0xff] %vm530, %v5990
        %6023 = vst.msk [vmem:[%s166 + $0x10] sm:$0xff] %vm530, %v5991
        %6024 = vst.msk [vmem:[%s166 + $0x18] sm:$0xff] %vm530, %v5992
        %6025 = vst.msk [vmem:[%s166 + $0x20] sm:$0xff] %vm530, %v5993
        %6026 = vst.msk [vmem:[%s166 + $0x28] sm:$0xff] %vm530, %v5994
        %6027 = vst.msk [vmem:[%s166 + $0x30] sm:$0xff] %vm530, %v5995
        %6028 = vst.msk [vmem:[%s166 + $0x38] sm:$0xff] %vm530, %v5996
        %6029 = vst.msk [vmem:[%s166 + $0x40] sm:$0xff] %vm530, %v5997
        %6030 = vst.msk [vmem:[%s166 + $0x48] sm:$0xff] %vm530, %v5998
        %6031 = vst.msk [vmem:[%s166 + $0x50] sm:$0xff] %vm530, %v5999
        %6032 = vst.msk [vmem:[%s166 + $0x58] sm:$0xff] %vm530, %v6000
        %6033 = vst.msk [vmem:[%s166 + $0x60] sm:$0xff] %vm530, %v6001
        %6034 = vst.msk [vmem:[%s166 + $0x68] sm:$0xff] %vm530, %v6002
        %6035 = vst.msk [vmem:[%s166 + $0x70] sm:$0xff] %vm530, %v6003
        %6036 = vst.msk [vmem:[%s166 + $0x78] sm:$0xff] %vm530, %v6004
        %6037 = vst.msk [vmem:[%s166 + $0x80] sm:$0xff] %vm530, %v6005
        %6038 = vst.msk [vmem:[%s166 + $0x88] sm:$0xff] %vm530, %v6006
        %6039 = vst.msk [vmem:[%s166 + $0x90] sm:$0xff] %vm530, %v6007
        %6040 = vst.msk [vmem:[%s166 + $0x98] sm:$0xff] %vm530, %v6008
        %6041 = vst.msk [vmem:[%s166 + $0xa0] sm:$0xff] %vm530, %v6009
        %6042 = vst.msk [vmem:[%s166 + $0xa8] sm:$0xff] %vm530, %v6010
        %6043 = vst.msk [vmem:[%s166 + $0xb0] sm:$0xff] %vm530, %v6011
        %6044 = vst.msk [vmem:[%s166 + $0xb8] sm:$0xff] %vm530, %v6012
        %6045 = vst.msk [vmem:[%s166 + $0xc0] sm:$0xff] %vm530, %v6013
        %6046 = vst.msk [vmem:[%s166 + $0xc8] sm:$0xff] %vm530, %v6014
        %6047 = vst.msk [vmem:[%s166 + $0xd0] sm:$0xff] %vm530, %v6015
        %6048 = vst.msk [vmem:[%s166 + $0xd8] sm:$0xff] %vm530, %v6016
        %6049 = vst.msk [vmem:[%s166 + $0xe0] sm:$0xff] %vm530, %v6017
        %6050 = vst.msk [vmem:[%s166 + $0xe8] sm:$0xff] %vm530, %v6018
        %6051 = vst.msk [vmem:[%s166 + $0xf0] sm:$0xff] %vm530, %v6019
        %6052 = vst.msk [vmem:[%s166 + $0xf8] sm:$0xff] %vm530, %v6020
        %s6053 = sand.u32 %s93, 1
        %s6054 = scalar_lea.sflag [#allocation4], %s6053
        %s6055 = sand.u32 %s93, 1
        %s6056 = smul.addr %s6055, 256
        %s6057 = scalar_lea.vmem [#allocation3], %s6056
        // Predicated region
        $region33: #{tpu_custom_call.1} parent=31 // pred_check
          %p6058 = pneg %p103
        $region34: #{tpu_custom_call.1} parent=31 // pred_check_branch
          %6060 = sbr.rel (%p6058) target = $region36
        $region35: #{tpu_custom_call.1} parent=31 // pred_region
          %s6061 = smul.u32 4, %s17
          %s6063 = ssub.s32 4096, 4096
          %6064 = vsyncadd %s6054, %s6063
          %s6065 = smul.addr %s6061, 8
          %s6066 = smul.addr %s6065, 128
          %s6067 = scalar_lea.hbm %s3, %s6066
          %s6068 = sshll.u32 %s6057, 4
          %s6069 = int_to_ptr.vmem [resolvable:$true] %s6068
          %6074 = dma.vmem_to_hbm [thread:$0]  %s6069, 4096, %s6067, %s6054, 128, 128, 8
        $region36: #{tpu_custom_call.1} parent=31 // pred_fallthru
          _
      $region32: #{tpu_custom_call.1} parent=5 // pred_fallthru
        _
      %p6075 = scmp.le.s32.totalorder 2, %s12
      // Predicated region
      $region37: #{tpu_custom_call.1} parent=5 // pred_check
        %p6076 = pneg %p6075
      $region38: #{tpu_custom_call.1} parent=5 // pred_check_branch
        %6078 = sbr.rel (%p6076) target = $region40
      $region39: #{tpu_custom_call.1} parent=5 // pred_region
        %s6079 = ssub.s32 %s12, 2
        // Predicated region
        $region41: #{tpu_custom_call.1} parent=39 // pred_check
          %p6080 = pneg %p109
        $region42: #{tpu_custom_call.1} parent=39 // pred_check_branch
          %6082 = sbr.rel (%p6080) target = $region44
        $region43: #{tpu_custom_call.1} parent=39 // pred_region
          %s6083 = sand.u32 %s94, 1
          %s6084 = scalar_lea.sflag [#allocation4], %s6083
          %s6085 = sand.u32 %s94, 1
          %s6086 = smul.addr %s6085, 256
          %s6087 = scalar_lea.vmem [#allocation3], %s6086
          %6088 = dma.done %s6084, 4096
        $region44: #{tpu_custom_call.1} parent=39 // pred_fallthru
          _
      $region40: #{tpu_custom_call.1} parent=5 // pred_fallthru
        _
    $region6: #{tpu_custom_call.1} parent=1 // loop_footer
      %s16 = sadd.s32 1, %s12
    $region7: #{tpu_custom_call.1} parent=1 // loop_footer_branch
      %11 = sbr.rel target = $region3
    $region8: #{tpu_custom_call.1} parent=1 // loop_exit
      _
    %6089 = vsyncpa [#allocation4], 1
    %s6090 = scalar_lea.sflag [#allocation4], 1
    %6091 = vsyncpa %s6090, 1

</llo_original>
